<compile_context>
chip_gen: v7x
topology: tpu7x:2x2x1
jax: 0.10.0
libtpu: 0.0.40
codegen_flags: <defaults>
</compile_context>

<pallas_src>
import functools

import jax
import jax.numpy as jnp
from jax.experimental import pallas as pl
from jax.experimental.pallas import tpu as pltpu


# ----------------------------- Fused Pallas kernel -----------------------------

def _fused_forward_kernel(x0_ref, ln1g_ref, ln1b_ref, qkvw_ref, qkvb_ref,
                          ow_ref, ob_ref, ln2g_ref, ln2b_ref,
                          fc1w_ref, fc1b_ref, fc2w_ref, fc2b_ref,
                          lnfg_ref, lnfb_ref, tproj_ref, eos_sel_ref,
                          patches_ref, patchw_ref, poolmat_ref, visproj_ref,
                          ls_ref, out_ref, h_ref,
                          *, n_cls, seq_len, d_model, n_heads):
    layer = pl.program_id(0)
    D = d_model
    L = seq_len
    H = n_heads
    Dh = D // H
    scale = float(Dh) ** -0.5

    def layer_norm(x, g, b):
        mu = jnp.mean(x, axis=-1, keepdims=True)
        xc = x - mu
        var = jnp.mean(xc * xc, axis=-1, keepdims=True)
        return xc * jax.lax.rsqrt(var + 1e-5) * g + b

    # ---- init: hidden state = prompts + positional embedding (only on first grid step) ----
    @pl.when(layer == 0)
    def _():
        h_ref[...] = x0_ref[...].astype(jnp.float32)

    h = h_ref[...]                                                # (n_cls*L, D)

    # ---- attention block (LN1 -> fused QKV -> causal MHA over all classes/heads -> O-proj) ----
    x = layer_norm(h, ln1g_ref[0], ln1b_ref[0])
    qkv = jnp.dot(x, qkvw_ref[0], preferred_element_type=jnp.float32) + qkvb_ref[0]
    qkv3 = qkv.reshape(n_cls, L, 3 * D)

    row = jax.lax.broadcasted_iota(jnp.int32, (n_cls, L, L), 1)
    col = jax.lax.broadcasted_iota(jnp.int32, (n_cls, L, L), 2)
    causal = col <= row

    head_outs = []
    for hh in range(H):                                           # static unroll over heads
        qh = qkv3[:, :, hh * Dh:(hh + 1) * Dh] * scale            # (n_cls, L, Dh)
        kh = qkv3[:, :, D + hh * Dh:D + (hh + 1) * Dh]
        vh = qkv3[:, :, 2 * D + hh * Dh:2 * D + (hh + 1) * Dh]
        s = jnp.einsum('cld,cmd->clm', qh, kh,
                       preferred_element_type=jnp.float32)        # (n_cls, L, L)
        s = jnp.where(causal, s, -1e30)                           # causal mask
        m = jnp.max(s, axis=-1, keepdims=True)
        p = jnp.exp(s - m)
        p = p * pl.reciprocal(jnp.sum(p, axis=-1, keepdims=True), approx=True)
        head_outs.append(jnp.einsum('clm,cmd->cld', p, vh,
                                    preferred_element_type=jnp.float32))
    attn = jnp.concatenate(head_outs, axis=-1).reshape(n_cls * L, D)
    attn = jnp.dot(attn, ow_ref[0], preferred_element_type=jnp.float32) + ob_ref[0]
    h = h + attn

    # ---- MLP block (LN2 -> fc1 -> QuickGELU -> fc2 -> residual) ----
    x = layer_norm(h, ln2g_ref[0], ln2b_ref[0])
    x = jnp.dot(x, fc1w_ref[0], preferred_element_type=jnp.float32) + fc1b_ref[0]
    x = x * jax.nn.sigmoid(1.702 * x)                             # CLIP QuickGELU
    x = jnp.dot(x, fc2w_ref[0], preferred_element_type=jnp.float32) + fc2b_ref[0]
    h = h + x
    h_ref[...] = h                                                # carry to next layer

    # ---- epilogue (last layer): final LN, EOS pool, projections, CLIP similarity head ----
    @pl.when(layer == pl.num_programs(0) - 1)
    def _():
        last = layer_norm(h, lnfg_ref[...], lnfb_ref[...])        # (n_cls*L, D)
        pooled = jnp.dot(eos_sel_ref[...], last,
                         preferred_element_type=jnp.float32)      # (n_cls, D)  EOS gather
        txt = jnp.dot(pooled, tproj_ref[...],
                      preferred_element_type=jnp.float32)         # (n_cls, proj)

        pe = jnp.dot(patches_ref[...], patchw_ref[...],
                     preferred_element_type=jnp.float32)          # (B*P, vis)
        pooled_img = jnp.dot(poolmat_ref[...], pe,
                             preferred_element_type=jnp.float32)  # (B, vis)  mean pool
        img = jnp.dot(pooled_img, visproj_ref[...],
                      preferred_element_type=jnp.float32)         # (B, proj)

        img_n = img * jax.lax.rsqrt(jnp.sum(img * img, axis=-1, keepdims=True))
        txt_n = txt * jax.lax.rsqrt(jnp.sum(txt * txt, axis=-1, keepdims=True))
        lscale = jnp.exp(ls_ref[0, 0])                            # logit_scale.exp()
        out_ref[...] = (lscale * jnp.dot(img_n, txt_n.T,
                                         preferred_element_type=jnp.float32)
                        ).astype(out_ref.dtype)


# ----------------------------- Parameters -----------------------------

def init_params(key, *, n_cls, n_ctx, ctx_dim, context_length, n_heads, mlp_dim,
                n_layers, proj_dim, patch_size, img_channels, vis_dim):
    del n_heads
    keys = iter(jax.random.split(key, 32))
    nrm = lambda shape, std=0.02: (std * jax.random.normal(next(keys), shape)).astype(jnp.float32)
    D, M = ctx_dim, mlp_dim
    return {
        # PromptLearner (random init path, class_token_position='end', learned_cls=False)
        "ctx": nrm((n_ctx, D)),
        "token_prefix": nrm((n_cls, 1, D)),                                   # SOS embedding
        "token_suffix": nrm((n_cls, context_length - 1 - n_ctx, D)),          # class + EOS + pad
        # text model
        "pos_emb": nrm((context_length, D)),
        "ln1_g": jnp.ones((n_layers, 1, D), jnp.float32),
        "ln1_b": jnp.zeros((n_layers, 1, D), jnp.float32),
        "qkv_w": nrm((n_layers, D, 3 * D)),                                   # fused [q|k|v]
        "qkv_b": jnp.zeros((n_layers, 1, 3 * D), jnp.float32),
        "o_w": nrm((n_layers, D, D)),
        "o_b": jnp.zeros((n_layers, 1, D), jnp.float32),
        "ln2_g": jnp.ones((n_layers, 1, D), jnp.float32),
        "ln2_b": jnp.zeros((n_layers, 1, D), jnp.float32),
        "fc1_w": nrm((n_layers, D, M)),
        "fc1_b": jnp.zeros((n_layers, 1, M), jnp.float32),
        "fc2_w": nrm((n_layers, M, D)),
        "fc2_b": jnp.zeros((n_layers, 1, D), jnp.float32),
        "ln_f_g": jnp.ones((1, D), jnp.float32),
        "ln_f_b": jnp.zeros((1, D), jnp.float32),
        "text_proj": nrm((D, proj_dim)),
        # image model (synthetic stand-in)
        "patch_w": nrm((img_channels * patch_size * patch_size, vis_dim)),
        "visual_proj": nrm((vis_dim, proj_dim)),
        # CLIP logit scale (ln(1/0.07); exponentiated inside the kernel)
        "logit_scale": jnp.full((1, 1), jnp.log(1.0 / 0.07), jnp.float32),
    }


# ----------------------------- Forward (single pallas_call) -----------------------------

def build_forward(cfg):
    n_cls = cfg["n_cls"]
    L = cfg["context_length"]
    D = cfg["ctx_dim"]
    H = cfg["n_heads"]
    n_layers = cfg["n_layers"]
    ps = cfg["patch_size"]
    Mh = cfg["mlp_dim"]
    Pd = cfg["proj_dim"]
    Vd = cfg["vis_dim"]
    N = n_cls * L

    kernel = functools.partial(_fused_forward_kernel,
                               n_cls=n_cls, seq_len=L, d_model=D, n_heads=H)

    def forward(params, pixel_values, tokenized_prompts):
        B, C, Hi, Wi = pixel_values.shape
        nh, nw = Hi // ps, Wi // ps
        P = nh * nw
        Kp = C * ps * ps

        # PromptLearner.forward ('end' position) + positional embedding  (tiny XLA glue)
        ctx = jnp.broadcast_to(params["ctx"][None], (n_cls, cfg["n_ctx"], D))
        prompts = jnp.concatenate([params["token_prefix"], ctx, params["token_suffix"]], axis=1)
        x0 = (prompts + params["pos_emb"][None]).reshape(N, D)

        # EOS pooling selector (eos_token_id == 2 path: argmax over token ids)
        eos_idx = jnp.argmax(tokenized_prompts.astype(jnp.int32), axis=-1)
        eos_sel = jax.nn.one_hot(jnp.arange(n_cls) * L + eos_idx, N, dtype=jnp.float32)

        # Image patch extraction (NCHW, non-overlapping ps x ps patches, row-major)
        patches = (pixel_values.reshape(B, C, nh, ps, nw, ps)
                   .transpose(0, 2, 4, 1, 3, 5)
                   .reshape(B * P, Kp))
        pool_mat = jnp.repeat(jnp.eye(B, dtype=jnp.float32), P, axis=1) / float(P)

        def full(shp):
            return pl.BlockSpec(shp, lambda l, _n=len(shp): (0,) * _n)

        def per_layer(shp):
            return pl.BlockSpec((1,) + shp, lambda l, _n=len(shp): (l,) + (0,) * _n)

        return pl.pallas_call(
            kernel,
            out_shape=jax.ShapeDtypeStruct((B, n_cls), jnp.float32),
            grid=(n_layers,),
            in_specs=[
                full((N, D)),                                   # x0 (prompts + pos emb)
                per_layer((1, D)), per_layer((1, D)),           # ln1 gamma / beta
                per_layer((D, 3 * D)), per_layer((1, 3 * D)),   # fused qkv weight / bias
                per_layer((D, D)), per_layer((1, D)),           # o_proj weight / bias
                per_layer((1, D)), per_layer((1, D)),           # ln2 gamma / beta
                per_layer((D, Mh)), per_layer((1, Mh)),         # fc1 weight / bias
                per_layer((Mh, D)), per_layer((1, D)),          # fc2 weight / bias
                full((1, D)), full((1, D)),                     # final LN gamma / beta
                full((D, Pd)),                                  # text projection
                full((n_cls, N)),                               # EOS one-hot selector
                full((B * P, Kp)),                              # image patches
                full((Kp, Vd)),                                 # patch embed weight
                full((B, B * P)),                               # mean-pool matrix
                full((Vd, Pd)),                                 # visual projection
                pl.BlockSpec((1, 1), lambda l: (0, 0),
                             memory_space=pltpu.MemorySpace.SMEM),   # logit scale
            ],
            out_specs=full((B, n_cls)),
            scratch_shapes=[pltpu.VMEM((N, D), jnp.float32)],   # carried hidden state
            compiler_params=pltpu.CompilerParams(dimension_semantics=("arbitrary",)),
        )(x0,
          params["ln1_g"], params["ln1_b"],
          params["qkv_w"], params["qkv_b"],
          params["o_w"], params["o_b"],
          params["ln2_g"], params["ln2_b"],
          params["fc1_w"], params["fc1_b"],
          params["fc2_w"], params["fc2_b"],
          params["ln_f_g"], params["ln_f_b"],
          params["text_proj"], eos_sel,
          patches, params["patch_w"], pool_mat, params["visual_proj"],
          params["logit_scale"])

    return jax.jit(forward)


# ----------------------------- Main -----------------------------

if __name__ == "__main__":
    key = jax.random.PRNGKey(0)
    k_params, k_img, k_tok = jax.random.split(key, 3)

    cfg = dict(n_cls=4, context_length=8, n_ctx=3, ctx_dim=32, n_heads=2,
               mlp_dim=64, n_layers=2, proj_dim=32, patch_size=8, vis_dim=32)
    B, C, Himg, Wimg = 2, 3, 16, 16

    params = init_params(k_params, img_channels=C, **cfg)

    pixel_values = jax.random.normal(k_img, (B, C, Himg, Wimg), jnp.float32)

    # synthetic tokenized prompts: [SOS] X X X <name tokens> [EOT] <pad>, EOT has the max id.
    ids = jax.random.randint(k_tok, (cfg["n_cls"], cfg["context_length"]), 3, 1000,
                             dtype=jnp.int32)
    name_lens = [1, 2, 3, 2]
    eos_pos = jnp.array([1 + cfg["n_ctx"] + nl for nl in name_lens], dtype=jnp.int32)
    tokenized_prompts = jnp.where(
        jnp.arange(cfg["context_length"])[None, :] == eos_pos[:, None], 49407, ids)

    forward = build_forward(cfg)
    logits_per_image = forward(params, pixel_values, tokenized_prompts)
    jax.block_until_ready(logits_per_image)
    assert logits_per_image.shape == (B, cfg["n_cls"])
    print("KERNEL_OK")
</pallas_src>

<mosaic_0001>
module attributes {stable_mosaic.version = 11 : i64} {
  func.func @_fused_forward_kernel(%arg0: i32, %arg1: memref<32x32xf32, #tpu.memory_space<vmem>>, %arg2: memref<1x1x32xf32, #tpu.memory_space<vmem>>, %arg3: memref<1x1x32xf32, #tpu.memory_space<vmem>>, %arg4: memref<1x32x96xf32, #tpu.memory_space<vmem>>, %arg5: memref<1x1x96xf32, #tpu.memory_space<vmem>>, %arg6: memref<1x32x32xf32, #tpu.memory_space<vmem>>, %arg7: memref<1x1x32xf32, #tpu.memory_space<vmem>>, %arg8: memref<1x1x32xf32, #tpu.memory_space<vmem>>, %arg9: memref<1x1x32xf32, #tpu.memory_space<vmem>>, %arg10: memref<1x32x64xf32, #tpu.memory_space<vmem>>, %arg11: memref<1x1x64xf32, #tpu.memory_space<vmem>>, %arg12: memref<1x64x32xf32, #tpu.memory_space<vmem>>, %arg13: memref<1x1x32xf32, #tpu.memory_space<vmem>>, %arg14: memref<1x32xf32, #tpu.memory_space<vmem>>, %arg15: memref<1x32xf32, #tpu.memory_space<vmem>>, %arg16: memref<32x32xf32, #tpu.memory_space<vmem>>, %arg17: memref<4x32xf32, #tpu.memory_space<vmem>>, %arg18: memref<8x192xf32, #tpu.memory_space<vmem>>, %arg19: memref<192x32xf32, #tpu.memory_space<vmem>>, %arg20: memref<2x8xf32, #tpu.memory_space<vmem>>, %arg21: memref<32x32xf32, #tpu.memory_space<vmem>>, %arg22: memref<1x1xf32, #tpu.memory_space<smem>>, %arg23: memref<2x4xf32, #tpu.memory_space<vmem>>, %arg24: memref<32x32xf32, #tpu.memory_space<vmem>>) attributes {dimension_semantics = [#tpu.dimension_semantics<arbitrary>], iteration_bounds = array<i64: 2>, scalar_prefetch = 0 : i64, scratch_operands = 1 : i64, tpu.core_type = #tpu.core_type<tc>, window_params = [{pipeline_mode = #tpu.pipeline_mode<synchronous>, transform_indices = @transform_0, window_bounds = array<i64: 32, 32>}, {transform_indices = @transform_1, window_bounds = array<i64: 1, 1, 32>}, {transform_indices = @transform_2, window_bounds = array<i64: 1, 1, 32>}, {transform_indices = @transform_3, window_bounds = array<i64: 1, 32, 96>}, {transform_indices = @transform_4, window_bounds = array<i64: 1, 1, 96>}, {transform_indices = @transform_5, window_bounds = array<i64: 1, 32, 32>}, {transform_indices = @transform_6, window_bounds = array<i64: 1, 1, 32>}, {transform_indices = @transform_7, window_bounds = array<i64: 1, 1, 32>}, {transform_indices = @transform_8, window_bounds = array<i64: 1, 1, 32>}, {transform_indices = @transform_9, window_bounds = array<i64: 1, 32, 64>}, {transform_indices = @transform_10, window_bounds = array<i64: 1, 1, 64>}, {transform_indices = @transform_11, window_bounds = array<i64: 1, 64, 32>}, {transform_indices = @transform_12, window_bounds = array<i64: 1, 1, 32>}, {pipeline_mode = #tpu.pipeline_mode<synchronous>, transform_indices = @transform_13, window_bounds = array<i64: 1, 32>}, {pipeline_mode = #tpu.pipeline_mode<synchronous>, transform_indices = @transform_14, window_bounds = array<i64: 1, 32>}, {pipeline_mode = #tpu.pipeline_mode<synchronous>, transform_indices = @transform_15, window_bounds = array<i64: 32, 32>}, {pipeline_mode = #tpu.pipeline_mode<synchronous>, transform_indices = @transform_16, window_bounds = array<i64: 4, 32>}, {pipeline_mode = #tpu.pipeline_mode<synchronous>, transform_indices = @transform_17, window_bounds = array<i64: 8, 192>}, {pipeline_mode = #tpu.pipeline_mode<synchronous>, transform_indices = @transform_18, window_bounds = array<i64: 192, 32>}, {pipeline_mode = #tpu.pipeline_mode<synchronous>, transform_indices = @transform_19, window_bounds = array<i64: 2, 8>}, {pipeline_mode = #tpu.pipeline_mode<synchronous>, transform_indices = @transform_20, window_bounds = array<i64: 32, 32>}, {transform_indices = @transform_21, window_bounds = array<i64: 1, 1>}, {pipeline_mode = #tpu.pipeline_mode<synchronous>, transform_indices = @transform_22, window_bounds = array<i64: 2, 4>}]} {
    %c0_i32 = arith.constant 0 : i32
    %0 = arith.cmpi eq, %arg0, %c0_i32 : i32
    %1 = arith.extui %0 : i1 to i32
    %c0_i32_0 = arith.constant 0 : i32
    %2 = arith.cmpi ne, %1, %c0_i32_0 : i32
    scf.if %2 {
      %c0_68 = arith.constant 0 : index
      %c0_69 = arith.constant 0 : index
      %138 = vector.load %arg1[%c0_68, %c0_69] : memref<32x32xf32, #tpu.memory_space<vmem>>, vector<32x32xf32>
      %c0_70 = arith.constant 0 : index
      %c0_71 = arith.constant 0 : index
      %139 = vector.load %arg24[%c0_70, %c0_71] : memref<32x32xf32, #tpu.memory_space<vmem>>, vector<32x32xf32>
      tpu.vector_store %arg24[%c0_70, %c0_71], %138 {strides = array<i32>} : memref<32x32xf32, #tpu.memory_space<vmem>>, vector<32x32xf32>,
    } else {
    }
    %c0 = arith.constant 0 : index
    %c0_1 = arith.constant 0 : index
    %3 = vector.load %arg24[%c0, %c0_1] : memref<32x32xf32, #tpu.memory_space<vmem>>, vector<32x32xf32>
    %c0_2 = arith.constant 0 : index
    %c0_3 = arith.constant 0 : index
    %c0_4 = arith.constant 0 : index
    %4 = vector.load %arg2[%c0_2, %c0_3, %c0_4] : memref<1x1x32xf32, #tpu.memory_space<vmem>>, vector<1x1x32xf32>
    %5 = vector.shape_cast %4 : vector<1x1x32xf32> to vector<1x32xf32>
    %c0_5 = arith.constant 0 : index
    %c0_6 = arith.constant 0 : index
    %c0_7 = arith.constant 0 : index
    %6 = vector.load %arg3[%c0_5, %c0_6, %c0_7] : memref<1x1x32xf32, #tpu.memory_space<vmem>>, vector<1x1x32xf32>
    %7 = vector.shape_cast %6 : vector<1x1x32xf32> to vector<1x32xf32>
    %cst = arith.constant dense<0.000000e+00> : vector<32xf32>
    %8 = vector.multi_reduction <add>, %3, %cst [1] : vector<32x32xf32> to vector<32xf32>
    %9 = vector.shape_cast %8 : vector<32xf32> to vector<32x1xf32>
    %cst_8 = arith.constant 3.200000e+01 : f32
    %10 = vector.broadcast %cst_8 : f32 to vector<32x1xf32>
    %11 = arith.divf %9, %10 : vector<32x1xf32>
    %12 = vector.broadcast %11 : vector<32x1xf32> to vector<32x32xf32>
    %13 = arith.subf %3, %12 : vector<32x32xf32>
    %14 = arith.mulf %13, %13 : vector<32x32xf32>
    %cst_9 = arith.constant dense<0.000000e+00> : vector<32xf32>
    %15 = vector.multi_reduction <add>, %14, %cst_9 [1] : vector<32x32xf32> to vector<32xf32>
    %16 = vector.shape_cast %15 : vector<32xf32> to vector<32x1xf32>
    %cst_10 = arith.constant 3.200000e+01 : f32
    %17 = vector.broadcast %cst_10 : f32 to vector<32x1xf32>
    %18 = arith.divf %16, %17 : vector<32x1xf32>
    %cst_11 = arith.constant 9.99999974E-6 : f32
    %19 = vector.broadcast %cst_11 : f32 to vector<32x1xf32>
    %20 = arith.addf %18, %19 : vector<32x1xf32>
    %21 = math.rsqrt %20 : vector<32x1xf32>
    %22 = vector.broadcast %21 : vector<32x1xf32> to vector<32x32xf32>
    %23 = arith.mulf %13, %22 : vector<32x32xf32>
    %24 = vector.broadcast %5 : vector<1x32xf32> to vector<32x32xf32>
    %25 = arith.mulf %23, %24 : vector<32x32xf32>
    %26 = vector.broadcast %7 : vector<1x32xf32> to vector<32x32xf32>
    %27 = arith.addf %25, %26 : vector<32x32xf32>
    %c0_12 = arith.constant 0 : index
    %c0_13 = arith.constant 0 : index
    %c0_14 = arith.constant 0 : index
    %28 = vector.load %arg4[%c0_12, %c0_13, %c0_14] : memref<1x32x96xf32, #tpu.memory_space<vmem>>, vector<1x32x96xf32>
    %29 = vector.shape_cast %28 : vector<1x32x96xf32> to vector<32x96xf32>
    %cst_15 = arith.constant dense<0.000000e+00> : vector<32x96xf32>
    %30 = tpu.matmul %27, %29, %cst_15 {dimension_numbers = #tpu.dot_dimension_numbers<[1], [0], [0], [1], [0, 0, 1, 1], [], []>} : vector<32x32xf32>, vector<32x96xf32>, vector<32x96xf32> -> vector<32x96xf32>
    %c0_16 = arith.constant 0 : index
    %c0_17 = arith.constant 0 : index
    %c0_18 = arith.constant 0 : index
    %31 = vector.load %arg5[%c0_16, %c0_17, %c0_18] : memref<1x1x96xf32, #tpu.memory_space<vmem>>, vector<1x1x96xf32>
    %32 = vector.shape_cast %31 : vector<1x1x96xf32> to vector<1x96xf32>
    %33 = vector.broadcast %32 : vector<1x96xf32> to vector<32x96xf32>
    %34 = arith.addf %30, %33 : vector<32x96xf32>
    %35 = vector.shape_cast %34 : vector<32x96xf32> to vector<4x8x96xf32>
    %36 = tpu.iota {dimensions = array<i32: 1>} : vector<4x8x8xi32>
    %37 = tpu.iota {dimensions = array<i32: 2>} : vector<4x8x8xi32>
    %38 = arith.cmpi sle, %37, %36 : vector<4x8x8xi32>
    %39 = vector.extract_strided_slice %35 {offsets = [0, 0, 0], sizes = [4, 8, 16], strides = [1, 1, 1]} : vector<4x8x96xf32> to vector<4x8x16xf32>
    %cst_19 = arith.constant 2.500000e-01 : f32
    %40 = vector.broadcast %cst_19 : f32 to vector<4x8x16xf32>
    %41 = arith.mulf %39, %40 : vector<4x8x16xf32>
    %42 = vector.extract_strided_slice %35 {offsets = [0, 0, 32], sizes = [4, 8, 16], strides = [1, 1, 1]} : vector<4x8x96xf32> to vector<4x8x16xf32>
    %43 = vector.extract_strided_slice %35 {offsets = [0, 0, 64], sizes = [4, 8, 16], strides = [1, 1, 1]} : vector<4x8x96xf32> to vector<4x8x16xf32>
    "tpu.trace_start"() <{level = 10 : i32, message = "cld,cmd->clm"}> : () -> ()
    %cst_20 = arith.constant dense<0.000000e+00> : vector<4x8x8xf32>
    %44 = tpu.matmul %41, %42, %cst_20 {dimension_numbers = #tpu.dot_dimension_numbers<[2], [2], [1], [1], [0, 0, 0, 1, 1, 1], [0], [0]>} : vector<4x8x16xf32>, vector<4x8x16xf32>, vector<4x8x8xf32> -> vector<4x8x8xf32>
    %cst_21 = arith.constant -1.000000e+30 : f32
    "tpu.trace_stop"() : () -> ()
    %45 = vector.broadcast %cst_21 : f32 to vector<4x8x8xf32>
    %46 = arith.select %38, %44, %45 : vector<4x8x8xi1>, vector<4x8x8xf32>
    %cst_22 = arith.constant dense<0xFF800000> : vector<4x8xf32>
    %47 = vector.multi_reduction <maximumf>, %46, %cst_22 [2] : vector<4x8x8xf32> to vector<4x8xf32>
    %48 = vector.shape_cast %47 : vector<4x8xf32> to vector<4x8x1xf32>
    %49 = vector.broadcast %48 : vector<4x8x1xf32> to vector<4x8x8xf32>
    %50 = arith.subf %46, %49 : vector<4x8x8xf32>
    %51 = math.exp %50 : vector<4x8x8xf32>
    %cst_23 = arith.constant dense<0.000000e+00> : vector<4x8xf32>
    %52 = vector.multi_reduction <add>, %51, %cst_23 [2] : vector<4x8x8xf32> to vector<4x8xf32>
    %53 = vector.shape_cast %52 : vector<4x8xf32> to vector<4x8x1xf32>
    %54 = tpu.reciprocal %53 {approx = true} : vector<4x8x1xf32> -> vector<4x8x1xf32>
    %55 = vector.broadcast %54 : vector<4x8x1xf32> to vector<4x8x8xf32>
    %56 = arith.mulf %51, %55 : vector<4x8x8xf32>
    "tpu.trace_start"() <{level = 10 : i32, message = "clm,cmd->cld"}> : () -> ()
    %cst_24 = arith.constant dense<0.000000e+00> : vector<4x8x16xf32>
    %57 = tpu.matmul %56, %43, %cst_24 {dimension_numbers = #tpu.dot_dimension_numbers<[2], [1], [1], [2], [0, 0, 0, 1, 1, 2], [0], [0]>} : vector<4x8x8xf32>, vector<4x8x16xf32>, vector<4x8x16xf32> -> vector<4x8x16xf32>
    "tpu.trace_stop"() : () -> ()
    %58 = vector.extract_strided_slice %35 {offsets = [0, 0, 16], sizes = [4, 8, 16], strides = [1, 1, 1]} : vector<4x8x96xf32> to vector<4x8x16xf32>
    %cst_25 = arith.constant 2.500000e-01 : f32
    %59 = vector.broadcast %cst_25 : f32 to vector<4x8x16xf32>
    %60 = arith.mulf %58, %59 : vector<4x8x16xf32>
    %61 = vector.extract_strided_slice %35 {offsets = [0, 0, 48], sizes = [4, 8, 16], strides = [1, 1, 1]} : vector<4x8x96xf32> to vector<4x8x16xf32>
    %62 = vector.extract_strided_slice %35 {offsets = [0, 0, 80], sizes = [4, 8, 16], strides = [1, 1, 1]} : vector<4x8x96xf32> to vector<4x8x16xf32>
    "tpu.trace_start"() <{level = 10 : i32, message = "cld,cmd->clm"}> : () -> ()
    %cst_26 = arith.constant dense<0.000000e+00> : vector<4x8x8xf32>
    %63 = tpu.matmul %60, %61, %cst_26 {dimension_numbers = #tpu.dot_dimension_numbers<[2], [2], [1], [1], [0, 0, 0, 1, 1, 1], [0], [0]>} : vector<4x8x16xf32>, vector<4x8x16xf32>, vector<4x8x8xf32> -> vector<4x8x8xf32>
    %cst_27 = arith.constant -1.000000e+30 : f32
    "tpu.trace_stop"() : () -> ()
    %64 = vector.broadcast %cst_27 : f32 to vector<4x8x8xf32>
    %65 = arith.select %38, %63, %64 : vector<4x8x8xi1>, vector<4x8x8xf32>
    %cst_28 = arith.constant dense<0xFF800000> : vector<4x8xf32>
    %66 = vector.multi_reduction <maximumf>, %65, %cst_28 [2] : vector<4x8x8xf32> to vector<4x8xf32>
    %67 = vector.shape_cast %66 : vector<4x8xf32> to vector<4x8x1xf32>
    %68 = vector.broadcast %67 : vector<4x8x1xf32> to vector<4x8x8xf32>
    %69 = arith.subf %65, %68 : vector<4x8x8xf32>
    %70 = math.exp %69 : vector<4x8x8xf32>
    %cst_29 = arith.constant dense<0.000000e+00> : vector<4x8xf32>
    %71 = vector.multi_reduction <add>, %70, %cst_29 [2] : vector<4x8x8xf32> to vector<4x8xf32>
    %72 = vector.shape_cast %71 : vector<4x8xf32> to vector<4x8x1xf32>
    %73 = tpu.reciprocal %72 {approx = true} : vector<4x8x1xf32> -> vector<4x8x1xf32>
    %74 = vector.broadcast %73 : vector<4x8x1xf32> to vector<4x8x8xf32>
    %75 = arith.mulf %70, %74 : vector<4x8x8xf32>
    "tpu.trace_start"() <{level = 10 : i32, message = "clm,cmd->cld"}> : () -> ()
    %cst_30 = arith.constant dense<0.000000e+00> : vector<4x8x16xf32>
    %76 = tpu.matmul %75, %62, %cst_30 {dimension_numbers = #tpu.dot_dimension_numbers<[2], [1], [1], [2], [0, 0, 0, 1, 1, 2], [0], [0]>} : vector<4x8x8xf32>, vector<4x8x16xf32>, vector<4x8x16xf32> -> vector<4x8x16xf32>
    "tpu.trace_stop"() : () -> ()
    %77 = tpu.concatenate %57, %76 in 2 : vector<4x8x16xf32>, vector<4x8x16xf32> -> vector<4x8x32xf32>
    %78 = vector.shape_cast %77 : vector<4x8x32xf32> to vector<32x32xf32>
    %c0_31 = arith.constant 0 : index
    %c0_32 = arith.constant 0 : index
    %c0_33 = arith.constant 0 : index
    %79 = vector.load %arg6[%c0_31, %c0_32, %c0_33] : memref<1x32x32xf32, #tpu.memory_space<vmem>>, vector<1x32x32xf32>
    %80 = vector.shape_cast %79 : vector<1x32x32xf32> to vector<32x32xf32>
    %cst_34 = arith.constant dense<0.000000e+00> : vector<32x32xf32>
    %81 = tpu.matmul %78, %80, %cst_34 {dimension_numbers = #tpu.dot_dimension_numbers<[1], [0], [0], [1], [0, 0, 1, 1], [], []>} : vector<32x32xf32>, vector<32x32xf32>, vector<32x32xf32> -> vector<32x32xf32>
    %c0_35 = arith.constant 0 : index
    %c0_36 = arith.constant 0 : index
    %c0_37 = arith.constant 0 : index
    %82 = vector.load %arg7[%c0_35, %c0_36, %c0_37] : memref<1x1x32xf32, #tpu.memory_space<vmem>>, vector<1x1x32xf32>
    %83 = vector.shape_cast %82 : vector<1x1x32xf32> to vector<1x32xf32>
    %84 = vector.broadcast %83 : vector<1x32xf32> to vector<32x32xf32>
    %85 = arith.addf %81, %84 : vector<32x32xf32>
    %86 = arith.addf %3, %85 : vector<32x32xf32>
    %c0_38 = arith.constant 0 : index
    %c0_39 = arith.constant 0 : index
    %c0_40 = arith.constant 0 : index
    %87 = vector.load %arg8[%c0_38, %c0_39, %c0_40] : memref<1x1x32xf32, #tpu.memory_space<vmem>>, vector<1x1x32xf32>
    %88 = vector.shape_cast %87 : vector<1x1x32xf32> to vector<1x32xf32>
    %c0_41 = arith.constant 0 : index
    %c0_42 = arith.constant 0 : index
    %c0_43 = arith.constant 0 : index
    %89 = vector.load %arg9[%c0_41, %c0_42, %c0_43] : memref<1x1x32xf32, #tpu.memory_space<vmem>>, vector<1x1x32xf32>
    %90 = vector.shape_cast %89 : vector<1x1x32xf32> to vector<1x32xf32>
    %cst_44 = arith.constant dense<0.000000e+00> : vector<32xf32>
    %91 = vector.multi_reduction <add>, %86, %cst_44 [1] : vector<32x32xf32> to vector<32xf32>
    %92 = vector.shape_cast %91 : vector<32xf32> to vector<32x1xf32>
    %cst_45 = arith.constant 3.200000e+01 : f32
    %93 = vector.broadcast %cst_45 : f32 to vector<32x1xf32>
    %94 = arith.divf %92, %93 : vector<32x1xf32>
    %95 = vector.broadcast %94 : vector<32x1xf32> to vector<32x32xf32>
    %96 = arith.subf %86, %95 : vector<32x32xf32>
    %97 = arith.mulf %96, %96 : vector<32x32xf32>
    %cst_46 = arith.constant dense<0.000000e+00> : vector<32xf32>
    %98 = vector.multi_reduction <add>, %97, %cst_46 [1] : vector<32x32xf32> to vector<32xf32>
    %99 = vector.shape_cast %98 : vector<32xf32> to vector<32x1xf32>
    %cst_47 = arith.constant 3.200000e+01 : f32
    %100 = vector.broadcast %cst_47 : f32 to vector<32x1xf32>
    %101 = arith.divf %99, %100 : vector<32x1xf32>
    %cst_48 = arith.constant 9.99999974E-6 : f32
    %102 = vector.broadcast %cst_48 : f32 to vector<32x1xf32>
    %103 = arith.addf %101, %102 : vector<32x1xf32>
    %104 = math.rsqrt %103 : vector<32x1xf32>
    %105 = vector.broadcast %104 : vector<32x1xf32> to vector<32x32xf32>
    %106 = arith.mulf %96, %105 : vector<32x32xf32>
    %107 = vector.broadcast %88 : vector<1x32xf32> to vector<32x32xf32>
    %108 = arith.mulf %106, %107 : vector<32x32xf32>
    %109 = vector.broadcast %90 : vector<1x32xf32> to vector<32x32xf32>
    %110 = arith.addf %108, %109 : vector<32x32xf32>
    %c0_49 = arith.constant 0 : index
    %c0_50 = arith.constant 0 : index
    %c0_51 = arith.constant 0 : index
    %111 = vector.load %arg10[%c0_49, %c0_50, %c0_51] : memref<1x32x64xf32, #tpu.memory_space<vmem>>, vector<1x32x64xf32>
    %112 = vector.shape_cast %111 : vector<1x32x64xf32> to vector<32x64xf32>
    %cst_52 = arith.constant dense<0.000000e+00> : vector<32x64xf32>
    %113 = tpu.matmul %110, %112, %cst_52 {dimension_numbers = #tpu.dot_dimension_numbers<[1], [0], [0], [1], [0, 0, 1, 1], [], []>} : vector<32x32xf32>, vector<32x64xf32>, vector<32x64xf32> -> vector<32x64xf32>
    %c0_53 = arith.constant 0 : index
    %c0_54 = arith.constant 0 : index
    %c0_55 = arith.constant 0 : index
    %114 = vector.load %arg11[%c0_53, %c0_54, %c0_55] : memref<1x1x64xf32, #tpu.memory_space<vmem>>, vector<1x1x64xf32>
    %115 = vector.shape_cast %114 : vector<1x1x64xf32> to vector<1x64xf32>
    %116 = vector.broadcast %115 : vector<1x64xf32> to vector<32x64xf32>
    %117 = arith.addf %113, %116 : vector<32x64xf32>
    %cst_56 = arith.constant 1.702000e+00 : f32
    %118 = vector.broadcast %cst_56 : f32 to vector<32x64xf32>
    %119 = arith.mulf %118, %117 : vector<32x64xf32>
    %120 = arith.negf %119 : vector<32x64xf32>
    %121 = math.exp %120 : vector<32x64xf32>
    %cst_57 = arith.constant 1.000000e+00 : f32
    %122 = vector.broadcast %cst_57 : f32 to vector<32x64xf32>
    %123 = arith.addf %122, %121 : vector<32x64xf32>
    %124 = arith.divf %122, %123 : vector<32x64xf32>
    %125 = arith.mulf %117, %124 : vector<32x64xf32>
    %c0_58 = arith.constant 0 : index
    %c0_59 = arith.constant 0 : index
    %c0_60 = arith.constant 0 : index
    %126 = vector.load %arg12[%c0_58, %c0_59, %c0_60] : memref<1x64x32xf32, #tpu.memory_space<vmem>>, vector<1x64x32xf32>
    %127 = vector.shape_cast %126 : vector<1x64x32xf32> to vector<64x32xf32>
    %cst_61 = arith.constant dense<0.000000e+00> : vector<32x32xf32>
    %128 = tpu.matmul %125, %127, %cst_61 {dimension_numbers = #tpu.dot_dimension_numbers<[1], [0], [0], [1], [0, 0, 1, 1], [], []>} : vector<32x64xf32>, vector<64x32xf32>, vector<32x32xf32> -> vector<32x32xf32>
    %c0_62 = arith.constant 0 : index
    %c0_63 = arith.constant 0 : index
    %c0_64 = arith.constant 0 : index
    %129 = vector.load %arg13[%c0_62, %c0_63, %c0_64] : memref<1x1x32xf32, #tpu.memory_space<vmem>>, vector<1x1x32xf32>
    %130 = vector.shape_cast %129 : vector<1x1x32xf32> to vector<1x32xf32>
    %131 = vector.broadcast %130 : vector<1x32xf32> to vector<32x32xf32>
    %132 = arith.addf %128, %131 : vector<32x32xf32>
    %133 = arith.addf %86, %132 : vector<32x32xf32>
    %c0_65 = arith.constant 0 : index
    %c0_66 = arith.constant 0 : index
    %134 = vector.load %arg24[%c0_65, %c0_66] : memref<32x32xf32, #tpu.memory_space<vmem>>, vector<32x32xf32>
    tpu.vector_store %arg24[%c0_65, %c0_66], %133 {strides = array<i32>} : memref<32x32xf32, #tpu.memory_space<vmem>>, vector<32x32xf32>,
    %c1_i32 = arith.constant 1 : i32
    %135 = arith.cmpi eq, %arg0, %c1_i32 : i32
    %136 = arith.extui %135 : i1 to i32
    %c0_i32_67 = arith.constant 0 : i32
    %137 = arith.cmpi ne, %136, %c0_i32_67 : i32
    scf.if %137 {
      %c0_68 = arith.constant 0 : index
      %c0_69 = arith.constant 0 : index
      %138 = vector.load %arg14[%c0_68, %c0_69] : memref<1x32xf32, #tpu.memory_space<vmem>>, vector<1x32xf32>
      %c0_70 = arith.constant 0 : index
      %c0_71 = arith.constant 0 : index
      %139 = vector.load %arg15[%c0_70, %c0_71] : memref<1x32xf32, #tpu.memory_space<vmem>>, vector<1x32xf32>
      %cst_72 = arith.constant dense<0.000000e+00> : vector<32xf32>
      %140 = vector.multi_reduction <add>, %133, %cst_72 [1] : vector<32x32xf32> to vector<32xf32>
      %141 = vector.shape_cast %140 : vector<32xf32> to vector<32x1xf32>
      %cst_73 = arith.constant 3.200000e+01 : f32
      %142 = vector.broadcast %cst_73 : f32 to vector<32x1xf32>
      %143 = arith.divf %141, %142 : vector<32x1xf32>
      %144 = vector.broadcast %143 : vector<32x1xf32> to vector<32x32xf32>
      %145 = arith.subf %133, %144 : vector<32x32xf32>
      %146 = arith.mulf %145, %145 : vector<32x32xf32>
      %cst_74 = arith.constant dense<0.000000e+00> : vector<32xf32>
      %147 = vector.multi_reduction <add>, %146, %cst_74 [1] : vector<32x32xf32> to vector<32xf32>
      %148 = vector.shape_cast %147 : vector<32xf32> to vector<32x1xf32>
      %cst_75 = arith.constant 3.200000e+01 : f32
      %149 = vector.broadcast %cst_75 : f32 to vector<32x1xf32>
      %150 = arith.divf %148, %149 : vector<32x1xf32>
      %cst_76 = arith.constant 9.99999974E-6 : f32
      %151 = vector.broadcast %cst_76 : f32 to vector<32x1xf32>
      %152 = arith.addf %150, %151 : vector<32x1xf32>
      %153 = math.rsqrt %152 : vector<32x1xf32>
      %154 = vector.broadcast %153 : vector<32x1xf32> to vector<32x32xf32>
      %155 = arith.mulf %145, %154 : vector<32x32xf32>
      %156 = vector.broadcast %138 : vector<1x32xf32> to vector<32x32xf32>
      %157 = arith.mulf %155, %156 : vector<32x32xf32>
      %158 = vector.broadcast %139 : vector<1x32xf32> to vector<32x32xf32>
      %159 = arith.addf %157, %158 : vector<32x32xf32>
      %c0_77 = arith.constant 0 : index
      %c0_78 = arith.constant 0 : index
      %160 = vector.load %arg17[%c0_77, %c0_78] : memref<4x32xf32, #tpu.memory_space<vmem>>, vector<4x32xf32>
      %cst_79 = arith.constant dense<0.000000e+00> : vector<4x32xf32>
      %161 = tpu.matmul %160, %159, %cst_79 {dimension_numbers = #tpu.dot_dimension_numbers<[1], [0], [0], [1], [0, 0, 1, 1], [], []>} : vector<4x32xf32>, vector<32x32xf32>, vector<4x32xf32> -> vector<4x32xf32>
      %c0_80 = arith.constant 0 : index
      %c0_81 = arith.constant 0 : index
      %162 = vector.load %arg16[%c0_80, %c0_81] : memref<32x32xf32, #tpu.memory_space<vmem>>, vector<32x32xf32>
      %cst_82 = arith.constant dense<0.000000e+00> : vector<4x32xf32>
      %163 = tpu.matmul %161, %162, %cst_82 {dimension_numbers = #tpu.dot_dimension_numbers<[1], [0], [0], [1], [0, 0, 1, 1], [], []>} : vector<4x32xf32>, vector<32x32xf32>, vector<4x32xf32> -> vector<4x32xf32>
      %c0_83 = arith.constant 0 : index
      %c0_84 = arith.constant 0 : index
      %164 = vector.load %arg18[%c0_83, %c0_84] : memref<8x192xf32, #tpu.memory_space<vmem>>, vector<8x192xf32>
      %c0_85 = arith.constant 0 : index
      %c0_86 = arith.constant 0 : index
      %165 = vector.load %arg19[%c0_85, %c0_86] : memref<192x32xf32, #tpu.memory_space<vmem>>, vector<192x32xf32>
      %cst_87 = arith.constant dense<0.000000e+00> : vector<8x32xf32>
      %166 = tpu.matmul %164, %165, %cst_87 {dimension_numbers = #tpu.dot_dimension_numbers<[1], [0], [0], [1], [0, 0, 1, 1], [], []>} : vector<8x192xf32>, vector<192x32xf32>, vector<8x32xf32> -> vector<8x32xf32>
      %c0_88 = arith.constant 0 : index
      %c0_89 = arith.constant 0 : index
      %167 = vector.load %arg20[%c0_88, %c0_89] : memref<2x8xf32, #tpu.memory_space<vmem>>, vector<2x8xf32>
      %cst_90 = arith.constant dense<0.000000e+00> : vector<2x32xf32>
      %168 = tpu.matmul %167, %166, %cst_90 {dimension_numbers = #tpu.dot_dimension_numbers<[1], [0], [0], [1], [0, 0, 1, 1], [], []>} : vector<2x8xf32>, vector<8x32xf32>, vector<2x32xf32> -> vector<2x32xf32>
      %c0_91 = arith.constant 0 : index
      %c0_92 = arith.constant 0 : index
      %169 = vector.load %arg21[%c0_91, %c0_92] : memref<32x32xf32, #tpu.memory_space<vmem>>, vector<32x32xf32>
      %cst_93 = arith.constant dense<0.000000e+00> : vector<2x32xf32>
      %170 = tpu.matmul %168, %169, %cst_93 {dimension_numbers = #tpu.dot_dimension_numbers<[1], [0], [0], [1], [0, 0, 1, 1], [], []>} : vector<2x32xf32>, vector<32x32xf32>, vector<2x32xf32> -> vector<2x32xf32>
      %171 = arith.mulf %170, %170 : vector<2x32xf32>
      %cst_94 = arith.constant dense<0.000000e+00> : vector<2xf32>
      %172 = vector.multi_reduction <add>, %171, %cst_94 [1] : vector<2x32xf32> to vector<2xf32>
      %173 = vector.shape_cast %172 : vector<2xf32> to vector<2x1xf32>
      %174 = math.rsqrt %173 : vector<2x1xf32>
      %175 = vector.broadcast %174 : vector<2x1xf32> to vector<2x32xf32>
      %176 = arith.mulf %170, %175 : vector<2x32xf32>
      %177 = arith.mulf %163, %163 : vector<4x32xf32>
      %cst_95 = arith.constant dense<0.000000e+00> : vector<4xf32>
      %178 = vector.multi_reduction <add>, %177, %cst_95 [1] : vector<4x32xf32> to vector<4xf32>
      %179 = vector.shape_cast %178 : vector<4xf32> to vector<4x1xf32>
      %180 = math.rsqrt %179 : vector<4x1xf32>
      %181 = vector.broadcast %180 : vector<4x1xf32> to vector<4x32xf32>
      %182 = arith.mulf %163, %181 : vector<4x32xf32>
      %c0_96 = arith.constant 0 : index
      %c0_97 = arith.constant 0 : index
      %183 = memref.load %arg22[%c0_96, %c0_97] : memref<1x1xf32, #tpu.memory_space<smem>>
      %184 = math.exp %183 : f32
      %185 = tpu.transpose %182, [1, 0] : vector<4x32xf32> -> vector<32x4xf32>
      %cst_98 = arith.constant dense<0.000000e+00> : vector<2x4xf32>
      %186 = tpu.matmul %176, %185, %cst_98 {dimension_numbers = #tpu.dot_dimension_numbers<[1], [0], [0], [1], [0, 0, 1, 1], [], []>} : vector<2x32xf32>, vector<32x4xf32>, vector<2x4xf32> -> vector<2x4xf32>
      %187 = vector.broadcast %184 : f32 to vector<2x4xf32>
      %188 = arith.mulf %187, %186 : vector<2x4xf32>
      %c0_99 = arith.constant 0 : index
      %c0_100 = arith.constant 0 : index
      %189 = vector.load %arg23[%c0_99, %c0_100] : memref<2x4xf32, #tpu.memory_space<vmem>>, vector<2x4xf32>
      tpu.vector_store %arg23[%c0_99, %c0_100], %188 {strides = array<i32>} : memref<2x4xf32, #tpu.memory_space<vmem>>, vector<2x4xf32>,
    } else {
    }
    return
  }
  func.func @transform_0(%arg0: i32) -> (i32, i32) {
    %c0_i32 = arith.constant 0 : i32
    %c0_i32_0 = arith.constant 0 : i32
    %c0_i32_1 = arith.constant 0 : i32
    return %c0_i32, %c0_i32_0 : i32, i32
  }
  func.func @transform_1(%arg0: i32) -> (i32, i32, i32) {
    %c0_i32 = arith.constant 0 : i32
    %c0_i32_0 = arith.constant 0 : i32
    %c0_i32_1 = arith.constant 0 : i32
    return %arg0, %c0_i32, %c0_i32_0 : i32, i32, i32
  }
  func.func @transform_2(%arg0: i32) -> (i32, i32, i32) {
    %c0_i32 = arith.constant 0 : i32
    %c0_i32_0 = arith.constant 0 : i32
    %c0_i32_1 = arith.constant 0 : i32
    return %arg0, %c0_i32, %c0_i32_0 : i32, i32, i32
  }
  func.func @transform_3(%arg0: i32) -> (i32, i32, i32) {
    %c0_i32 = arith.constant 0 : i32
    %c0_i32_0 = arith.constant 0 : i32
    %c0_i32_1 = arith.constant 0 : i32
    return %arg0, %c0_i32, %c0_i32_0 : i32, i32, i32
  }
  func.func @transform_4(%arg0: i32) -> (i32, i32, i32) {
    %c0_i32 = arith.constant 0 : i32
    %c0_i32_0 = arith.constant 0 : i32
    %c0_i32_1 = arith.constant 0 : i32
    return %arg0, %c0_i32, %c0_i32_0 : i32, i32, i32
  }
  func.func @transform_5(%arg0: i32) -> (i32, i32, i32) {
    %c0_i32 = arith.constant 0 : i32
    %c0_i32_0 = arith.constant 0 : i32
    %c0_i32_1 = arith.constant 0 : i32
    return %arg0, %c0_i32, %c0_i32_0 : i32, i32, i32
  }
  func.func @transform_6(%arg0: i32) -> (i32, i32, i32) {
    %c0_i32 = arith.constant 0 : i32
    %c0_i32_0 = arith.constant 0 : i32
    %c0_i32_1 = arith.constant 0 : i32
    return %arg0, %c0_i32, %c0_i32_0 : i32, i32, i32
  }
  func.func @transform_7(%arg0: i32) -> (i32, i32, i32) {
    %c0_i32 = arith.constant 0 : i32
    %c0_i32_0 = arith.constant 0 : i32
    %c0_i32_1 = arith.constant 0 : i32
    return %arg0, %c0_i32, %c0_i32_0 : i32, i32, i32
  }
  func.func @transform_8(%arg0: i32) -> (i32, i32, i32) {
    %c0_i32 = arith.constant 0 : i32
    %c0_i32_0 = arith.constant 0 : i32
    %c0_i32_1 = arith.constant 0 : i32
    return %arg0, %c0_i32, %c0_i32_0 : i32, i32, i32
  }
  func.func @transform_9(%arg0: i32) -> (i32, i32, i32) {
    %c0_i32 = arith.constant 0 : i32
    %c0_i32_0 = arith.constant 0 : i32
    %c0_i32_1 = arith.constant 0 : i32
    return %arg0, %c0_i32, %c0_i32_0 : i32, i32, i32
  }
  func.func @transform_10(%arg0: i32) -> (i32, i32, i32) {
    %c0_i32 = arith.constant 0 : i32
    %c0_i32_0 = arith.constant 0 : i32
    %c0_i32_1 = arith.constant 0 : i32
    return %arg0, %c0_i32, %c0_i32_0 : i32, i32, i32
  }
  func.func @transform_11(%arg0: i32) -> (i32, i32, i32) {
    %c0_i32 = arith.constant 0 : i32
    %c0_i32_0 = arith.constant 0 : i32
    %c0_i32_1 = arith.constant 0 : i32
    return %arg0, %c0_i32, %c0_i32_0 : i32, i32, i32
  }
  func.func @transform_12(%arg0: i32) -> (i32, i32, i32) {
    %c0_i32 = arith.constant 0 : i32
    %c0_i32_0 = arith.constant 0 : i32
    %c0_i32_1 = arith.constant 0 : i32
    return %arg0, %c0_i32, %c0_i32_0 : i32, i32, i32
  }
  func.func @transform_13(%arg0: i32) -> (i32, i32) {
    %c0_i32 = arith.constant 0 : i32
    %c0_i32_0 = arith.constant 0 : i32
    %c0_i32_1 = arith.constant 0 : i32
    return %c0_i32, %c0_i32_0 : i32, i32
  }
  func.func @transform_14(%arg0: i32) -> (i32, i32) {
    %c0_i32 = arith.constant 0 : i32
    %c0_i32_0 = arith.constant 0 : i32
    %c0_i32_1 = arith.constant 0 : i32
    return %c0_i32, %c0_i32_0 : i32, i32
  }
  func.func @transform_15(%arg0: i32) -> (i32, i32) {
    %c0_i32 = arith.constant 0 : i32
    %c0_i32_0 = arith.constant 0 : i32
    %c0_i32_1 = arith.constant 0 : i32
    return %c0_i32, %c0_i32_0 : i32, i32
  }
  func.func @transform_16(%arg0: i32) -> (i32, i32) {
    %c0_i32 = arith.constant 0 : i32
    %c0_i32_0 = arith.constant 0 : i32
    %c0_i32_1 = arith.constant 0 : i32
    return %c0_i32, %c0_i32_0 : i32, i32
  }
  func.func @transform_17(%arg0: i32) -> (i32, i32) {
    %c0_i32 = arith.constant 0 : i32
    %c0_i32_0 = arith.constant 0 : i32
    %c0_i32_1 = arith.constant 0 : i32
    return %c0_i32, %c0_i32_0 : i32, i32
  }
  func.func @transform_18(%arg0: i32) -> (i32, i32) {
    %c0_i32 = arith.constant 0 : i32
    %c0_i32_0 = arith.constant 0 : i32
    %c0_i32_1 = arith.constant 0 : i32
    return %c0_i32, %c0_i32_0 : i32, i32
  }
  func.func @transform_19(%arg0: i32) -> (i32, i32) {
    %c0_i32 = arith.constant 0 : i32
    %c0_i32_0 = arith.constant 0 : i32
    %c0_i32_1 = arith.constant 0 : i32
    return %c0_i32, %c0_i32_0 : i32, i32
  }
  func.func @transform_20(%arg0: i32) -> (i32, i32) {
    %c0_i32 = arith.constant 0 : i32
    %c0_i32_0 = arith.constant 0 : i32
    %c0_i32_1 = arith.constant 0 : i32
    return %c0_i32, %c0_i32_0 : i32, i32
  }
  func.func @transform_21(%arg0: i32) -> (i32, i32) {
    %c0_i32 = arith.constant 0 : i32
    %c0_i32_0 = arith.constant 0 : i32
    %c0_i32_1 = arith.constant 0 : i32
    return %c0_i32, %c0_i32_0 : i32, i32
  }
  func.func @transform_22(%arg0: i32) -> (i32, i32) {
    %c0_i32 = arith.constant 0 : i32
    %c0_i32_0 = arith.constant 0 : i32
    %c0_i32_1 = arith.constant 0 : i32
    return %c0_i32, %c0_i32_0 : i32, i32
  }
}

</mosaic_0001>

<llo_original>
// kernel: forward.1
$region0: #{forward.1}
  #allocation0 [shape = 'u32[]', space=smem, size = 0x4, offset = 0x4, fixed_abs, tag = 'smem constant byte address 0x4 - core index']
  #allocation1 [shape = 'u32[144,128]{1,0:T(1,128)}', space=vmem, size = 0x12000, scoped, tag = 'internal scratch']
  #allocation2 [shape = 'f32[32,32]{1,0:T(8,128)}', space=vmem, size = 0x4000, scoped, tag = 'scratch operand']
  #allocation3 [shape = 'f32[1,1]{1,0:T(1,128)S(6)}', space=smem, size = 0x200, scoped, tag = 'scoped memory for forward.1']
  %s0 = inlined_call_operand.vmem [shape: f32[32,32], index: 0, kind: input, shape index: {}]
  %s1 = inlined_call_operand.vmem [shape: f32[2,1,32], index: 1, kind: input, shape index: {}]
  %s2 = inlined_call_operand.vmem [shape: f32[2,1,32], index: 2, kind: input, shape index: {}]
  %s3 = inlined_call_operand.vmem [shape: f32[2,32,96], index: 3, kind: input, shape index: {}]
  %s4 = inlined_call_operand.vmem [shape: f32[2,1,96], index: 4, kind: input, shape index: {}]
  %s5 = inlined_call_operand.vmem [shape: f32[2,32,32], index: 5, kind: input, shape index: {}]
  %s6 = inlined_call_operand.vmem [shape: f32[2,1,32], index: 6, kind: input, shape index: {}]
  %s7 = inlined_call_operand.vmem [shape: f32[2,1,32], index: 7, kind: input, shape index: {}]
  %s8 = inlined_call_operand.vmem [shape: f32[2,1,32], index: 8, kind: input, shape index: {}]
  %s9 = inlined_call_operand.vmem [shape: f32[2,32,64], index: 9, kind: input, shape index: {}]
  %s10 = inlined_call_operand.vmem [shape: f32[2,1,64], index: 10, kind: input, shape index: {}]
  %s11 = inlined_call_operand.vmem [shape: f32[2,64,32], index: 11, kind: input, shape index: {}]
  %s12 = inlined_call_operand.vmem [shape: f32[2,1,32], index: 12, kind: input, shape index: {}]
  %s13 = inlined_call_operand.vmem [shape: f32[1,32], index: 13, kind: input, shape index: {}]
  %s14 = inlined_call_operand.vmem [shape: f32[1,32], index: 14, kind: input, shape index: {}]
  %s15 = inlined_call_operand.vmem [shape: f32[32,32], index: 15, kind: input, shape index: {}]
  %s16 = inlined_call_operand.vmem [shape: f32[4,32], index: 16, kind: input, shape index: {}]
  %s17 = inlined_call_operand.vmem [shape: f32[8,192], index: 17, kind: input, shape index: {}]
  %s18 = inlined_call_operand.vmem [shape: f32[192,32], index: 18, kind: input, shape index: {}]
  %s19 = inlined_call_operand.vmem [shape: f32[2,8], index: 19, kind: input, shape index: {}]
  %s20 = inlined_call_operand.vmem [shape: f32[32,32], index: 20, kind: input, shape index: {}]
  %s21 = inlined_call_operand.<no memory space> [shape: f32[1,1], index: 21, kind: input, shape index: {}]
  %s22 = inlined_call_operand.hbm [shape: f32[2,4], index: 22, kind: output, shape index: {}]
  %s23 = sld [smem:[#allocation0]]
  $region129: #{forward.1} parent=0
    _
  %s25 = ssub.s32 1, %s23
  %s26 = scalar_select 0, %s25, %s23
  %27 = sst [smem:[#allocation3]] %s21
  $region1: #{forward.1} parent=0
    #allocation4 [shape = 'u8[1024]{0}', space=vmem, size = 0x400, scoped, tag = 'output window, operand 0, single buffered']
    #allocation5 [shape = 's32[2]{0}', space=sflag, size = 0x8, scoped, tag = 'scoped memory for forward.1']
    %28 = vsyncpa [#allocation5], 0
    loop: start=0, step=1, limit=4
    $region2: #{forward.1} parent=1 // loop_pre_header
      _
    $region3: #{forward.1} parent=1 // loop_header
      %s30 = sphi 0, %s34
      %p31 = scmp.ge.s32.totalorder %s30, 4
      %s38 = sphi 0, %s38
      %s40 = sphi 0, %s38
      %s41 = sphi 0, %s40
      %s55 = sphi 0, %s41
      %s61 = sphi 0, %s63
      %s64 = sphi 0, %s61
      %s65 = sphi 0, %s64
      %s81 = sphi 0, %s65
      %s87 = sphi 0, %s89
      %s90 = sphi 0, %s87
      %s91 = sphi 0, %s90
      %s107 = sphi 0, %s91
      %s113 = sphi 0, %s115
      %s116 = sphi 0, %s113
      %s117 = sphi 0, %s116
      %s133 = sphi 0, %s117
      %s139 = sphi 0, %s141
      %s142 = sphi 0, %s139
      %s143 = sphi 0, %s142
      %s159 = sphi 0, %s143
      %s165 = sphi 0, %s167
      %s168 = sphi 0, %s165
      %s169 = sphi 0, %s168
      %s185 = sphi 0, %s169
      %s191 = sphi 0, %s193
      %s194 = sphi 0, %s191
      %s195 = sphi 0, %s194
      %s211 = sphi 0, %s195
      %s217 = sphi 0, %s219
      %s220 = sphi 0, %s217
      %s221 = sphi 0, %s220
      %s237 = sphi 0, %s221
      %s243 = sphi 0, %s245
      %s246 = sphi 0, %s243
      %s247 = sphi 0, %s246
      %s263 = sphi 0, %s247
      %s269 = sphi 0, %s271
      %s272 = sphi 0, %s269
      %s273 = sphi 0, %s272
      %s289 = sphi 0, %s273
      %s295 = sphi 0, %s297
      %s298 = sphi 0, %s295
      %s299 = sphi 0, %s298
      %s315 = sphi 0, %s299
      %s321 = sphi 0, %s323
      %s324 = sphi 0, %s321
      %s325 = sphi 0, %s324
      %s341 = sphi 0, %s325
      %s347 = sphi 0, %s349
      %s350 = sphi 0, %s347
      %s351 = sphi 0, %s350
      %s367 = sphi 0, %s351
      %s371 = sphi 0, %s371
      %s373 = sphi 0, %s371
      %s374 = sphi 0, %s373
      %s388 = sphi 0, %s374
      %s392 = sphi 0, %s392
      %s394 = sphi 0, %s392
      %s395 = sphi 0, %s394
      %s409 = sphi 0, %s395
      %s413 = sphi 0, %s413
      %s415 = sphi 0, %s413
      %s416 = sphi 0, %s415
      %s430 = sphi 0, %s416
      %s434 = sphi 0, %s434
      %s436 = sphi 0, %s434
      %s437 = sphi 0, %s436
      %s451 = sphi 0, %s437
      %s455 = sphi 0, %s455
      %s457 = sphi 0, %s455
      %s458 = sphi 0, %s457
      %s472 = sphi 0, %s458
      %s476 = sphi 0, %s476
      %s478 = sphi 0, %s476
      %s479 = sphi 0, %s478
      %s493 = sphi 0, %s479
      %s497 = sphi 0, %s497
      %s499 = sphi 0, %s497
      %s500 = sphi 0, %s499
      %s514 = sphi 0, %s500
      %s518 = sphi 0, %s518
      %s520 = sphi 0, %s518
      %s521 = sphi 0, %s520
      %s535 = sphi 0, %s521
      %s539 = sphi 0, %s539
      %s541 = sphi 0, %s539
      %s542 = sphi 0, %s541
      %s556 = sphi 0, %s542
      %s560 = sphi 0, %s560
      %s562 = sphi 0, %s560
      %s563 = sphi 0, %s562
      %s577 = sphi 0, %s563
    $region4: #{forward.1} parent=1 // loop_header_branch
      %33 = sbr.rel (%p31) target = $region8
    $region5: #{forward.1} parent=1 // loop_body
      %s35 = ssub.s32 %s30, 1
      %s36 = ssub.s32 %s30, 2
      %s37 = sadd.s32 %s30, 1
      %s39 = sadd.s32 %s38, 1
      %p42 = scmp.eq.s32.totalorder %s30, 1
      %p43 = scmp.ne.s32.totalorder %s38, %s40
      %p44 = scmp.eq.s32.totalorder %s30, 0
      %p45 = por %p43, %p44
      %p46 = scmp.ne.s32.totalorder %s38, %s40
      %p47 = scmp.eq.s32.totalorder %s35, 1
      %p48 = por %p46, %p47
      %p49 = scmp.ne.s32.totalorder %s40, %s41
      %p50 = scmp.eq.s32.totalorder %s35, 0
      %p51 = por %p49, %p50
      %p52 = scmp.ne.s32.totalorder %s40, %s41
      %p53 = scmp.eq.s32.totalorder %s36, 1
      %p54 = por %p52, %p53
      %p56 = scmp.ne.s32.totalorder %s41, %s55
      %p57 = scmp.eq.s32.totalorder %s36, 0
      %p58 = por %p56, %p57
      %s59 = ssub.s32 %s30, %s37
      %p60 = scmp.eq.s32.totalorder %s59, 0
      %s62 = sadd.s32 %s61, 1
      %s63 = scalar_select %p60, %s61, %s62
      %p66 = pneg %p60
      %p67 = scmp.eq.s32.totalorder %s30, 1
      %p68 = por %p66, %p67
      %p69 = scmp.ne.s32.totalorder %s61, %s64
      %p70 = scmp.eq.s32.totalorder %s30, 0
      %p71 = por %p69, %p70
      %p72 = scmp.ne.s32.totalorder %s61, %s64
      %p73 = scmp.eq.s32.totalorder %s35, 1
      %p74 = por %p72, %p73
      %p75 = scmp.ne.s32.totalorder %s64, %s65
      %p76 = scmp.eq.s32.totalorder %s35, 0
      %p77 = por %p75, %p76
      %p78 = scmp.ne.s32.totalorder %s64, %s65
      %p79 = scmp.eq.s32.totalorder %s36, 1
      %p80 = por %p78, %p79
      %p82 = scmp.ne.s32.totalorder %s65, %s81
      %p83 = scmp.eq.s32.totalorder %s36, 0
      %p84 = por %p82, %p83
      %s85 = ssub.s32 %s30, %s37
      %p86 = scmp.eq.s32.totalorder %s85, 0
      %s88 = sadd.s32 %s87, 1
      %s89 = scalar_select %p86, %s87, %s88
      %p92 = pneg %p86
      %p93 = scmp.eq.s32.totalorder %s30, 1
      %p94 = por %p92, %p93
      %p95 = scmp.ne.s32.totalorder %s87, %s90
      %p96 = scmp.eq.s32.totalorder %s30, 0
      %p97 = por %p95, %p96
      %p98 = scmp.ne.s32.totalorder %s87, %s90
      %p99 = scmp.eq.s32.totalorder %s35, 1
      %p100 = por %p98, %p99
      %p101 = scmp.ne.s32.totalorder %s90, %s91
      %p102 = scmp.eq.s32.totalorder %s35, 0
      %p103 = por %p101, %p102
      %p104 = scmp.ne.s32.totalorder %s90, %s91
      %p105 = scmp.eq.s32.totalorder %s36, 1
      %p106 = por %p104, %p105
      %p108 = scmp.ne.s32.totalorder %s91, %s107
      %p109 = scmp.eq.s32.totalorder %s36, 0
      %p110 = por %p108, %p109
      %s111 = ssub.s32 %s30, %s37
      %p112 = scmp.eq.s32.totalorder %s111, 0
      %s114 = sadd.s32 %s113, 1
      %s115 = scalar_select %p112, %s113, %s114
      %p118 = pneg %p112
      %p119 = scmp.eq.s32.totalorder %s30, 1
      %p120 = por %p118, %p119
      %p121 = scmp.ne.s32.totalorder %s113, %s116
      %p122 = scmp.eq.s32.totalorder %s30, 0
      %p123 = por %p121, %p122
      %p124 = scmp.ne.s32.totalorder %s113, %s116
      %p125 = scmp.eq.s32.totalorder %s35, 1
      %p126 = por %p124, %p125
      %p127 = scmp.ne.s32.totalorder %s116, %s117
      %p128 = scmp.eq.s32.totalorder %s35, 0
      %p129 = por %p127, %p128
      %p130 = scmp.ne.s32.totalorder %s116, %s117
      %p131 = scmp.eq.s32.totalorder %s36, 1
      %p132 = por %p130, %p131
      %p134 = scmp.ne.s32.totalorder %s117, %s133
      %p135 = scmp.eq.s32.totalorder %s36, 0
      %p136 = por %p134, %p135
      %s137 = ssub.s32 %s30, %s37
      %p138 = scmp.eq.s32.totalorder %s137, 0
      %s140 = sadd.s32 %s139, 1
      %s141 = scalar_select %p138, %s139, %s140
      %p144 = pneg %p138
      %p145 = scmp.eq.s32.totalorder %s30, 1
      %p146 = por %p144, %p145
      %p147 = scmp.ne.s32.totalorder %s139, %s142
      %p148 = scmp.eq.s32.totalorder %s30, 0
      %p149 = por %p147, %p148
      %p150 = scmp.ne.s32.totalorder %s139, %s142
      %p151 = scmp.eq.s32.totalorder %s35, 1
      %p152 = por %p150, %p151
      %p153 = scmp.ne.s32.totalorder %s142, %s143
      %p154 = scmp.eq.s32.totalorder %s35, 0
      %p155 = por %p153, %p154
      %p156 = scmp.ne.s32.totalorder %s142, %s143
      %p157 = scmp.eq.s32.totalorder %s36, 1
      %p158 = por %p156, %p157
      %p160 = scmp.ne.s32.totalorder %s143, %s159
      %p161 = scmp.eq.s32.totalorder %s36, 0
      %p162 = por %p160, %p161
      %s163 = ssub.s32 %s30, %s37
      %p164 = scmp.eq.s32.totalorder %s163, 0
      %s166 = sadd.s32 %s165, 1
      %s167 = scalar_select %p164, %s165, %s166
      %p170 = pneg %p164
      %p171 = scmp.eq.s32.totalorder %s30, 1
      %p172 = por %p170, %p171
      %p173 = scmp.ne.s32.totalorder %s165, %s168
      %p174 = scmp.eq.s32.totalorder %s30, 0
      %p175 = por %p173, %p174
      %p176 = scmp.ne.s32.totalorder %s165, %s168
      %p177 = scmp.eq.s32.totalorder %s35, 1
      %p178 = por %p176, %p177
      %p179 = scmp.ne.s32.totalorder %s168, %s169
      %p180 = scmp.eq.s32.totalorder %s35, 0
      %p181 = por %p179, %p180
      %p182 = scmp.ne.s32.totalorder %s168, %s169
      %p183 = scmp.eq.s32.totalorder %s36, 1
      %p184 = por %p182, %p183
      %p186 = scmp.ne.s32.totalorder %s169, %s185
      %p187 = scmp.eq.s32.totalorder %s36, 0
      %p188 = por %p186, %p187
      %s189 = ssub.s32 %s30, %s37
      %p190 = scmp.eq.s32.totalorder %s189, 0
      %s192 = sadd.s32 %s191, 1
      %s193 = scalar_select %p190, %s191, %s192
      %p196 = pneg %p190
      %p197 = scmp.eq.s32.totalorder %s30, 1
      %p198 = por %p196, %p197
      %p199 = scmp.ne.s32.totalorder %s191, %s194
      %p200 = scmp.eq.s32.totalorder %s30, 0
      %p201 = por %p199, %p200
      %p202 = scmp.ne.s32.totalorder %s191, %s194
      %p203 = scmp.eq.s32.totalorder %s35, 1
      %p204 = por %p202, %p203
      %p205 = scmp.ne.s32.totalorder %s194, %s195
      %p206 = scmp.eq.s32.totalorder %s35, 0
      %p207 = por %p205, %p206
      %p208 = scmp.ne.s32.totalorder %s194, %s195
      %p209 = scmp.eq.s32.totalorder %s36, 1
      %p210 = por %p208, %p209
      %p212 = scmp.ne.s32.totalorder %s195, %s211
      %p213 = scmp.eq.s32.totalorder %s36, 0
      %p214 = por %p212, %p213
      %s215 = ssub.s32 %s30, %s37
      %p216 = scmp.eq.s32.totalorder %s215, 0
      %s218 = sadd.s32 %s217, 1
      %s219 = scalar_select %p216, %s217, %s218
      %p222 = pneg %p216
      %p223 = scmp.eq.s32.totalorder %s30, 1
      %p224 = por %p222, %p223
      %p225 = scmp.ne.s32.totalorder %s217, %s220
      %p226 = scmp.eq.s32.totalorder %s30, 0
      %p227 = por %p225, %p226
      %p228 = scmp.ne.s32.totalorder %s217, %s220
      %p229 = scmp.eq.s32.totalorder %s35, 1
      %p230 = por %p228, %p229
      %p231 = scmp.ne.s32.totalorder %s220, %s221
      %p232 = scmp.eq.s32.totalorder %s35, 0
      %p233 = por %p231, %p232
      %p234 = scmp.ne.s32.totalorder %s220, %s221
      %p235 = scmp.eq.s32.totalorder %s36, 1
      %p236 = por %p234, %p235
      %p238 = scmp.ne.s32.totalorder %s221, %s237
      %p239 = scmp.eq.s32.totalorder %s36, 0
      %p240 = por %p238, %p239
      %s241 = ssub.s32 %s30, %s37
      %p242 = scmp.eq.s32.totalorder %s241, 0
      %s244 = sadd.s32 %s243, 1
      %s245 = scalar_select %p242, %s243, %s244
      %p248 = pneg %p242
      %p249 = scmp.eq.s32.totalorder %s30, 1
      %p250 = por %p248, %p249
      %p251 = scmp.ne.s32.totalorder %s243, %s246
      %p252 = scmp.eq.s32.totalorder %s30, 0
      %p253 = por %p251, %p252
      %p254 = scmp.ne.s32.totalorder %s243, %s246
      %p255 = scmp.eq.s32.totalorder %s35, 1
      %p256 = por %p254, %p255
      %p257 = scmp.ne.s32.totalorder %s246, %s247
      %p258 = scmp.eq.s32.totalorder %s35, 0
      %p259 = por %p257, %p258
      %p260 = scmp.ne.s32.totalorder %s246, %s247
      %p261 = scmp.eq.s32.totalorder %s36, 1
      %p262 = por %p260, %p261
      %p264 = scmp.ne.s32.totalorder %s247, %s263
      %p265 = scmp.eq.s32.totalorder %s36, 0
      %p266 = por %p264, %p265
      %s267 = ssub.s32 %s30, %s37
      %p268 = scmp.eq.s32.totalorder %s267, 0
      %s270 = sadd.s32 %s269, 1
      %s271 = scalar_select %p268, %s269, %s270
      %p274 = pneg %p268
      %p275 = scmp.eq.s32.totalorder %s30, 1
      %p276 = por %p274, %p275
      %p277 = scmp.ne.s32.totalorder %s269, %s272
      %p278 = scmp.eq.s32.totalorder %s30, 0
      %p279 = por %p277, %p278
      %p280 = scmp.ne.s32.totalorder %s269, %s272
      %p281 = scmp.eq.s32.totalorder %s35, 1
      %p282 = por %p280, %p281
      %p283 = scmp.ne.s32.totalorder %s272, %s273
      %p284 = scmp.eq.s32.totalorder %s35, 0
      %p285 = por %p283, %p284
      %p286 = scmp.ne.s32.totalorder %s272, %s273
      %p287 = scmp.eq.s32.totalorder %s36, 1
      %p288 = por %p286, %p287
      %p290 = scmp.ne.s32.totalorder %s273, %s289
      %p291 = scmp.eq.s32.totalorder %s36, 0
      %p292 = por %p290, %p291
      %s293 = ssub.s32 %s30, %s37
      %p294 = scmp.eq.s32.totalorder %s293, 0
      %s296 = sadd.s32 %s295, 1
      %s297 = scalar_select %p294, %s295, %s296
      %p300 = pneg %p294
      %p301 = scmp.eq.s32.totalorder %s30, 1
      %p302 = por %p300, %p301
      %p303 = scmp.ne.s32.totalorder %s295, %s298
      %p304 = scmp.eq.s32.totalorder %s30, 0
      %p305 = por %p303, %p304
      %p306 = scmp.ne.s32.totalorder %s295, %s298
      %p307 = scmp.eq.s32.totalorder %s35, 1
      %p308 = por %p306, %p307
      %p309 = scmp.ne.s32.totalorder %s298, %s299
      %p310 = scmp.eq.s32.totalorder %s35, 0
      %p311 = por %p309, %p310
      %p312 = scmp.ne.s32.totalorder %s298, %s299
      %p313 = scmp.eq.s32.totalorder %s36, 1
      %p314 = por %p312, %p313
      %p316 = scmp.ne.s32.totalorder %s299, %s315
      %p317 = scmp.eq.s32.totalorder %s36, 0
      %p318 = por %p316, %p317
      %s319 = ssub.s32 %s30, %s37
      %p320 = scmp.eq.s32.totalorder %s319, 0
      %s322 = sadd.s32 %s321, 1
      %s323 = scalar_select %p320, %s321, %s322
      %p326 = pneg %p320
      %p327 = scmp.eq.s32.totalorder %s30, 1
      %p328 = por %p326, %p327
      %p329 = scmp.ne.s32.totalorder %s321, %s324
      %p330 = scmp.eq.s32.totalorder %s30, 0
      %p331 = por %p329, %p330
      %p332 = scmp.ne.s32.totalorder %s321, %s324
      %p333 = scmp.eq.s32.totalorder %s35, 1
      %p334 = por %p332, %p333
      %p335 = scmp.ne.s32.totalorder %s324, %s325
      %p336 = scmp.eq.s32.totalorder %s35, 0
      %p337 = por %p335, %p336
      %p338 = scmp.ne.s32.totalorder %s324, %s325
      %p339 = scmp.eq.s32.totalorder %s36, 1
      %p340 = por %p338, %p339
      %p342 = scmp.ne.s32.totalorder %s325, %s341
      %p343 = scmp.eq.s32.totalorder %s36, 0
      %p344 = por %p342, %p343
      %s345 = ssub.s32 %s30, %s37
      %p346 = scmp.eq.s32.totalorder %s345, 0
      %s348 = sadd.s32 %s347, 1
      %s349 = scalar_select %p346, %s347, %s348
      %p352 = pneg %p346
      %p353 = scmp.eq.s32.totalorder %s30, 1
      %p354 = por %p352, %p353
      %p355 = scmp.ne.s32.totalorder %s347, %s350
      %p356 = scmp.eq.s32.totalorder %s30, 0
      %p357 = por %p355, %p356
      %p358 = scmp.ne.s32.totalorder %s347, %s350
      %p359 = scmp.eq.s32.totalorder %s35, 1
      %p360 = por %p358, %p359
      %p361 = scmp.ne.s32.totalorder %s350, %s351
      %p362 = scmp.eq.s32.totalorder %s35, 0
      %p363 = por %p361, %p362
      %p364 = scmp.ne.s32.totalorder %s350, %s351
      %p365 = scmp.eq.s32.totalorder %s36, 1
      %p366 = por %p364, %p365
      %p368 = scmp.ne.s32.totalorder %s351, %s367
      %p369 = scmp.eq.s32.totalorder %s36, 0
      %p370 = por %p368, %p369
      %s372 = sadd.s32 %s371, 1
      %p375 = scmp.eq.s32.totalorder %s30, 1
      %p376 = scmp.ne.s32.totalorder %s371, %s373
      %p377 = scmp.eq.s32.totalorder %s30, 0
      %p378 = por %p376, %p377
      %p379 = scmp.ne.s32.totalorder %s371, %s373
      %p380 = scmp.eq.s32.totalorder %s35, 1
      %p381 = por %p379, %p380
      %p382 = scmp.ne.s32.totalorder %s373, %s374
      %p383 = scmp.eq.s32.totalorder %s35, 0
      %p384 = por %p382, %p383
      %p385 = scmp.ne.s32.totalorder %s373, %s374
      %p386 = scmp.eq.s32.totalorder %s36, 1
      %p387 = por %p385, %p386
      %p389 = scmp.ne.s32.totalorder %s374, %s388
      %p390 = scmp.eq.s32.totalorder %s36, 0
      %p391 = por %p389, %p390
      %s393 = sadd.s32 %s392, 1
      %p396 = scmp.eq.s32.totalorder %s30, 1
      %p397 = scmp.ne.s32.totalorder %s392, %s394
      %p398 = scmp.eq.s32.totalorder %s30, 0
      %p399 = por %p397, %p398
      %p400 = scmp.ne.s32.totalorder %s392, %s394
      %p401 = scmp.eq.s32.totalorder %s35, 1
      %p402 = por %p400, %p401
      %p403 = scmp.ne.s32.totalorder %s394, %s395
      %p404 = scmp.eq.s32.totalorder %s35, 0
      %p405 = por %p403, %p404
      %p406 = scmp.ne.s32.totalorder %s394, %s395
      %p407 = scmp.eq.s32.totalorder %s36, 1
      %p408 = por %p406, %p407
      %p410 = scmp.ne.s32.totalorder %s395, %s409
      %p411 = scmp.eq.s32.totalorder %s36, 0
      %p412 = por %p410, %p411
      %s414 = sadd.s32 %s413, 1
      %p417 = scmp.eq.s32.totalorder %s30, 1
      %p418 = scmp.ne.s32.totalorder %s413, %s415
      %p419 = scmp.eq.s32.totalorder %s30, 0
      %p420 = por %p418, %p419
      %p421 = scmp.ne.s32.totalorder %s413, %s415
      %p422 = scmp.eq.s32.totalorder %s35, 1
      %p423 = por %p421, %p422
      %p424 = scmp.ne.s32.totalorder %s415, %s416
      %p425 = scmp.eq.s32.totalorder %s35, 0
      %p426 = por %p424, %p425
      %p427 = scmp.ne.s32.totalorder %s415, %s416
      %p428 = scmp.eq.s32.totalorder %s36, 1
      %p429 = por %p427, %p428
      %p431 = scmp.ne.s32.totalorder %s416, %s430
      %p432 = scmp.eq.s32.totalorder %s36, 0
      %p433 = por %p431, %p432
      %s435 = sadd.s32 %s434, 1
      %p438 = scmp.eq.s32.totalorder %s30, 1
      %p439 = scmp.ne.s32.totalorder %s434, %s436
      %p440 = scmp.eq.s32.totalorder %s30, 0
      %p441 = por %p439, %p440
      %p442 = scmp.ne.s32.totalorder %s434, %s436
      %p443 = scmp.eq.s32.totalorder %s35, 1
      %p444 = por %p442, %p443
      %p445 = scmp.ne.s32.totalorder %s436, %s437
      %p446 = scmp.eq.s32.totalorder %s35, 0
      %p447 = por %p445, %p446
      %p448 = scmp.ne.s32.totalorder %s436, %s437
      %p449 = scmp.eq.s32.totalorder %s36, 1
      %p450 = por %p448, %p449
      %p452 = scmp.ne.s32.totalorder %s437, %s451
      %p453 = scmp.eq.s32.totalorder %s36, 0
      %p454 = por %p452, %p453
      %s456 = sadd.s32 %s455, 1
      %p459 = scmp.eq.s32.totalorder %s30, 1
      %p460 = scmp.ne.s32.totalorder %s455, %s457
      %p461 = scmp.eq.s32.totalorder %s30, 0
      %p462 = por %p460, %p461
      %p463 = scmp.ne.s32.totalorder %s455, %s457
      %p464 = scmp.eq.s32.totalorder %s35, 1
      %p465 = por %p463, %p464
      %p466 = scmp.ne.s32.totalorder %s457, %s458
      %p467 = scmp.eq.s32.totalorder %s35, 0
      %p468 = por %p466, %p467
      %p469 = scmp.ne.s32.totalorder %s457, %s458
      %p470 = scmp.eq.s32.totalorder %s36, 1
      %p471 = por %p469, %p470
      %p473 = scmp.ne.s32.totalorder %s458, %s472
      %p474 = scmp.eq.s32.totalorder %s36, 0
      %p475 = por %p473, %p474
      %s477 = sadd.s32 %s476, 1
      %p480 = scmp.eq.s32.totalorder %s30, 1
      %p481 = scmp.ne.s32.totalorder %s476, %s478
      %p482 = scmp.eq.s32.totalorder %s30, 0
      %p483 = por %p481, %p482
      %p484 = scmp.ne.s32.totalorder %s476, %s478
      %p485 = scmp.eq.s32.totalorder %s35, 1
      %p486 = por %p484, %p485
      %p487 = scmp.ne.s32.totalorder %s478, %s479
      %p488 = scmp.eq.s32.totalorder %s35, 0
      %p489 = por %p487, %p488
      %p490 = scmp.ne.s32.totalorder %s478, %s479
      %p491 = scmp.eq.s32.totalorder %s36, 1
      %p492 = por %p490, %p491
      %p494 = scmp.ne.s32.totalorder %s479, %s493
      %p495 = scmp.eq.s32.totalorder %s36, 0
      %p496 = por %p494, %p495
      %s498 = sadd.s32 %s497, 1
      %p501 = scmp.eq.s32.totalorder %s30, 1
      %p502 = scmp.ne.s32.totalorder %s497, %s499
      %p503 = scmp.eq.s32.totalorder %s30, 0
      %p504 = por %p502, %p503
      %p505 = scmp.ne.s32.totalorder %s497, %s499
      %p506 = scmp.eq.s32.totalorder %s35, 1
      %p507 = por %p505, %p506
      %p508 = scmp.ne.s32.totalorder %s499, %s500
      %p509 = scmp.eq.s32.totalorder %s35, 0
      %p510 = por %p508, %p509
      %p511 = scmp.ne.s32.totalorder %s499, %s500
      %p512 = scmp.eq.s32.totalorder %s36, 1
      %p513 = por %p511, %p512
      %p515 = scmp.ne.s32.totalorder %s500, %s514
      %p516 = scmp.eq.s32.totalorder %s36, 0
      %p517 = por %p515, %p516
      %s519 = sadd.s32 %s518, 1
      %p522 = scmp.eq.s32.totalorder %s30, 1
      %p523 = scmp.ne.s32.totalorder %s518, %s520
      %p524 = scmp.eq.s32.totalorder %s30, 0
      %p525 = por %p523, %p524
      %p526 = scmp.ne.s32.totalorder %s518, %s520
      %p527 = scmp.eq.s32.totalorder %s35, 1
      %p528 = por %p526, %p527
      %p529 = scmp.ne.s32.totalorder %s520, %s521
      %p530 = scmp.eq.s32.totalorder %s35, 0
      %p531 = por %p529, %p530
      %p532 = scmp.ne.s32.totalorder %s520, %s521
      %p533 = scmp.eq.s32.totalorder %s36, 1
      %p534 = por %p532, %p533
      %p536 = scmp.ne.s32.totalorder %s521, %s535
      %p537 = scmp.eq.s32.totalorder %s36, 0
      %p538 = por %p536, %p537
      %s540 = sadd.s32 %s539, 1
      %p543 = scmp.eq.s32.totalorder %s30, 1
      %p544 = scmp.ne.s32.totalorder %s539, %s541
      %p545 = scmp.eq.s32.totalorder %s30, 0
      %p546 = por %p544, %p545
      %p547 = scmp.ne.s32.totalorder %s539, %s541
      %p548 = scmp.eq.s32.totalorder %s35, 1
      %p549 = por %p547, %p548
      %p550 = scmp.ne.s32.totalorder %s541, %s542
      %p551 = scmp.eq.s32.totalorder %s35, 0
      %p552 = por %p550, %p551
      %p553 = scmp.ne.s32.totalorder %s541, %s542
      %p554 = scmp.eq.s32.totalorder %s36, 1
      %p555 = por %p553, %p554
      %p557 = scmp.ne.s32.totalorder %s542, %s556
      %p558 = scmp.eq.s32.totalorder %s36, 0
      %p559 = por %p557, %p558
      %s561 = sadd.s32 %s560, 1
      %p564 = scmp.eq.s32.totalorder %s30, 1
      %p565 = scmp.ne.s32.totalorder %s560, %s562
      %p566 = scmp.eq.s32.totalorder %s30, 0
      %p567 = por %p565, %p566
      %p568 = scmp.ne.s32.totalorder %s560, %s562
      %p569 = scmp.eq.s32.totalorder %s35, 1
      %p570 = por %p568, %p569
      %p571 = scmp.ne.s32.totalorder %s562, %s563
      %p572 = scmp.eq.s32.totalorder %s35, 0
      %p573 = por %p571, %p572
      %p574 = scmp.ne.s32.totalorder %s562, %s563
      %p575 = scmp.eq.s32.totalorder %s36, 1
      %p576 = por %p574, %p575
      %p578 = scmp.ne.s32.totalorder %s563, %s577
      %p579 = scmp.eq.s32.totalorder %s36, 0
      %p580 = por %p578, %p579
      %p581 = scmp.le.s32.totalorder 1, %s30
      %p582 = scmp.lt.s32.totalorder %s30, 3
      %p583 = pnand %p581, %p582
      %p584 = pneg %p583
      // Predicated region
      $region9: #{forward.1} parent=5 // pred_check
        _
      $region10: #{forward.1} parent=5 // pred_check_branch
        %586 = sbr.rel (%p583) target = $region12
      $region11: #{forward.1} parent=5 // pred_region
        %s587 = ssub.s32 %s30, 1
        // Predicated region
        $region13: #{forward.1} parent=11 // pred_check
          %p588 = pneg %p51
        $region14: #{forward.1} parent=11 // pred_check_branch
          %590 = sbr.rel (%p588) target = $region16
        $region15: #{forward.1} parent=11 // pred_region
          _
        $region16: #{forward.1} parent=11 // pred_fallthru
          _
        // Predicated region
        $region17: #{forward.1} parent=11 // pred_check
          %p591 = pneg %p384
        $region18: #{forward.1} parent=11 // pred_check_branch
          %593 = sbr.rel (%p591) target = $region20
        $region19: #{forward.1} parent=11 // pred_region
          _
        $region20: #{forward.1} parent=11 // pred_fallthru
          _
        // Predicated region
        $region21: #{forward.1} parent=11 // pred_check
          %p594 = pneg %p405
        $region22: #{forward.1} parent=11 // pred_check_branch
          %596 = sbr.rel (%p594) target = $region24
        $region23: #{forward.1} parent=11 // pred_region
          _
        $region24: #{forward.1} parent=11 // pred_fallthru
          _
        // Predicated region
        $region25: #{forward.1} parent=11 // pred_check
          %p597 = pneg %p426
        $region26: #{forward.1} parent=11 // pred_check_branch
          %599 = sbr.rel (%p597) target = $region28
        $region27: #{forward.1} parent=11 // pred_region
          _
        $region28: #{forward.1} parent=11 // pred_fallthru
          _
        // Predicated region
        $region29: #{forward.1} parent=11 // pred_check
          %p600 = pneg %p447
        $region30: #{forward.1} parent=11 // pred_check_branch
          %602 = sbr.rel (%p600) target = $region32
        $region31: #{forward.1} parent=11 // pred_region
          _
        $region32: #{forward.1} parent=11 // pred_fallthru
          _
        // Predicated region
        $region33: #{forward.1} parent=11 // pred_check
          %p603 = pneg %p468
        $region34: #{forward.1} parent=11 // pred_check_branch
          %605 = sbr.rel (%p603) target = $region36
        $region35: #{forward.1} parent=11 // pred_region
          _
        $region36: #{forward.1} parent=11 // pred_fallthru
          _
        // Predicated region
        $region37: #{forward.1} parent=11 // pred_check
          %p606 = pneg %p489
        $region38: #{forward.1} parent=11 // pred_check_branch
          %608 = sbr.rel (%p606) target = $region40
        $region39: #{forward.1} parent=11 // pred_region
          _
        $region40: #{forward.1} parent=11 // pred_fallthru
          _
        // Predicated region
        $region41: #{forward.1} parent=11 // pred_check
          %p609 = pneg %p510
        $region42: #{forward.1} parent=11 // pred_check_branch
          %611 = sbr.rel (%p609) target = $region44
        $region43: #{forward.1} parent=11 // pred_region
          _
        $region44: #{forward.1} parent=11 // pred_fallthru
          _
        // Predicated region
        $region45: #{forward.1} parent=11 // pred_check
          %p612 = pneg %p531
        $region46: #{forward.1} parent=11 // pred_check_branch
          %614 = sbr.rel (%p612) target = $region48
        $region47: #{forward.1} parent=11 // pred_region
          _
        $region48: #{forward.1} parent=11 // pred_fallthru
          _
        // Predicated region
        $region49: #{forward.1} parent=11 // pred_check
          %p615 = pneg %p552
        $region50: #{forward.1} parent=11 // pred_check_branch
          %617 = sbr.rel (%p615) target = $region52
        $region51: #{forward.1} parent=11 // pred_region
          _
        $region52: #{forward.1} parent=11 // pred_fallthru
          _
      $region12: #{forward.1} parent=5 // pred_fallthru
        _
      %p618 = scmp.lt.s32.totalorder %s30, 2
      // Predicated region
      $region53: #{forward.1} parent=5 // pred_check
        %p619 = pneg %p618
      $region54: #{forward.1} parent=5 // pred_check_branch
        %621 = sbr.rel (%p619) target = $region56
      $region55: #{forward.1} parent=5 // pred_region
        // Predicated region
        $region57: #{forward.1} parent=55 // pred_check
          %p622 = pneg %p71
        $region58: #{forward.1} parent=55 // pred_check_branch
          %624 = sbr.rel (%p622) target = $region60
        $region59: #{forward.1} parent=55 // pred_region
          %p625 = scmp.lt.s32.totalorder %s30, 1
          %s626 = scalar_select %p625, %s30, 1
          %s627 = scalar_lea.vmem %s1, %s626
        $region60: #{forward.1} parent=55 // pred_fallthru
          _
        // Predicated region
        $region61: #{forward.1} parent=55 // pred_check
          %p628 = pneg %p97
        $region62: #{forward.1} parent=55 // pred_check_branch
          %630 = sbr.rel (%p628) target = $region64
        $region63: #{forward.1} parent=55 // pred_region
          %p631 = scmp.lt.s32.totalorder %s30, 1
          %s632 = scalar_select %p631, %s30, 1
          %s633 = scalar_lea.vmem %s2, %s632
        $region64: #{forward.1} parent=55 // pred_fallthru
          _
        // Predicated region
        $region65: #{forward.1} parent=55 // pred_check
          %p634 = pneg %p123
        $region66: #{forward.1} parent=55 // pred_check_branch
          %636 = sbr.rel (%p634) target = $region68
        $region67: #{forward.1} parent=55 // pred_region
          %p637 = scmp.lt.s32.totalorder %s30, 1
          %s638 = scalar_select %p637, %s30, 1
          %s639 = smul.addr %s638, 4
          %s640 = smul.addr %s639, 8
          %s641 = scalar_lea.vmem %s3, %s640
        $region68: #{forward.1} parent=55 // pred_fallthru
          _
        // Predicated region
        $region69: #{forward.1} parent=55 // pred_check
          %p642 = pneg %p149
        $region70: #{forward.1} parent=55 // pred_check_branch
          %644 = sbr.rel (%p642) target = $region72
        $region71: #{forward.1} parent=55 // pred_region
          %p645 = scmp.lt.s32.totalorder %s30, 1
          %s646 = scalar_select %p645, %s30, 1
          %s647 = scalar_lea.vmem %s4, %s646
        $region72: #{forward.1} parent=55 // pred_fallthru
          _
        // Predicated region
        $region73: #{forward.1} parent=55 // pred_check
          %p648 = pneg %p175
        $region74: #{forward.1} parent=55 // pred_check_branch
          %650 = sbr.rel (%p648) target = $region76
        $region75: #{forward.1} parent=55 // pred_region
          %p651 = scmp.lt.s32.totalorder %s30, 1
          %s652 = scalar_select %p651, %s30, 1
          %s653 = smul.addr %s652, 4
          %s654 = smul.addr %s653, 8
          %s655 = scalar_lea.vmem %s5, %s654
        $region76: #{forward.1} parent=55 // pred_fallthru
          _
        // Predicated region
        $region77: #{forward.1} parent=55 // pred_check
          %p656 = pneg %p201
        $region78: #{forward.1} parent=55 // pred_check_branch
          %658 = sbr.rel (%p656) target = $region80
        $region79: #{forward.1} parent=55 // pred_region
          %p659 = scmp.lt.s32.totalorder %s30, 1
          %s660 = scalar_select %p659, %s30, 1
          %s661 = scalar_lea.vmem %s6, %s660
        $region80: #{forward.1} parent=55 // pred_fallthru
          _
        // Predicated region
        $region81: #{forward.1} parent=55 // pred_check
          %p662 = pneg %p227
        $region82: #{forward.1} parent=55 // pred_check_branch
          %664 = sbr.rel (%p662) target = $region84
        $region83: #{forward.1} parent=55 // pred_region
          %p665 = scmp.lt.s32.totalorder %s30, 1
          %s666 = scalar_select %p665, %s30, 1
          %s667 = scalar_lea.vmem %s7, %s666
        $region84: #{forward.1} parent=55 // pred_fallthru
          _
        // Predicated region
        $region85: #{forward.1} parent=55 // pred_check
          %p668 = pneg %p253
        $region86: #{forward.1} parent=55 // pred_check_branch
          %670 = sbr.rel (%p668) target = $region88
        $region87: #{forward.1} parent=55 // pred_region
          %p671 = scmp.lt.s32.totalorder %s30, 1
          %s672 = scalar_select %p671, %s30, 1
          %s673 = scalar_lea.vmem %s8, %s672
        $region88: #{forward.1} parent=55 // pred_fallthru
          _
        // Predicated region
        $region89: #{forward.1} parent=55 // pred_check
          %p674 = pneg %p279
        $region90: #{forward.1} parent=55 // pred_check_branch
          %676 = sbr.rel (%p674) target = $region92
        $region91: #{forward.1} parent=55 // pred_region
          %p677 = scmp.lt.s32.totalorder %s30, 1
          %s678 = scalar_select %p677, %s30, 1
          %s679 = smul.addr %s678, 4
          %s680 = smul.addr %s679, 8
          %s681 = scalar_lea.vmem %s9, %s680
        $region92: #{forward.1} parent=55 // pred_fallthru
          _
        // Predicated region
        $region93: #{forward.1} parent=55 // pred_check
          %p682 = pneg %p305
        $region94: #{forward.1} parent=55 // pred_check_branch
          %684 = sbr.rel (%p682) target = $region96
        $region95: #{forward.1} parent=55 // pred_region
          %p685 = scmp.lt.s32.totalorder %s30, 1
          %s686 = scalar_select %p685, %s30, 1
          %s687 = scalar_lea.vmem %s10, %s686
        $region96: #{forward.1} parent=55 // pred_fallthru
          _
        // Predicated region
        $region97: #{forward.1} parent=55 // pred_check
          %p688 = pneg %p331
        $region98: #{forward.1} parent=55 // pred_check_branch
          %690 = sbr.rel (%p688) target = $region100
        $region99: #{forward.1} parent=55 // pred_region
          %p691 = scmp.lt.s32.totalorder %s30, 1
          %s692 = scalar_select %p691, %s30, 1
          %s693 = smul.addr %s692, 8
          %s694 = smul.addr %s693, 8
          %s695 = scalar_lea.vmem %s11, %s694
        $region100: #{forward.1} parent=55 // pred_fallthru
          _
        // Predicated region
        $region101: #{forward.1} parent=55 // pred_check
          %p696 = pneg %p357
        $region102: #{forward.1} parent=55 // pred_check_branch
          %698 = sbr.rel (%p696) target = $region104
        $region103: #{forward.1} parent=55 // pred_region
          %p699 = scmp.lt.s32.totalorder %s30, 1
          %s700 = scalar_select %p699, %s30, 1
          %s701 = scalar_lea.vmem %s12, %s700
        $region104: #{forward.1} parent=55 // pred_fallthru
          _
      $region56: #{forward.1} parent=5 // pred_fallthru
        _
      %p702 = scmp.le.s32.totalorder 1, %s30
      %p703 = scmp.lt.s32.totalorder %s30, 3
      %p704 = pnand %p702, %p703
      %p705 = pneg %p704
      // Predicated region
      $region105: #{forward.1} parent=5 // pred_check
        _
      $region106: #{forward.1} parent=5 // pred_check_branch
        %707 = sbr.rel (%p704) target = $region108
      $region107: #{forward.1} parent=5 // pred_region
        %s708 = ssub.s32 %s30, 1
        %p709 = pneg %p51
        %p710 = pneg %p48
        %p711 = scmp.lt.s32.totalorder %s35, 1
        %s712 = scalar_select %p711, %s35, 1
        %s713 = scalar_lea.vmem %s1, %s712
        %p714 = pneg %p77
        %p715 = pneg %p74
        %p716 = scmp.lt.s32.totalorder %s35, 1
        %s717 = scalar_select %p716, %s35, 1
        %s718 = scalar_lea.vmem %s2, %s717
        %p719 = pneg %p103
        %p720 = pneg %p100
        %p721 = scmp.lt.s32.totalorder %s35, 1
        %s722 = scalar_select %p721, %s35, 1
        %s723 = smul.addr %s722, 4
        %s724 = smul.addr %s723, 8
        %s725 = scalar_lea.vmem %s3, %s724
        %p726 = pneg %p129
        %p727 = pneg %p126
        %p728 = scmp.lt.s32.totalorder %s35, 1
        %s729 = scalar_select %p728, %s35, 1
        %s730 = scalar_lea.vmem %s4, %s729
        %p731 = pneg %p155
        %p732 = pneg %p152
        %p733 = scmp.lt.s32.totalorder %s35, 1
        %s734 = scalar_select %p733, %s35, 1
        %s735 = smul.addr %s734, 4
        %s736 = smul.addr %s735, 8
        %s737 = scalar_lea.vmem %s5, %s736
        %p738 = pneg %p181
        %p739 = pneg %p178
        %p740 = scmp.lt.s32.totalorder %s35, 1
        %s741 = scalar_select %p740, %s35, 1
        %s742 = scalar_lea.vmem %s6, %s741
        %p743 = pneg %p207
        %p744 = pneg %p204
        %p745 = scmp.lt.s32.totalorder %s35, 1
        %s746 = scalar_select %p745, %s35, 1
        %s747 = scalar_lea.vmem %s7, %s746
        %p748 = pneg %p233
        %p749 = pneg %p230
        %p750 = scmp.lt.s32.totalorder %s35, 1
        %s751 = scalar_select %p750, %s35, 1
        %s752 = scalar_lea.vmem %s8, %s751
        %p753 = pneg %p259
        %p754 = pneg %p256
        %p755 = scmp.lt.s32.totalorder %s35, 1
        %s756 = scalar_select %p755, %s35, 1
        %s757 = smul.addr %s756, 4
        %s758 = smul.addr %s757, 8
        %s759 = scalar_lea.vmem %s9, %s758
        %p760 = pneg %p285
        %p761 = pneg %p282
        %p762 = scmp.lt.s32.totalorder %s35, 1
        %s763 = scalar_select %p762, %s35, 1
        %s764 = scalar_lea.vmem %s10, %s763
        %p765 = pneg %p311
        %p766 = pneg %p308
        %p767 = scmp.lt.s32.totalorder %s35, 1
        %s768 = scalar_select %p767, %s35, 1
        %s769 = smul.addr %s768, 8
        %s770 = smul.addr %s769, 8
        %s771 = scalar_lea.vmem %s11, %s770
        %p772 = pneg %p337
        %p773 = pneg %p334
        %p774 = scmp.lt.s32.totalorder %s35, 1
        %s775 = scalar_select %p774, %s35, 1
        %s776 = scalar_lea.vmem %s12, %s775
        %p777 = pneg %p363
        %p778 = pneg %p360
        %p779 = pneg %p384
        %p780 = pneg %p381
        %p781 = pneg %p405
        %p782 = pneg %p402
        %p783 = pneg %p426
        %p784 = pneg %p423
        %p785 = pneg %p447
        %p786 = pneg %p444
        %p787 = pneg %p468
        %p788 = pneg %p465
        %p789 = pneg %p489
        %p790 = pneg %p486
        %p791 = pneg %p510
        %p792 = pneg %p507
        %p793 = pneg %p531
        %p794 = pneg %p528
        %p795 = pneg %p552
        %p796 = pneg %p549
        %p797 = pneg %p573
        %p798 = pneg %p570
        %p799 = scmp.lt.s32.totalorder %s35, 1
        %s800 = scalar_select %p799, %s35, 1
        %s801 = scalar_lea.vmem %s1, %s800
        %p802 = scmp.lt.s32.totalorder %s35, 1
        %s803 = scalar_select %p802, %s35, 1
        %s804 = scalar_lea.vmem %s2, %s803
        %p805 = scmp.lt.s32.totalorder %s35, 1
        %s806 = scalar_select %p805, %s35, 1
        %s807 = smul.addr %s806, 4
        %s808 = smul.addr %s807, 8
        %s809 = scalar_lea.vmem %s3, %s808
        %p810 = scmp.lt.s32.totalorder %s35, 1
        %s811 = scalar_select %p810, %s35, 1
        %s812 = scalar_lea.vmem %s4, %s811
        %p813 = scmp.lt.s32.totalorder %s35, 1
        %s814 = scalar_select %p813, %s35, 1
        %s815 = smul.addr %s814, 4
        %s816 = smul.addr %s815, 8
        %s817 = scalar_lea.vmem %s5, %s816
        %p818 = scmp.lt.s32.totalorder %s35, 1
        %s819 = scalar_select %p818, %s35, 1
        %s820 = scalar_lea.vmem %s6, %s819
        %p821 = scmp.lt.s32.totalorder %s35, 1
        %s822 = scalar_select %p821, %s35, 1
        %s823 = scalar_lea.vmem %s7, %s822
        %p824 = scmp.lt.s32.totalorder %s35, 1
        %s825 = scalar_select %p824, %s35, 1
        %s826 = scalar_lea.vmem %s8, %s825
        %p827 = scmp.lt.s32.totalorder %s35, 1
        %s828 = scalar_select %p827, %s35, 1
        %s829 = smul.addr %s828, 4
        %s830 = smul.addr %s829, 8
        %s831 = scalar_lea.vmem %s9, %s830
        %p832 = scmp.lt.s32.totalorder %s35, 1
        %s833 = scalar_select %p832, %s35, 1
        %s834 = scalar_lea.vmem %s10, %s833
        %p835 = scmp.lt.s32.totalorder %s35, 1
        %s836 = scalar_select %p835, %s35, 1
        %s837 = smul.addr %s836, 8
        %s838 = smul.addr %s837, 8
        %s839 = scalar_lea.vmem %s11, %s838
        %p840 = scmp.lt.s32.totalorder %s35, 1
        %s841 = scalar_select %p840, %s35, 1
        %s842 = scalar_lea.vmem %s12, %s841
        %p843 = scmp.eq.s32.totalorder %s35, 0
        // Predicated region
        $region109: #{forward.1} parent=107 // pred_check
          %p844 = pneg %p843
        $region110: #{forward.1} parent=107 // pred_check_branch
          %846 = sbr.rel (%p844) target = $region112
        $region111: #{forward.1} parent=107 // pred_region
          %v847 = vld [vmem:[%s0] sm:$0xff]
          %v848 = vld [vmem:[%s0 + $0x8] sm:$0xff]
          %v849 = vld [vmem:[%s0 + $0x10] sm:$0xff]
          %v850 = vld [vmem:[%s0 + $0x18] sm:$0xff]
          %vm851 = vcmask 261120
          %852 = vst.msk [vmem:[#allocation2] sm:$0xff] %vm851, %v847
          %853 = vst.msk [vmem:[#allocation2 + $0x8] sm:$0xff] %vm851, %v848
          %854 = vst.msk [vmem:[#allocation2 + $0x10] sm:$0xff] %vm851, %v849
          %855 = vst.msk [vmem:[#allocation2 + $0x18] sm:$0xff] %vm851, %v850
        $region112: #{forward.1} parent=107 // pred_fallthru
          _
        %v856 = vld [vmem:[#allocation2] sm:$0xff]
        %v857 = vld [vmem:[#allocation2 + $0x8] sm:$0xff]
        %v858 = vld [vmem:[#allocation2 + $0x10] sm:$0xff]
        %v859 = vld [vmem:[#allocation2 + $0x18] sm:$0xff]
        %v860 = vld [vmem:[%s801] sm:$0x1]
        %v861 = vld [vmem:[%s804] sm:$0x1]
        %vm862 = vcmask 261120
        %v863 = vsel %vm862, %v856, 0.0
        %864 = vadd.xlane.f32.xlu0 %v863
        %v865 = vpop.xlane.xlu0 %864
        %v866 = vsel %vm862, %v857, 0.0
        %867 = vadd.xlane.f32.xlu0 %v866
        %v868 = vpop.xlane.xlu0 %867
        %v869 = vsel %vm862, %v858, 0.0
        %870 = vadd.xlane.f32.xlu0 %v869
        %v871 = vpop.xlane.xlu0 %870
        %v872 = vsel %vm862, %v859, 0.0
        %873 = vadd.xlane.f32.xlu0 %v872
        %v874 = vpop.xlane.xlu0 %873
        %v875 = vrcp.pop 32.0
        %v876 = vmul.f32 %v865, %v875
        %v877 = vmul.f32 %v868, %v875
        %v878 = vmul.f32 %v871, %v875
        %v879 = vmul.f32 %v874, %v875
        %v880 = vsub.f32 %v856, %v876
        %v881 = vsub.f32 %v857, %v877
        %v882 = vsub.f32 %v858, %v878
        %v883 = vsub.f32 %v859, %v879
        %v884 = vmul.f32 %v880, %v880
        %v885 = vmul.f32 %v881, %v881
        %v886 = vmul.f32 %v882, %v882
        %v887 = vmul.f32 %v883, %v883
        %v888 = vsel %vm862, %v884, 0.0
        %889 = vadd.xlane.f32.xlu0 %v888
        %v890 = vpop.xlane.xlu0 %889
        %v891 = vsel %vm862, %v885, 0.0
        %892 = vadd.xlane.f32.xlu0 %v891
        %v893 = vpop.xlane.xlu0 %892
        %v894 = vsel %vm862, %v886, 0.0
        %895 = vadd.xlane.f32.xlu0 %v894
        %v896 = vpop.xlane.xlu0 %895
        %v897 = vsel %vm862, %v887, 0.0
        %898 = vadd.xlane.f32.xlu0 %v897
        %v899 = vpop.xlane.xlu0 %898
        %v900 = vmul.f32 %v890, %v875
        %v901 = vmul.f32 %v893, %v875
        %v902 = vmul.f32 %v896, %v875
        %v903 = vmul.f32 %v899, %v875
        %v904 = vadd.f32 %v900, 1e-05
        %v905 = vadd.f32 %v901, 1e-05
        %v906 = vadd.f32 %v902, 1e-05
        %v907 = vadd.f32 %v903, 1e-05
        %v908 = vrsqrt.pop %v904
        %v909 = vrsqrt.pop %v905
        %v910 = vrsqrt.pop %v906
        %v911 = vrsqrt.pop %v907
        %v912 = vmul.f32 %v880, %v908
        %v913 = vmul.f32 %v881, %v909
        %v914 = vmul.f32 %v882, %v910
        %v915 = vmul.f32 %v883, %v911
        %v917 = vlaneseq
        %v918 = vshrl.u32 %v917, 7
        %v919 = vsub.s32 0, %v918
        %v920 = vrot.slane %v860, %v919
        %v922 = vmul.f32 %v912, %v920
        %v923 = vmul.f32 %v913, %v920
        %v924 = vmul.f32 %v914, %v920
        %v925 = vmul.f32 %v915, %v920
        %v927 = vlaneseq
        %v928 = vshrl.u32 %v927, 7
        %v929 = vsub.s32 0, %v928
        %v930 = vrot.slane %v861, %v929
        %v932 = vadd.f32 %v922, %v930
        %v933 = vadd.f32 %v923, %v930
        %v934 = vadd.f32 %v924, %v930
        %v935 = vadd.f32 %v925, %v930
        %v936 = vld [vmem:[%s809] sm:$0xff]
        %v937 = vld [vmem:[%s809 + $0x8] sm:$0xff]
        %v938 = vld [vmem:[%s809 + $0x10] sm:$0xff]
        %v939 = vld [vmem:[%s809 + $0x18] sm:$0xff]
        %v940 = vld [vmem:[%s812] sm:$0x1]
        %v942 = vlaneseq
        %v943 = vshrl.u32 %v942, 7
        %v944 = vsub.s32 0, %v943
        %v945 = vrot.slane %v940, %v944
        %v948 = vsel %vm862, %v932, 0
        %v951 = vsel %vm862, %v933, 0
        %v954 = vsel %vm862, %v934, 0
        %v957 = vsel %vm862, %v935, 0
        %959 = vmatprep.subr.mxu0 0.0
        %960 = vmatpush1.msra.mxu0 %v936
        %961 = vmatprep.subr.mxu0 0.0
        %962 = vmatpush1.msra.mxu0 %v937
        %963 = vmatprep.subr.mxu0 0.0
        %964 = vmatpush1.msra.mxu0 %v938
        %965 = vmatprep.subr.mxu0 0.0
        %966 = vmatpush1.msra.mxu0 %v939
        %967 = vmatprep.subr.mxu0 0.0
        %968 = vmatpush1.msra.mxu0 0.0
        %969 = vmatprep.subr.mxu0 0.0
        %970 = vmatpush1.msra.mxu0 0.0
        %971 = vmatprep.subr.mxu0 0.0
        %972 = vmatpush1.msra.mxu0 0.0
        %973 = vmatprep.subr.mxu0 0.0
        %974 = vmatpush1.msra.mxu0 0.0
        %975 = vmatprep.subr.mxu0 0.0
        %976 = vmatpush1.msra.mxu0 0.0
        %977 = vmatprep.subr.mxu0 0.0
        %978 = vmatpush1.msra.mxu0 0.0
        %979 = vmatprep.subr.mxu0 0.0
        %980 = vmatpush1.msra.mxu0 0.0
        %981 = vmatprep.subr.mxu0 0.0
        %982 = vmatpush1.msra.mxu0 0.0
        %983 = vmatprep.subr.mxu0 0.0
        %984 = vmatpush1.msra.mxu0 0.0
        %985 = vmatprep.subr.mxu0 0.0
        %986 = vmatpush1.msra.mxu0 0.0
        %987 = vmatprep.subr.mxu0 0.0
        %988 = vmatpush1.msra.mxu0 0.0
        %989 = vmatprep.subr.mxu0 0.0
        %990 = vmatpush1.msra.mxu0 0.0
        %991 = vmatprep.subr.mxu0 0.0
        %992 = vmatpush1.msra.mxu0 0.0
        %993 = vmatprep.subr.mxu0 0.0
        %994 = vmatpush1.msra.mxu0 0.0
        %995 = vmatprep.subr.mxu0 0.0
        %996 = vmatpush1.msra.mxu0 0.0
        %997 = vmatprep.subr.mxu0 0.0
        %998 = vmatpush1.msra.mxu0 0.0
        %999 = vmatprep.subr.mxu0 0.0
        %1000 = vmatpush1.msra.mxu0 0.0
        %1001 = vmatprep.subr.mxu0 0.0
        %1002 = vmatpush1.msra.mxu0 0.0
        %1003 = vmatprep.subr.mxu0 0.0
        %1004 = vmatpush1.msra.mxu0 0.0
        %1005 = vmatprep.subr.mxu0 0.0
        %1006 = vmatpush1.msra.mxu0 0.0
        %1007 = vmatprep.subr.mxu0 0.0
        %1008 = vmatpush1.msra.mxu0 0.0
        %1009 = vmatprep.subr.mxu0 0.0
        %1010 = vmatpush1.msra.mxu0 0.0
        %1011 = vmatprep.subr.mxu0 0.0
        %1012 = vmatpush1.msra.mxu0 0.0
        %1013 = vmatprep.subr.mxu0 0.0
        %1014 = vmatpush1.msra.mxu0 0.0
        %1015 = vmatprep.subr.mxu0 0.0
        %1016 = vmatpush1.msra.mxu0 0.0
        %1017 = vmatprep.subr.mxu0 0.0
        %1018 = vmatpush1.msra.mxu0 0.0
        %1019 = vmatprep.subr.mxu0 0.0
        %1020 = vmatpush1.msra.mxu0 0.0
        %1021 = vmatprep.subr.mxu0 0.0
        %1022 = vmatpush1.msra.mxu0 0.0
        %1023 = vmatprep.mubr.f32.mxu0 0.0
        %1024 = vmatmul.mubr.f32.gmra.mrb[0].mxu0 %v948
        %v1025 = vpop.f32.mrb[0].mxu0
        %v1026 = vadd.f32 %v945, %v1025
        %v1027 = vpop.f32.mrb[0].mxu0
        %1028 = vmatprep.mubr.f32.mxu0 0.0
        %1029 = vmatmul.mubr.f32.gmra.mrb[0].mxu0 %v951
        %v1030 = vpop.f32.mrb[0].mxu0
        %v1031 = vadd.f32 %v945, %v1030
        %v1032 = vpop.f32.mrb[0].mxu0
        %1033 = vmatprep.mubr.f32.mxu0 0.0
        %1034 = vmatmul.mubr.f32.gmra.mrb[0].mxu0 %v954
        %v1035 = vpop.f32.mrb[0].mxu0
        %v1036 = vadd.f32 %v945, %v1035
        %v1037 = vpop.f32.mrb[0].mxu0
        %1038 = vmatprep.mubr.f32.mxu0 0.0
        %1039 = vmatmul.mubr.f32.gmra.mrb[0].mxu0 %v957
        %v1040 = vpop.f32.mrb[0].mxu0
        %v1041 = vadd.f32 %v945, %v1040
        %v1042 = vpop.f32.mrb[0].mxu0
        %1043 = vdwg.mxu0
        %v1044 = vlaneseq
        %v1045 = vshrl.u32 %v1044, 7
        %v1046 = vlaneseq
        %v1047 = vand.u32 %v1046, 127
        %vm1048 = vcmp.le.s32.totalorder %v1047, %v1045
        %v1049 = vmul.f32 %v1026, 0.25
        %v1050 = vmul.f32 %v1031, 0.25
        %v1051 = vmul.f32 %v1036, 0.25
        %v1052 = vmul.f32 %v1041, 0.25
        %1054 = vrot.lane.b32.xlu0 %v1026, 96
        %v1055 = vpop.permute.xlu0 %1054
        %vm1056 = vcmask 130048
        %v1058 = vsel %vm1056, %v1049, 0
        %v1060 = vsel %vm1056, %v1055, 0
        %1062 = vmatprep.subr.mxu0 0.0
        %1063 = vmatpush1.xpose.msra.mxu0 %v1060
        %1064 = vmatprep.subr.mxu0 0.0
        %1065 = vmatpush1.xpose.msra.mxu0 0.0
        %1066 = vmatprep.subr.mxu0 0.0
        %1067 = vmatpush1.xpose.msra.mxu0 0.0
        %1068 = vmatprep.subr.mxu0 0.0
        %1069 = vmatpush1.xpose.msra.mxu0 0.0
        %1070 = vmatprep.subr.mxu0 0.0
        %1071 = vmatpush1.xpose.msra.mxu0 0.0
        %1072 = vmatprep.subr.mxu0 0.0
        %1073 = vmatpush1.xpose.msra.mxu0 0.0
        %1074 = vmatprep.subr.mxu0 0.0
        %1075 = vmatpush1.xpose.msra.mxu0 0.0
        %1076 = vmatprep.subr.mxu0 0.0
        %1077 = vmatpush1.xpose.msra.mxu0 0.0
        %1078 = vmatprep.subr.mxu0 0.0
        %1079 = vmatpush1.xpose.msra.mxu0 0.0
        %1080 = vmatprep.subr.mxu0 0.0
        %1081 = vmatpush1.xpose.msra.mxu0 0.0
        %1082 = vmatprep.subr.mxu0 0.0
        %1083 = vmatpush1.xpose.msra.mxu0 0.0
        %1084 = vmatprep.subr.mxu0 0.0
        %1085 = vmatpush1.xpose.msra.mxu0 0.0
        %1086 = vmatprep.subr.mxu0 0.0
        %1087 = vmatpush1.xpose.msra.mxu0 0.0
        %1088 = vmatprep.subr.mxu0 0.0
        %1089 = vmatpush1.xpose.msra.mxu0 0.0
        %1090 = vmatprep.subr.mxu0 0.0
        %1091 = vmatpush1.xpose.msra.mxu0 0.0
        %1092 = vmatprep.subr.mxu0 0.0
        %1093 = vmatpush1.xpose.msra.mxu0 0.0
        %1094 = vmatprep.subr.mxu0 0.0
        %1095 = vmatpush1.xpose.msra.mxu0 0.0
        %1096 = vmatprep.subr.mxu0 0.0
        %1097 = vmatpush1.xpose.msra.mxu0 0.0
        %1098 = vmatprep.subr.mxu0 0.0
        %1099 = vmatpush1.xpose.msra.mxu0 0.0
        %1100 = vmatprep.subr.mxu0 0.0
        %1101 = vmatpush1.xpose.msra.mxu0 0.0
        %1102 = vmatprep.subr.mxu0 0.0
        %1103 = vmatpush1.xpose.msra.mxu0 0.0
        %1104 = vmatprep.subr.mxu0 0.0
        %1105 = vmatpush1.xpose.msra.mxu0 0.0
        %1106 = vmatprep.subr.mxu0 0.0
        %1107 = vmatpush1.xpose.msra.mxu0 0.0
        %1108 = vmatprep.subr.mxu0 0.0
        %1109 = vmatpush1.xpose.msra.mxu0 0.0
        %1110 = vmatprep.subr.mxu0 0.0
        %1111 = vmatpush1.xpose.msra.mxu0 0.0
        %1112 = vmatprep.subr.mxu0 0.0
        %1113 = vmatpush1.xpose.msra.mxu0 0.0
        %1114 = vmatprep.subr.mxu0 0.0
        %1115 = vmatpush1.xpose.msra.mxu0 0.0
        %1116 = vmatprep.subr.mxu0 0.0
        %1117 = vmatpush1.xpose.msra.mxu0 0.0
        %1118 = vmatprep.subr.mxu0 0.0
        %1119 = vmatpush1.xpose.msra.mxu0 0.0
        %1120 = vmatprep.subr.mxu0 0.0
        %1121 = vmatpush1.xpose.msra.mxu0 0.0
        %1122 = vmatprep.subr.mxu0 0.0
        %1123 = vmatpush1.xpose.msra.mxu0 0.0
        %1124 = vmatprep.subr.mxu0 0.0
        %1125 = vmatpush1.xpose.msra.mxu0 0.0
        %1126 = vmatprep.mubr.f32.mxu0 0.0
        %1127 = vmatmul.mubr.f32.gmra.mrb[0].mxu0 %v1058
        %v1128 = vpop.f32.mrb[0].mxu0
        %v1129 = vadd.f32 0.0, %v1128
        %v1130 = vpop.f32.mrb[0].mxu0
        %1131 = vdwg.mxu0
        %1133 = vrot.lane.b32.xlu0 %v1031, 96
        %v1134 = vpop.permute.xlu0 %1133
        %v1136 = vsel %vm1056, %v1050, 0
        %v1138 = vsel %vm1056, %v1134, 0
        %1140 = vmatprep.subr.mxu0 0.0
        %1141 = vmatpush1.xpose.msra.mxu0 %v1138
        %1142 = vmatprep.subr.mxu0 0.0
        %1143 = vmatpush1.xpose.msra.mxu0 0.0
        %1144 = vmatprep.subr.mxu0 0.0
        %1145 = vmatpush1.xpose.msra.mxu0 0.0
        %1146 = vmatprep.subr.mxu0 0.0
        %1147 = vmatpush1.xpose.msra.mxu0 0.0
        %1148 = vmatprep.subr.mxu0 0.0
        %1149 = vmatpush1.xpose.msra.mxu0 0.0
        %1150 = vmatprep.subr.mxu0 0.0
        %1151 = vmatpush1.xpose.msra.mxu0 0.0
        %1152 = vmatprep.subr.mxu0 0.0
        %1153 = vmatpush1.xpose.msra.mxu0 0.0
        %1154 = vmatprep.subr.mxu0 0.0
        %1155 = vmatpush1.xpose.msra.mxu0 0.0
        %1156 = vmatprep.subr.mxu0 0.0
        %1157 = vmatpush1.xpose.msra.mxu0 0.0
        %1158 = vmatprep.subr.mxu0 0.0
        %1159 = vmatpush1.xpose.msra.mxu0 0.0
        %1160 = vmatprep.subr.mxu0 0.0
        %1161 = vmatpush1.xpose.msra.mxu0 0.0
        %1162 = vmatprep.subr.mxu0 0.0
        %1163 = vmatpush1.xpose.msra.mxu0 0.0
        %1164 = vmatprep.subr.mxu0 0.0
        %1165 = vmatpush1.xpose.msra.mxu0 0.0
        %1166 = vmatprep.subr.mxu0 0.0
        %1167 = vmatpush1.xpose.msra.mxu0 0.0
        %1168 = vmatprep.subr.mxu0 0.0
        %1169 = vmatpush1.xpose.msra.mxu0 0.0
        %1170 = vmatprep.subr.mxu0 0.0
        %1171 = vmatpush1.xpose.msra.mxu0 0.0
        %1172 = vmatprep.subr.mxu0 0.0
        %1173 = vmatpush1.xpose.msra.mxu0 0.0
        %1174 = vmatprep.subr.mxu0 0.0
        %1175 = vmatpush1.xpose.msra.mxu0 0.0
        %1176 = vmatprep.subr.mxu0 0.0
        %1177 = vmatpush1.xpose.msra.mxu0 0.0
        %1178 = vmatprep.subr.mxu0 0.0
        %1179 = vmatpush1.xpose.msra.mxu0 0.0
        %1180 = vmatprep.subr.mxu0 0.0
        %1181 = vmatpush1.xpose.msra.mxu0 0.0
        %1182 = vmatprep.subr.mxu0 0.0
        %1183 = vmatpush1.xpose.msra.mxu0 0.0
        %1184 = vmatprep.subr.mxu0 0.0
        %1185 = vmatpush1.xpose.msra.mxu0 0.0
        %1186 = vmatprep.subr.mxu0 0.0
        %1187 = vmatpush1.xpose.msra.mxu0 0.0
        %1188 = vmatprep.subr.mxu0 0.0
        %1189 = vmatpush1.xpose.msra.mxu0 0.0
        %1190 = vmatprep.subr.mxu0 0.0
        %1191 = vmatpush1.xpose.msra.mxu0 0.0
        %1192 = vmatprep.subr.mxu0 0.0
        %1193 = vmatpush1.xpose.msra.mxu0 0.0
        %1194 = vmatprep.subr.mxu0 0.0
        %1195 = vmatpush1.xpose.msra.mxu0 0.0
        %1196 = vmatprep.subr.mxu0 0.0
        %1197 = vmatpush1.xpose.msra.mxu0 0.0
        %1198 = vmatprep.subr.mxu0 0.0
        %1199 = vmatpush1.xpose.msra.mxu0 0.0
        %1200 = vmatprep.subr.mxu0 0.0
        %1201 = vmatpush1.xpose.msra.mxu0 0.0
        %1202 = vmatprep.subr.mxu0 0.0
        %1203 = vmatpush1.xpose.msra.mxu0 0.0
        %1204 = vmatprep.mubr.f32.mxu0 0.0
        %1205 = vmatmul.mubr.f32.gmra.mrb[0].mxu0 %v1136
        %v1206 = vpop.f32.mrb[0].mxu0
        %v1207 = vadd.f32 0.0, %v1206
        %v1208 = vpop.f32.mrb[0].mxu0
        %1209 = vdwg.mxu0
        %1211 = vrot.lane.b32.xlu0 %v1036, 96
        %v1212 = vpop.permute.xlu0 %1211
        %v1214 = vsel %vm1056, %v1051, 0
        %v1216 = vsel %vm1056, %v1212, 0
        %1218 = vmatprep.subr.mxu0 0.0
        %1219 = vmatpush1.xpose.msra.mxu0 %v1216
        %1220 = vmatprep.subr.mxu0 0.0
        %1221 = vmatpush1.xpose.msra.mxu0 0.0
        %1222 = vmatprep.subr.mxu0 0.0
        %1223 = vmatpush1.xpose.msra.mxu0 0.0
        %1224 = vmatprep.subr.mxu0 0.0
        %1225 = vmatpush1.xpose.msra.mxu0 0.0
        %1226 = vmatprep.subr.mxu0 0.0
        %1227 = vmatpush1.xpose.msra.mxu0 0.0
        %1228 = vmatprep.subr.mxu0 0.0
        %1229 = vmatpush1.xpose.msra.mxu0 0.0
        %1230 = vmatprep.subr.mxu0 0.0
        %1231 = vmatpush1.xpose.msra.mxu0 0.0
        %1232 = vmatprep.subr.mxu0 0.0
        %1233 = vmatpush1.xpose.msra.mxu0 0.0
        %1234 = vmatprep.subr.mxu0 0.0
        %1235 = vmatpush1.xpose.msra.mxu0 0.0
        %1236 = vmatprep.subr.mxu0 0.0
        %1237 = vmatpush1.xpose.msra.mxu0 0.0
        %1238 = vmatprep.subr.mxu0 0.0
        %1239 = vmatpush1.xpose.msra.mxu0 0.0
        %1240 = vmatprep.subr.mxu0 0.0
        %1241 = vmatpush1.xpose.msra.mxu0 0.0
        %1242 = vmatprep.subr.mxu0 0.0
        %1243 = vmatpush1.xpose.msra.mxu0 0.0
        %1244 = vmatprep.subr.mxu0 0.0
        %1245 = vmatpush1.xpose.msra.mxu0 0.0
        %1246 = vmatprep.subr.mxu0 0.0
        %1247 = vmatpush1.xpose.msra.mxu0 0.0
        %1248 = vmatprep.subr.mxu0 0.0
        %1249 = vmatpush1.xpose.msra.mxu0 0.0
        %1250 = vmatprep.subr.mxu0 0.0
        %1251 = vmatpush1.xpose.msra.mxu0 0.0
        %1252 = vmatprep.subr.mxu0 0.0
        %1253 = vmatpush1.xpose.msra.mxu0 0.0
        %1254 = vmatprep.subr.mxu0 0.0
        %1255 = vmatpush1.xpose.msra.mxu0 0.0
        %1256 = vmatprep.subr.mxu0 0.0
        %1257 = vmatpush1.xpose.msra.mxu0 0.0
        %1258 = vmatprep.subr.mxu0 0.0
        %1259 = vmatpush1.xpose.msra.mxu0 0.0
        %1260 = vmatprep.subr.mxu0 0.0
        %1261 = vmatpush1.xpose.msra.mxu0 0.0
        %1262 = vmatprep.subr.mxu0 0.0
        %1263 = vmatpush1.xpose.msra.mxu0 0.0
        %1264 = vmatprep.subr.mxu0 0.0
        %1265 = vmatpush1.xpose.msra.mxu0 0.0
        %1266 = vmatprep.subr.mxu0 0.0
        %1267 = vmatpush1.xpose.msra.mxu0 0.0
        %1268 = vmatprep.subr.mxu0 0.0
        %1269 = vmatpush1.xpose.msra.mxu0 0.0
        %1270 = vmatprep.subr.mxu0 0.0
        %1271 = vmatpush1.xpose.msra.mxu0 0.0
        %1272 = vmatprep.subr.mxu0 0.0
        %1273 = vmatpush1.xpose.msra.mxu0 0.0
        %1274 = vmatprep.subr.mxu0 0.0
        %1275 = vmatpush1.xpose.msra.mxu0 0.0
        %1276 = vmatprep.subr.mxu0 0.0
        %1277 = vmatpush1.xpose.msra.mxu0 0.0
        %1278 = vmatprep.subr.mxu0 0.0
        %1279 = vmatpush1.xpose.msra.mxu0 0.0
        %1280 = vmatprep.subr.mxu0 0.0
        %1281 = vmatpush1.xpose.msra.mxu0 0.0
        %1282 = vmatprep.mubr.f32.mxu0 0.0
        %1283 = vmatmul.mubr.f32.gmra.mrb[0].mxu0 %v1214
        %v1284 = vpop.f32.mrb[0].mxu0
        %v1285 = vadd.f32 0.0, %v1284
        %v1286 = vpop.f32.mrb[0].mxu0
        %1287 = vdwg.mxu0
        %1289 = vrot.lane.b32.xlu0 %v1041, 96
        %v1290 = vpop.permute.xlu0 %1289
        %v1292 = vsel %vm1056, %v1052, 0
        %v1294 = vsel %vm1056, %v1290, 0
        %1296 = vmatprep.subr.mxu0 0.0
        %1297 = vmatpush1.xpose.msra.mxu0 %v1294
        %1298 = vmatprep.subr.mxu0 0.0
        %1299 = vmatpush1.xpose.msra.mxu0 0.0
        %1300 = vmatprep.subr.mxu0 0.0
        %1301 = vmatpush1.xpose.msra.mxu0 0.0
        %1302 = vmatprep.subr.mxu0 0.0
        %1303 = vmatpush1.xpose.msra.mxu0 0.0
        %1304 = vmatprep.subr.mxu0 0.0
        %1305 = vmatpush1.xpose.msra.mxu0 0.0
        %1306 = vmatprep.subr.mxu0 0.0
        %1307 = vmatpush1.xpose.msra.mxu0 0.0
        %1308 = vmatprep.subr.mxu0 0.0
        %1309 = vmatpush1.xpose.msra.mxu0 0.0
        %1310 = vmatprep.subr.mxu0 0.0
        %1311 = vmatpush1.xpose.msra.mxu0 0.0
        %1312 = vmatprep.subr.mxu0 0.0
        %1313 = vmatpush1.xpose.msra.mxu0 0.0
        %1314 = vmatprep.subr.mxu0 0.0
        %1315 = vmatpush1.xpose.msra.mxu0 0.0
        %1316 = vmatprep.subr.mxu0 0.0
        %1317 = vmatpush1.xpose.msra.mxu0 0.0
        %1318 = vmatprep.subr.mxu0 0.0
        %1319 = vmatpush1.xpose.msra.mxu0 0.0
        %1320 = vmatprep.subr.mxu0 0.0
        %1321 = vmatpush1.xpose.msra.mxu0 0.0
        %1322 = vmatprep.subr.mxu0 0.0
        %1323 = vmatpush1.xpose.msra.mxu0 0.0
        %1324 = vmatprep.subr.mxu0 0.0
        %1325 = vmatpush1.xpose.msra.mxu0 0.0
        %1326 = vmatprep.subr.mxu0 0.0
        %1327 = vmatpush1.xpose.msra.mxu0 0.0
        %1328 = vmatprep.subr.mxu0 0.0
        %1329 = vmatpush1.xpose.msra.mxu0 0.0
        %1330 = vmatprep.subr.mxu0 0.0
        %1331 = vmatpush1.xpose.msra.mxu0 0.0
        %1332 = vmatprep.subr.mxu0 0.0
        %1333 = vmatpush1.xpose.msra.mxu0 0.0
        %1334 = vmatprep.subr.mxu0 0.0
        %1335 = vmatpush1.xpose.msra.mxu0 0.0
        %1336 = vmatprep.subr.mxu0 0.0
        %1337 = vmatpush1.xpose.msra.mxu0 0.0
        %1338 = vmatprep.subr.mxu0 0.0
        %1339 = vmatpush1.xpose.msra.mxu0 0.0
        %1340 = vmatprep.subr.mxu0 0.0
        %1341 = vmatpush1.xpose.msra.mxu0 0.0
        %1342 = vmatprep.subr.mxu0 0.0
        %1343 = vmatpush1.xpose.msra.mxu0 0.0
        %1344 = vmatprep.subr.mxu0 0.0
        %1345 = vmatpush1.xpose.msra.mxu0 0.0
        %1346 = vmatprep.subr.mxu0 0.0
        %1347 = vmatpush1.xpose.msra.mxu0 0.0
        %1348 = vmatprep.subr.mxu0 0.0
        %1349 = vmatpush1.xpose.msra.mxu0 0.0
        %1350 = vmatprep.subr.mxu0 0.0
        %1351 = vmatpush1.xpose.msra.mxu0 0.0
        %1352 = vmatprep.subr.mxu0 0.0
        %1353 = vmatpush1.xpose.msra.mxu0 0.0
        %1354 = vmatprep.subr.mxu0 0.0
        %1355 = vmatpush1.xpose.msra.mxu0 0.0
        %1356 = vmatprep.subr.mxu0 0.0
        %1357 = vmatpush1.xpose.msra.mxu0 0.0
        %1358 = vmatprep.subr.mxu0 0.0
        %1359 = vmatpush1.xpose.msra.mxu0 0.0
        %1360 = vmatprep.mubr.f32.mxu0 0.0
        %1361 = vmatmul.mubr.f32.gmra.mrb[0].mxu0 %v1292
        %v1362 = vpop.f32.mrb[0].mxu0
        %v1363 = vadd.f32 0.0, %v1362
        %v1364 = vpop.f32.mrb[0].mxu0
        %1365 = vdwg.mxu0
        %v1366 = vsel %vm1048, %v1129, -1e+30
        %v1367 = vsel %vm1048, %v1207, -1e+30
        %v1368 = vsel %vm1048, %v1285, -1e+30
        %v1369 = vsel %vm1048, %v1363, -1e+30
        %vm1370 = vcmask 64512
        %v1371 = vsel %vm1370, %v1366, -inf
        %1372 = vmax.xlane.f32.xlu0 %v1371
        %v1373 = vpop.xlane.xlu0 %1372
        %v1374 = vsel %vm1370, %v1367, -inf
        %1375 = vmax.xlane.f32.xlu0 %v1374
        %v1376 = vpop.xlane.xlu0 %1375
        %v1377 = vsel %vm1370, %v1368, -inf
        %1378 = vmax.xlane.f32.xlu0 %v1377
        %v1379 = vpop.xlane.xlu0 %1378
        %v1380 = vsel %vm1370, %v1369, -inf
        %1381 = vmax.xlane.f32.xlu0 %v1380
        %v1382 = vpop.xlane.xlu0 %1381
        %v1383 = vsub.f32 %v1366, %v1373
        %v1384 = vsub.f32 %v1367, %v1376
        %v1385 = vsub.f32 %v1368, %v1379
        %v1386 = vsub.f32 %v1369, %v1382
        %v1387 = vmul.f32 %v1383, 1.442695
        %v1388 = vpow.pop %v1387
        %v1389 = vmul.f32 %v1384, 1.442695
        %v1390 = vpow.pop %v1389
        %v1391 = vmul.f32 %v1385, 1.442695
        %v1392 = vpow.pop %v1391
        %v1393 = vmul.f32 %v1386, 1.442695
        %v1394 = vpow.pop %v1393
        %v1395 = vsel %vm1370, %v1388, 0.0
        %1396 = vadd.xlane.f32.xlu0 %v1395
        %v1397 = vpop.xlane.xlu0 %1396
        %v1398 = vsel %vm1370, %v1390, 0.0
        %1399 = vadd.xlane.f32.xlu0 %v1398
        %v1400 = vpop.xlane.xlu0 %1399
        %v1401 = vsel %vm1370, %v1392, 0.0
        %1402 = vadd.xlane.f32.xlu0 %v1401
        %v1403 = vpop.xlane.xlu0 %1402
        %v1404 = vsel %vm1370, %v1394, 0.0
        %1405 = vadd.xlane.f32.xlu0 %v1404
        %v1406 = vpop.xlane.xlu0 %1405
        %v1407 = vrcp.pop %v1397
        %v1408 = vrcp.pop %v1400
        %v1409 = vrcp.pop %v1403
        %v1410 = vrcp.pop %v1406
        %v1411 = vmul.f32 %v1388, %v1407
        %v1412 = vmul.f32 %v1390, %v1408
        %v1413 = vmul.f32 %v1392, %v1409
        %v1414 = vmul.f32 %v1394, %v1410
        %1415 = vrot.lane.b32.xlu0 %v1026, 64
        %v1416 = vpop.permute.xlu0 %1415
        %v1419 = vsel %vm1370, %v1411, 0
        %1421 = vmatprep.subr.mxu0 0.0
        %1422 = vmatpush1.msra.mxu0 %v1416
        %1423 = vmatprep.subr.mxu0 0.0
        %1424 = vmatpush1.msra.mxu0 0.0
        %1425 = vmatprep.subr.mxu0 0.0
        %1426 = vmatpush1.msra.mxu0 0.0
        %1427 = vmatprep.subr.mxu0 0.0
        %1428 = vmatpush1.msra.mxu0 0.0
        %1429 = vmatprep.subr.mxu0 0.0
        %1430 = vmatpush1.msra.mxu0 0.0
        %1431 = vmatprep.subr.mxu0 0.0
        %1432 = vmatpush1.msra.mxu0 0.0
        %1433 = vmatprep.subr.mxu0 0.0
        %1434 = vmatpush1.msra.mxu0 0.0
        %1435 = vmatprep.subr.mxu0 0.0
        %1436 = vmatpush1.msra.mxu0 0.0
        %1437 = vmatprep.subr.mxu0 0.0
        %1438 = vmatpush1.msra.mxu0 0.0
        %1439 = vmatprep.subr.mxu0 0.0
        %1440 = vmatpush1.msra.mxu0 0.0
        %1441 = vmatprep.subr.mxu0 0.0
        %1442 = vmatpush1.msra.mxu0 0.0
        %1443 = vmatprep.subr.mxu0 0.0
        %1444 = vmatpush1.msra.mxu0 0.0
        %1445 = vmatprep.subr.mxu0 0.0
        %1446 = vmatpush1.msra.mxu0 0.0
        %1447 = vmatprep.subr.mxu0 0.0
        %1448 = vmatpush1.msra.mxu0 0.0
        %1449 = vmatprep.subr.mxu0 0.0
        %1450 = vmatpush1.msra.mxu0 0.0
        %1451 = vmatprep.subr.mxu0 0.0
        %1452 = vmatpush1.msra.mxu0 0.0
        %1453 = vmatprep.subr.mxu0 0.0
        %1454 = vmatpush1.msra.mxu0 0.0
        %1455 = vmatprep.subr.mxu0 0.0
        %1456 = vmatpush1.msra.mxu0 0.0
        %1457 = vmatprep.subr.mxu0 0.0
        %1458 = vmatpush1.msra.mxu0 0.0
        %1459 = vmatprep.subr.mxu0 0.0
        %1460 = vmatpush1.msra.mxu0 0.0
        %1461 = vmatprep.subr.mxu0 0.0
        %1462 = vmatpush1.msra.mxu0 0.0
        %1463 = vmatprep.subr.mxu0 0.0
        %1464 = vmatpush1.msra.mxu0 0.0
        %1465 = vmatprep.subr.mxu0 0.0
        %1466 = vmatpush1.msra.mxu0 0.0
        %1467 = vmatprep.subr.mxu0 0.0
        %1468 = vmatpush1.msra.mxu0 0.0
        %1469 = vmatprep.subr.mxu0 0.0
        %1470 = vmatpush1.msra.mxu0 0.0
        %1471 = vmatprep.subr.mxu0 0.0
        %1472 = vmatpush1.msra.mxu0 0.0
        %1473 = vmatprep.subr.mxu0 0.0
        %1474 = vmatpush1.msra.mxu0 0.0
        %1475 = vmatprep.subr.mxu0 0.0
        %1476 = vmatpush1.msra.mxu0 0.0
        %1477 = vmatprep.subr.mxu0 0.0
        %1478 = vmatpush1.msra.mxu0 0.0
        %1479 = vmatprep.subr.mxu0 0.0
        %1480 = vmatpush1.msra.mxu0 0.0
        %1481 = vmatprep.subr.mxu0 0.0
        %1482 = vmatpush1.msra.mxu0 0.0
        %1483 = vmatprep.subr.mxu0 0.0
        %1484 = vmatpush1.msra.mxu0 0.0
        %1485 = vmatprep.mubr.f32.mxu0 0.0
        %1486 = vmatmul.mubr.f32.gmra.mrb[0].mxu0 %v1419
        %v1487 = vpop.f32.mrb[0].mxu0
        %v1488 = vadd.f32 0.0, %v1487
        %v1489 = vpop.f32.mrb[0].mxu0
        %1490 = vdwg.mxu0
        %1491 = vrot.lane.b32.xlu0 %v1031, 64
        %v1492 = vpop.permute.xlu0 %1491
        %v1495 = vsel %vm1370, %v1412, 0
        %1497 = vmatprep.subr.mxu0 0.0
        %1498 = vmatpush1.msra.mxu0 %v1492
        %1499 = vmatprep.subr.mxu0 0.0
        %1500 = vmatpush1.msra.mxu0 0.0
        %1501 = vmatprep.subr.mxu0 0.0
        %1502 = vmatpush1.msra.mxu0 0.0
        %1503 = vmatprep.subr.mxu0 0.0
        %1504 = vmatpush1.msra.mxu0 0.0
        %1505 = vmatprep.subr.mxu0 0.0
        %1506 = vmatpush1.msra.mxu0 0.0
        %1507 = vmatprep.subr.mxu0 0.0
        %1508 = vmatpush1.msra.mxu0 0.0
        %1509 = vmatprep.subr.mxu0 0.0
        %1510 = vmatpush1.msra.mxu0 0.0
        %1511 = vmatprep.subr.mxu0 0.0
        %1512 = vmatpush1.msra.mxu0 0.0
        %1513 = vmatprep.subr.mxu0 0.0
        %1514 = vmatpush1.msra.mxu0 0.0
        %1515 = vmatprep.subr.mxu0 0.0
        %1516 = vmatpush1.msra.mxu0 0.0
        %1517 = vmatprep.subr.mxu0 0.0
        %1518 = vmatpush1.msra.mxu0 0.0
        %1519 = vmatprep.subr.mxu0 0.0
        %1520 = vmatpush1.msra.mxu0 0.0
        %1521 = vmatprep.subr.mxu0 0.0
        %1522 = vmatpush1.msra.mxu0 0.0
        %1523 = vmatprep.subr.mxu0 0.0
        %1524 = vmatpush1.msra.mxu0 0.0
        %1525 = vmatprep.subr.mxu0 0.0
        %1526 = vmatpush1.msra.mxu0 0.0
        %1527 = vmatprep.subr.mxu0 0.0
        %1528 = vmatpush1.msra.mxu0 0.0
        %1529 = vmatprep.subr.mxu0 0.0
        %1530 = vmatpush1.msra.mxu0 0.0
        %1531 = vmatprep.subr.mxu0 0.0
        %1532 = vmatpush1.msra.mxu0 0.0
        %1533 = vmatprep.subr.mxu0 0.0
        %1534 = vmatpush1.msra.mxu0 0.0
        %1535 = vmatprep.subr.mxu0 0.0
        %1536 = vmatpush1.msra.mxu0 0.0
        %1537 = vmatprep.subr.mxu0 0.0
        %1538 = vmatpush1.msra.mxu0 0.0
        %1539 = vmatprep.subr.mxu0 0.0
        %1540 = vmatpush1.msra.mxu0 0.0
        %1541 = vmatprep.subr.mxu0 0.0
        %1542 = vmatpush1.msra.mxu0 0.0
        %1543 = vmatprep.subr.mxu0 0.0
        %1544 = vmatpush1.msra.mxu0 0.0
        %1545 = vmatprep.subr.mxu0 0.0
        %1546 = vmatpush1.msra.mxu0 0.0
        %1547 = vmatprep.subr.mxu0 0.0
        %1548 = vmatpush1.msra.mxu0 0.0
        %1549 = vmatprep.subr.mxu0 0.0
        %1550 = vmatpush1.msra.mxu0 0.0
        %1551 = vmatprep.subr.mxu0 0.0
        %1552 = vmatpush1.msra.mxu0 0.0
        %1553 = vmatprep.subr.mxu0 0.0
        %1554 = vmatpush1.msra.mxu0 0.0
        %1555 = vmatprep.subr.mxu0 0.0
        %1556 = vmatpush1.msra.mxu0 0.0
        %1557 = vmatprep.subr.mxu0 0.0
        %1558 = vmatpush1.msra.mxu0 0.0
        %1559 = vmatprep.subr.mxu0 0.0
        %1560 = vmatpush1.msra.mxu0 0.0
        %1561 = vmatprep.mubr.f32.mxu0 0.0
        %1562 = vmatmul.mubr.f32.gmra.mrb[0].mxu0 %v1495
        %v1563 = vpop.f32.mrb[0].mxu0
        %v1564 = vadd.f32 0.0, %v1563
        %v1565 = vpop.f32.mrb[0].mxu0
        %1566 = vdwg.mxu0
        %1567 = vrot.lane.b32.xlu0 %v1036, 64
        %v1568 = vpop.permute.xlu0 %1567
        %v1571 = vsel %vm1370, %v1413, 0
        %1573 = vmatprep.subr.mxu0 0.0
        %1574 = vmatpush1.msra.mxu0 %v1568
        %1575 = vmatprep.subr.mxu0 0.0
        %1576 = vmatpush1.msra.mxu0 0.0
        %1577 = vmatprep.subr.mxu0 0.0
        %1578 = vmatpush1.msra.mxu0 0.0
        %1579 = vmatprep.subr.mxu0 0.0
        %1580 = vmatpush1.msra.mxu0 0.0
        %1581 = vmatprep.subr.mxu0 0.0
        %1582 = vmatpush1.msra.mxu0 0.0
        %1583 = vmatprep.subr.mxu0 0.0
        %1584 = vmatpush1.msra.mxu0 0.0
        %1585 = vmatprep.subr.mxu0 0.0
        %1586 = vmatpush1.msra.mxu0 0.0
        %1587 = vmatprep.subr.mxu0 0.0
        %1588 = vmatpush1.msra.mxu0 0.0
        %1589 = vmatprep.subr.mxu0 0.0
        %1590 = vmatpush1.msra.mxu0 0.0
        %1591 = vmatprep.subr.mxu0 0.0
        %1592 = vmatpush1.msra.mxu0 0.0
        %1593 = vmatprep.subr.mxu0 0.0
        %1594 = vmatpush1.msra.mxu0 0.0
        %1595 = vmatprep.subr.mxu0 0.0
        %1596 = vmatpush1.msra.mxu0 0.0
        %1597 = vmatprep.subr.mxu0 0.0
        %1598 = vmatpush1.msra.mxu0 0.0
        %1599 = vmatprep.subr.mxu0 0.0
        %1600 = vmatpush1.msra.mxu0 0.0
        %1601 = vmatprep.subr.mxu0 0.0
        %1602 = vmatpush1.msra.mxu0 0.0
        %1603 = vmatprep.subr.mxu0 0.0
        %1604 = vmatpush1.msra.mxu0 0.0
        %1605 = vmatprep.subr.mxu0 0.0
        %1606 = vmatpush1.msra.mxu0 0.0
        %1607 = vmatprep.subr.mxu0 0.0
        %1608 = vmatpush1.msra.mxu0 0.0
        %1609 = vmatprep.subr.mxu0 0.0
        %1610 = vmatpush1.msra.mxu0 0.0
        %1611 = vmatprep.subr.mxu0 0.0
        %1612 = vmatpush1.msra.mxu0 0.0
        %1613 = vmatprep.subr.mxu0 0.0
        %1614 = vmatpush1.msra.mxu0 0.0
        %1615 = vmatprep.subr.mxu0 0.0
        %1616 = vmatpush1.msra.mxu0 0.0
        %1617 = vmatprep.subr.mxu0 0.0
        %1618 = vmatpush1.msra.mxu0 0.0
        %1619 = vmatprep.subr.mxu0 0.0
        %1620 = vmatpush1.msra.mxu0 0.0
        %1621 = vmatprep.subr.mxu0 0.0
        %1622 = vmatpush1.msra.mxu0 0.0
        %1623 = vmatprep.subr.mxu0 0.0
        %1624 = vmatpush1.msra.mxu0 0.0
        %1625 = vmatprep.subr.mxu0 0.0
        %1626 = vmatpush1.msra.mxu0 0.0
        %1627 = vmatprep.subr.mxu0 0.0
        %1628 = vmatpush1.msra.mxu0 0.0
        %1629 = vmatprep.subr.mxu0 0.0
        %1630 = vmatpush1.msra.mxu0 0.0
        %1631 = vmatprep.subr.mxu0 0.0
        %1632 = vmatpush1.msra.mxu0 0.0
        %1633 = vmatprep.subr.mxu0 0.0
        %1634 = vmatpush1.msra.mxu0 0.0
        %1635 = vmatprep.subr.mxu0 0.0
        %1636 = vmatpush1.msra.mxu0 0.0
        %1637 = vmatprep.mubr.f32.mxu0 0.0
        %1638 = vmatmul.mubr.f32.gmra.mrb[0].mxu0 %v1571
        %v1639 = vpop.f32.mrb[0].mxu0
        %v1640 = vadd.f32 0.0, %v1639
        %v1641 = vpop.f32.mrb[0].mxu0
        %1642 = vdwg.mxu0
        %1643 = vrot.lane.b32.xlu0 %v1041, 64
        %v1644 = vpop.permute.xlu0 %1643
        %v1647 = vsel %vm1370, %v1414, 0
        %1649 = vmatprep.subr.mxu0 0.0
        %1650 = vmatpush1.msra.mxu0 %v1644
        %1651 = vmatprep.subr.mxu0 0.0
        %1652 = vmatpush1.msra.mxu0 0.0
        %1653 = vmatprep.subr.mxu0 0.0
        %1654 = vmatpush1.msra.mxu0 0.0
        %1655 = vmatprep.subr.mxu0 0.0
        %1656 = vmatpush1.msra.mxu0 0.0
        %1657 = vmatprep.subr.mxu0 0.0
        %1658 = vmatpush1.msra.mxu0 0.0
        %1659 = vmatprep.subr.mxu0 0.0
        %1660 = vmatpush1.msra.mxu0 0.0
        %1661 = vmatprep.subr.mxu0 0.0
        %1662 = vmatpush1.msra.mxu0 0.0
        %1663 = vmatprep.subr.mxu0 0.0
        %1664 = vmatpush1.msra.mxu0 0.0
        %1665 = vmatprep.subr.mxu0 0.0
        %1666 = vmatpush1.msra.mxu0 0.0
        %1667 = vmatprep.subr.mxu0 0.0
        %1668 = vmatpush1.msra.mxu0 0.0
        %1669 = vmatprep.subr.mxu0 0.0
        %1670 = vmatpush1.msra.mxu0 0.0
        %1671 = vmatprep.subr.mxu0 0.0
        %1672 = vmatpush1.msra.mxu0 0.0
        %1673 = vmatprep.subr.mxu0 0.0
        %1674 = vmatpush1.msra.mxu0 0.0
        %1675 = vmatprep.subr.mxu0 0.0
        %1676 = vmatpush1.msra.mxu0 0.0
        %1677 = vmatprep.subr.mxu0 0.0
        %1678 = vmatpush1.msra.mxu0 0.0
        %1679 = vmatprep.subr.mxu0 0.0
        %1680 = vmatpush1.msra.mxu0 0.0
        %1681 = vmatprep.subr.mxu0 0.0
        %1682 = vmatpush1.msra.mxu0 0.0
        %1683 = vmatprep.subr.mxu0 0.0
        %1684 = vmatpush1.msra.mxu0 0.0
        %1685 = vmatprep.subr.mxu0 0.0
        %1686 = vmatpush1.msra.mxu0 0.0
        %1687 = vmatprep.subr.mxu0 0.0
        %1688 = vmatpush1.msra.mxu0 0.0
        %1689 = vmatprep.subr.mxu0 0.0
        %1690 = vmatpush1.msra.mxu0 0.0
        %1691 = vmatprep.subr.mxu0 0.0
        %1692 = vmatpush1.msra.mxu0 0.0
        %1693 = vmatprep.subr.mxu0 0.0
        %1694 = vmatpush1.msra.mxu0 0.0
        %1695 = vmatprep.subr.mxu0 0.0
        %1696 = vmatpush1.msra.mxu0 0.0
        %1697 = vmatprep.subr.mxu0 0.0
        %1698 = vmatpush1.msra.mxu0 0.0
        %1699 = vmatprep.subr.mxu0 0.0
        %1700 = vmatpush1.msra.mxu0 0.0
        %1701 = vmatprep.subr.mxu0 0.0
        %1702 = vmatpush1.msra.mxu0 0.0
        %1703 = vmatprep.subr.mxu0 0.0
        %1704 = vmatpush1.msra.mxu0 0.0
        %1705 = vmatprep.subr.mxu0 0.0
        %1706 = vmatpush1.msra.mxu0 0.0
        %1707 = vmatprep.subr.mxu0 0.0
        %1708 = vmatpush1.msra.mxu0 0.0
        %1709 = vmatprep.subr.mxu0 0.0
        %1710 = vmatpush1.msra.mxu0 0.0
        %1711 = vmatprep.subr.mxu0 0.0
        %1712 = vmatpush1.msra.mxu0 0.0
        %1713 = vmatprep.mubr.f32.mxu0 0.0
        %1714 = vmatmul.mubr.f32.gmra.mrb[0].mxu0 %v1647
        %v1715 = vpop.f32.mrb[0].mxu0
        %v1716 = vadd.f32 0.0, %v1715
        %v1717 = vpop.f32.mrb[0].mxu0
        %1718 = vdwg.mxu0
        %1719 = vrot.lane.b32.xlu0 %v1049, 112
        %v1720 = vpop.permute.xlu0 %1719
        %1721 = vrot.lane.b32.xlu0 %v1026, 80
        %v1722 = vpop.permute.xlu0 %1721
        %v1723 = vsel %vm1056, %v1720, 0
        %v1725 = vsel %vm1056, %v1722, 0
        %1727 = vmatprep.subr.mxu0 0.0
        %1728 = vmatpush1.xpose.msra.mxu0 %v1725
        %1729 = vmatprep.subr.mxu0 0.0
        %1730 = vmatpush1.xpose.msra.mxu0 0.0
        %1731 = vmatprep.subr.mxu0 0.0
        %1732 = vmatpush1.xpose.msra.mxu0 0.0
        %1733 = vmatprep.subr.mxu0 0.0
        %1734 = vmatpush1.xpose.msra.mxu0 0.0
        %1735 = vmatprep.subr.mxu0 0.0
        %1736 = vmatpush1.xpose.msra.mxu0 0.0
        %1737 = vmatprep.subr.mxu0 0.0
        %1738 = vmatpush1.xpose.msra.mxu0 0.0
        %1739 = vmatprep.subr.mxu0 0.0
        %1740 = vmatpush1.xpose.msra.mxu0 0.0
        %1741 = vmatprep.subr.mxu0 0.0
        %1742 = vmatpush1.xpose.msra.mxu0 0.0
        %1743 = vmatprep.subr.mxu0 0.0
        %1744 = vmatpush1.xpose.msra.mxu0 0.0
        %1745 = vmatprep.subr.mxu0 0.0
        %1746 = vmatpush1.xpose.msra.mxu0 0.0
        %1747 = vmatprep.subr.mxu0 0.0
        %1748 = vmatpush1.xpose.msra.mxu0 0.0
        %1749 = vmatprep.subr.mxu0 0.0
        %1750 = vmatpush1.xpose.msra.mxu0 0.0
        %1751 = vmatprep.subr.mxu0 0.0
        %1752 = vmatpush1.xpose.msra.mxu0 0.0
        %1753 = vmatprep.subr.mxu0 0.0
        %1754 = vmatpush1.xpose.msra.mxu0 0.0
        %1755 = vmatprep.subr.mxu0 0.0
        %1756 = vmatpush1.xpose.msra.mxu0 0.0
        %1757 = vmatprep.subr.mxu0 0.0
        %1758 = vmatpush1.xpose.msra.mxu0 0.0
        %1759 = vmatprep.subr.mxu0 0.0
        %1760 = vmatpush1.xpose.msra.mxu0 0.0
        %1761 = vmatprep.subr.mxu0 0.0
        %1762 = vmatpush1.xpose.msra.mxu0 0.0
        %1763 = vmatprep.subr.mxu0 0.0
        %1764 = vmatpush1.xpose.msra.mxu0 0.0
        %1765 = vmatprep.subr.mxu0 0.0
        %1766 = vmatpush1.xpose.msra.mxu0 0.0
        %1767 = vmatprep.subr.mxu0 0.0
        %1768 = vmatpush1.xpose.msra.mxu0 0.0
        %1769 = vmatprep.subr.mxu0 0.0
        %1770 = vmatpush1.xpose.msra.mxu0 0.0
        %1771 = vmatprep.subr.mxu0 0.0
        %1772 = vmatpush1.xpose.msra.mxu0 0.0
        %1773 = vmatprep.subr.mxu0 0.0
        %1774 = vmatpush1.xpose.msra.mxu0 0.0
        %1775 = vmatprep.subr.mxu0 0.0
        %1776 = vmatpush1.xpose.msra.mxu0 0.0
        %1777 = vmatprep.subr.mxu0 0.0
        %1778 = vmatpush1.xpose.msra.mxu0 0.0
        %1779 = vmatprep.subr.mxu0 0.0
        %1780 = vmatpush1.xpose.msra.mxu0 0.0
        %1781 = vmatprep.subr.mxu0 0.0
        %1782 = vmatpush1.xpose.msra.mxu0 0.0
        %1783 = vmatprep.subr.mxu0 0.0
        %1784 = vmatpush1.xpose.msra.mxu0 0.0
        %1785 = vmatprep.subr.mxu0 0.0
        %1786 = vmatpush1.xpose.msra.mxu0 0.0
        %1787 = vmatprep.subr.mxu0 0.0
        %1788 = vmatpush1.xpose.msra.mxu0 0.0
        %1789 = vmatprep.subr.mxu0 0.0
        %1790 = vmatpush1.xpose.msra.mxu0 0.0
        %1791 = vmatprep.mubr.f32.mxu0 0.0
        %1792 = vmatmul.mubr.f32.gmra.mrb[0].mxu0 %v1723
        %v1793 = vpop.f32.mrb[0].mxu0
        %v1794 = vadd.f32 0.0, %v1793
        %v1795 = vpop.f32.mrb[0].mxu0
        %1796 = vdwg.mxu0
        %1797 = vrot.lane.b32.xlu0 %v1050, 112
        %v1798 = vpop.permute.xlu0 %1797
        %1799 = vrot.lane.b32.xlu0 %v1031, 80
        %v1800 = vpop.permute.xlu0 %1799
        %v1801 = vsel %vm1056, %v1798, 0
        %v1803 = vsel %vm1056, %v1800, 0
        %1805 = vmatprep.subr.mxu0 0.0
        %1806 = vmatpush1.xpose.msra.mxu0 %v1803
        %1807 = vmatprep.subr.mxu0 0.0
        %1808 = vmatpush1.xpose.msra.mxu0 0.0
        %1809 = vmatprep.subr.mxu0 0.0
        %1810 = vmatpush1.xpose.msra.mxu0 0.0
        %1811 = vmatprep.subr.mxu0 0.0
        %1812 = vmatpush1.xpose.msra.mxu0 0.0
        %1813 = vmatprep.subr.mxu0 0.0
        %1814 = vmatpush1.xpose.msra.mxu0 0.0
        %1815 = vmatprep.subr.mxu0 0.0
        %1816 = vmatpush1.xpose.msra.mxu0 0.0
        %1817 = vmatprep.subr.mxu0 0.0
        %1818 = vmatpush1.xpose.msra.mxu0 0.0
        %1819 = vmatprep.subr.mxu0 0.0
        %1820 = vmatpush1.xpose.msra.mxu0 0.0
        %1821 = vmatprep.subr.mxu0 0.0
        %1822 = vmatpush1.xpose.msra.mxu0 0.0
        %1823 = vmatprep.subr.mxu0 0.0
        %1824 = vmatpush1.xpose.msra.mxu0 0.0
        %1825 = vmatprep.subr.mxu0 0.0
        %1826 = vmatpush1.xpose.msra.mxu0 0.0
        %1827 = vmatprep.subr.mxu0 0.0
        %1828 = vmatpush1.xpose.msra.mxu0 0.0
        %1829 = vmatprep.subr.mxu0 0.0
        %1830 = vmatpush1.xpose.msra.mxu0 0.0
        %1831 = vmatprep.subr.mxu0 0.0
        %1832 = vmatpush1.xpose.msra.mxu0 0.0
        %1833 = vmatprep.subr.mxu0 0.0
        %1834 = vmatpush1.xpose.msra.mxu0 0.0
        %1835 = vmatprep.subr.mxu0 0.0
        %1836 = vmatpush1.xpose.msra.mxu0 0.0
        %1837 = vmatprep.subr.mxu0 0.0
        %1838 = vmatpush1.xpose.msra.mxu0 0.0
        %1839 = vmatprep.subr.mxu0 0.0
        %1840 = vmatpush1.xpose.msra.mxu0 0.0
        %1841 = vmatprep.subr.mxu0 0.0
        %1842 = vmatpush1.xpose.msra.mxu0 0.0
        %1843 = vmatprep.subr.mxu0 0.0
        %1844 = vmatpush1.xpose.msra.mxu0 0.0
        %1845 = vmatprep.subr.mxu0 0.0
        %1846 = vmatpush1.xpose.msra.mxu0 0.0
        %1847 = vmatprep.subr.mxu0 0.0
        %1848 = vmatpush1.xpose.msra.mxu0 0.0
        %1849 = vmatprep.subr.mxu0 0.0
        %1850 = vmatpush1.xpose.msra.mxu0 0.0
        %1851 = vmatprep.subr.mxu0 0.0
        %1852 = vmatpush1.xpose.msra.mxu0 0.0
        %1853 = vmatprep.subr.mxu0 0.0
        %1854 = vmatpush1.xpose.msra.mxu0 0.0
        %1855 = vmatprep.subr.mxu0 0.0
        %1856 = vmatpush1.xpose.msra.mxu0 0.0
        %1857 = vmatprep.subr.mxu0 0.0
        %1858 = vmatpush1.xpose.msra.mxu0 0.0
        %1859 = vmatprep.subr.mxu0 0.0
        %1860 = vmatpush1.xpose.msra.mxu0 0.0
        %1861 = vmatprep.subr.mxu0 0.0
        %1862 = vmatpush1.xpose.msra.mxu0 0.0
        %1863 = vmatprep.subr.mxu0 0.0
        %1864 = vmatpush1.xpose.msra.mxu0 0.0
        %1865 = vmatprep.subr.mxu0 0.0
        %1866 = vmatpush1.xpose.msra.mxu0 0.0
        %1867 = vmatprep.subr.mxu0 0.0
        %1868 = vmatpush1.xpose.msra.mxu0 0.0
        %1869 = vmatprep.mubr.f32.mxu0 0.0
        %1870 = vmatmul.mubr.f32.gmra.mrb[0].mxu0 %v1801
        %v1871 = vpop.f32.mrb[0].mxu0
        %v1872 = vadd.f32 0.0, %v1871
        %v1873 = vpop.f32.mrb[0].mxu0
        %1874 = vdwg.mxu0
        %1875 = vrot.lane.b32.xlu0 %v1051, 112
        %v1876 = vpop.permute.xlu0 %1875
        %1877 = vrot.lane.b32.xlu0 %v1036, 80
        %v1878 = vpop.permute.xlu0 %1877
        %v1879 = vsel %vm1056, %v1876, 0
        %v1881 = vsel %vm1056, %v1878, 0
        %1883 = vmatprep.subr.mxu0 0.0
        %1884 = vmatpush1.xpose.msra.mxu0 %v1881
        %1885 = vmatprep.subr.mxu0 0.0
        %1886 = vmatpush1.xpose.msra.mxu0 0.0
        %1887 = vmatprep.subr.mxu0 0.0
        %1888 = vmatpush1.xpose.msra.mxu0 0.0
        %1889 = vmatprep.subr.mxu0 0.0
        %1890 = vmatpush1.xpose.msra.mxu0 0.0
        %1891 = vmatprep.subr.mxu0 0.0
        %1892 = vmatpush1.xpose.msra.mxu0 0.0
        %1893 = vmatprep.subr.mxu0 0.0
        %1894 = vmatpush1.xpose.msra.mxu0 0.0
        %1895 = vmatprep.subr.mxu0 0.0
        %1896 = vmatpush1.xpose.msra.mxu0 0.0
        %1897 = vmatprep.subr.mxu0 0.0
        %1898 = vmatpush1.xpose.msra.mxu0 0.0
        %1899 = vmatprep.subr.mxu0 0.0
        %1900 = vmatpush1.xpose.msra.mxu0 0.0
        %1901 = vmatprep.subr.mxu0 0.0
        %1902 = vmatpush1.xpose.msra.mxu0 0.0
        %1903 = vmatprep.subr.mxu0 0.0
        %1904 = vmatpush1.xpose.msra.mxu0 0.0
        %1905 = vmatprep.subr.mxu0 0.0
        %1906 = vmatpush1.xpose.msra.mxu0 0.0
        %1907 = vmatprep.subr.mxu0 0.0
        %1908 = vmatpush1.xpose.msra.mxu0 0.0
        %1909 = vmatprep.subr.mxu0 0.0
        %1910 = vmatpush1.xpose.msra.mxu0 0.0
        %1911 = vmatprep.subr.mxu0 0.0
        %1912 = vmatpush1.xpose.msra.mxu0 0.0
        %1913 = vmatprep.subr.mxu0 0.0
        %1914 = vmatpush1.xpose.msra.mxu0 0.0
        %1915 = vmatprep.subr.mxu0 0.0
        %1916 = vmatpush1.xpose.msra.mxu0 0.0
        %1917 = vmatprep.subr.mxu0 0.0
        %1918 = vmatpush1.xpose.msra.mxu0 0.0
        %1919 = vmatprep.subr.mxu0 0.0
        %1920 = vmatpush1.xpose.msra.mxu0 0.0
        %1921 = vmatprep.subr.mxu0 0.0
        %1922 = vmatpush1.xpose.msra.mxu0 0.0
        %1923 = vmatprep.subr.mxu0 0.0
        %1924 = vmatpush1.xpose.msra.mxu0 0.0
        %1925 = vmatprep.subr.mxu0 0.0
        %1926 = vmatpush1.xpose.msra.mxu0 0.0
        %1927 = vmatprep.subr.mxu0 0.0
        %1928 = vmatpush1.xpose.msra.mxu0 0.0
        %1929 = vmatprep.subr.mxu0 0.0
        %1930 = vmatpush1.xpose.msra.mxu0 0.0
        %1931 = vmatprep.subr.mxu0 0.0
        %1932 = vmatpush1.xpose.msra.mxu0 0.0
        %1933 = vmatprep.subr.mxu0 0.0
        %1934 = vmatpush1.xpose.msra.mxu0 0.0
        %1935 = vmatprep.subr.mxu0 0.0
        %1936 = vmatpush1.xpose.msra.mxu0 0.0
        %1937 = vmatprep.subr.mxu0 0.0
        %1938 = vmatpush1.xpose.msra.mxu0 0.0
        %1939 = vmatprep.subr.mxu0 0.0
        %1940 = vmatpush1.xpose.msra.mxu0 0.0
        %1941 = vmatprep.subr.mxu0 0.0
        %1942 = vmatpush1.xpose.msra.mxu0 0.0
        %1943 = vmatprep.subr.mxu0 0.0
        %1944 = vmatpush1.xpose.msra.mxu0 0.0
        %1945 = vmatprep.subr.mxu0 0.0
        %1946 = vmatpush1.xpose.msra.mxu0 0.0
        %1947 = vmatprep.mubr.f32.mxu0 0.0
        %1948 = vmatmul.mubr.f32.gmra.mrb[0].mxu0 %v1879
        %v1949 = vpop.f32.mrb[0].mxu0
        %v1950 = vadd.f32 0.0, %v1949
        %v1951 = vpop.f32.mrb[0].mxu0
        %1952 = vdwg.mxu0
        %1953 = vrot.lane.b32.xlu0 %v1052, 112
        %v1954 = vpop.permute.xlu0 %1953
        %1955 = vrot.lane.b32.xlu0 %v1041, 80
        %v1956 = vpop.permute.xlu0 %1955
        %v1957 = vsel %vm1056, %v1954, 0
        %v1959 = vsel %vm1056, %v1956, 0
        %1961 = vmatprep.subr.mxu0 0.0
        %1962 = vmatpush1.xpose.msra.mxu0 %v1959
        %1963 = vmatprep.subr.mxu0 0.0
        %1964 = vmatpush1.xpose.msra.mxu0 0.0
        %1965 = vmatprep.subr.mxu0 0.0
        %1966 = vmatpush1.xpose.msra.mxu0 0.0
        %1967 = vmatprep.subr.mxu0 0.0
        %1968 = vmatpush1.xpose.msra.mxu0 0.0
        %1969 = vmatprep.subr.mxu0 0.0
        %1970 = vmatpush1.xpose.msra.mxu0 0.0
        %1971 = vmatprep.subr.mxu0 0.0
        %1972 = vmatpush1.xpose.msra.mxu0 0.0
        %1973 = vmatprep.subr.mxu0 0.0
        %1974 = vmatpush1.xpose.msra.mxu0 0.0
        %1975 = vmatprep.subr.mxu0 0.0
        %1976 = vmatpush1.xpose.msra.mxu0 0.0
        %1977 = vmatprep.subr.mxu0 0.0
        %1978 = vmatpush1.xpose.msra.mxu0 0.0
        %1979 = vmatprep.subr.mxu0 0.0
        %1980 = vmatpush1.xpose.msra.mxu0 0.0
        %1981 = vmatprep.subr.mxu0 0.0
        %1982 = vmatpush1.xpose.msra.mxu0 0.0
        %1983 = vmatprep.subr.mxu0 0.0
        %1984 = vmatpush1.xpose.msra.mxu0 0.0
        %1985 = vmatprep.subr.mxu0 0.0
        %1986 = vmatpush1.xpose.msra.mxu0 0.0
        %1987 = vmatprep.subr.mxu0 0.0
        %1988 = vmatpush1.xpose.msra.mxu0 0.0
        %1989 = vmatprep.subr.mxu0 0.0
        %1990 = vmatpush1.xpose.msra.mxu0 0.0
        %1991 = vmatprep.subr.mxu0 0.0
        %1992 = vmatpush1.xpose.msra.mxu0 0.0
        %1993 = vmatprep.subr.mxu0 0.0
        %1994 = vmatpush1.xpose.msra.mxu0 0.0
        %1995 = vmatprep.subr.mxu0 0.0
        %1996 = vmatpush1.xpose.msra.mxu0 0.0
        %1997 = vmatprep.subr.mxu0 0.0
        %1998 = vmatpush1.xpose.msra.mxu0 0.0
        %1999 = vmatprep.subr.mxu0 0.0
        %2000 = vmatpush1.xpose.msra.mxu0 0.0
        %2001 = vmatprep.subr.mxu0 0.0
        %2002 = vmatpush1.xpose.msra.mxu0 0.0
        %2003 = vmatprep.subr.mxu0 0.0
        %2004 = vmatpush1.xpose.msra.mxu0 0.0
        %2005 = vmatprep.subr.mxu0 0.0
        %2006 = vmatpush1.xpose.msra.mxu0 0.0
        %2007 = vmatprep.subr.mxu0 0.0
        %2008 = vmatpush1.xpose.msra.mxu0 0.0
        %2009 = vmatprep.subr.mxu0 0.0
        %2010 = vmatpush1.xpose.msra.mxu0 0.0
        %2011 = vmatprep.subr.mxu0 0.0
        %2012 = vmatpush1.xpose.msra.mxu0 0.0
        %2013 = vmatprep.subr.mxu0 0.0
        %2014 = vmatpush1.xpose.msra.mxu0 0.0
        %2015 = vmatprep.subr.mxu0 0.0
        %2016 = vmatpush1.xpose.msra.mxu0 0.0
        %2017 = vmatprep.subr.mxu0 0.0
        %2018 = vmatpush1.xpose.msra.mxu0 0.0
        %2019 = vmatprep.subr.mxu0 0.0
        %2020 = vmatpush1.xpose.msra.mxu0 0.0
        %2021 = vmatprep.subr.mxu0 0.0
        %2022 = vmatpush1.xpose.msra.mxu0 0.0
        %2023 = vmatprep.subr.mxu0 0.0
        %2024 = vmatpush1.xpose.msra.mxu0 0.0
        %2025 = vmatprep.mubr.f32.mxu0 0.0
        %2026 = vmatmul.mubr.f32.gmra.mrb[0].mxu0 %v1957
        %v2027 = vpop.f32.mrb[0].mxu0
        %v2028 = vadd.f32 0.0, %v2027
        %v2029 = vpop.f32.mrb[0].mxu0
        %2030 = vdwg.mxu0
        %v2031 = vsel %vm1048, %v1794, -1e+30
        %v2032 = vsel %vm1048, %v1872, -1e+30
        %v2033 = vsel %vm1048, %v1950, -1e+30
        %v2034 = vsel %vm1048, %v2028, -1e+30
        %v2035 = vsel %vm1370, %v2031, -inf
        %2036 = vmax.xlane.f32.xlu0 %v2035
        %v2037 = vpop.xlane.xlu0 %2036
        %v2038 = vsel %vm1370, %v2032, -inf
        %2039 = vmax.xlane.f32.xlu0 %v2038
        %v2040 = vpop.xlane.xlu0 %2039
        %v2041 = vsel %vm1370, %v2033, -inf
        %2042 = vmax.xlane.f32.xlu0 %v2041
        %v2043 = vpop.xlane.xlu0 %2042
        %v2044 = vsel %vm1370, %v2034, -inf
        %2045 = vmax.xlane.f32.xlu0 %v2044
        %v2046 = vpop.xlane.xlu0 %2045
        %v2047 = vsub.f32 %v2031, %v2037
        %v2048 = vsub.f32 %v2032, %v2040
        %v2049 = vsub.f32 %v2033, %v2043
        %v2050 = vsub.f32 %v2034, %v2046
        %v2051 = vmul.f32 %v2047, 1.442695
        %v2052 = vpow.pop %v2051
        %v2053 = vmul.f32 %v2048, 1.442695
        %v2054 = vpow.pop %v2053
        %v2055 = vmul.f32 %v2049, 1.442695
        %v2056 = vpow.pop %v2055
        %v2057 = vmul.f32 %v2050, 1.442695
        %v2058 = vpow.pop %v2057
        %v2059 = vsel %vm1370, %v2052, 0.0
        %2060 = vadd.xlane.f32.xlu0 %v2059
        %v2061 = vpop.xlane.xlu0 %2060
        %v2062 = vsel %vm1370, %v2054, 0.0
        %2063 = vadd.xlane.f32.xlu0 %v2062
        %v2064 = vpop.xlane.xlu0 %2063
        %v2065 = vsel %vm1370, %v2056, 0.0
        %2066 = vadd.xlane.f32.xlu0 %v2065
        %v2067 = vpop.xlane.xlu0 %2066
        %v2068 = vsel %vm1370, %v2058, 0.0
        %2069 = vadd.xlane.f32.xlu0 %v2068
        %v2070 = vpop.xlane.xlu0 %2069
        %v2071 = vrcp.pop %v2061
        %v2072 = vrcp.pop %v2064
        %v2073 = vrcp.pop %v2067
        %v2074 = vrcp.pop %v2070
        %v2075 = vmul.f32 %v2052, %v2071
        %v2076 = vmul.f32 %v2054, %v2072
        %v2077 = vmul.f32 %v2056, %v2073
        %v2078 = vmul.f32 %v2058, %v2074
        %2079 = vrot.lane.b32.xlu0 %v1026, 48
        %v2080 = vpop.permute.xlu0 %2079
        %v2083 = vsel %vm1370, %v2075, 0
        %2085 = vmatprep.subr.mxu0 0.0
        %2086 = vmatpush1.msra.mxu0 %v2080
        %2087 = vmatprep.subr.mxu0 0.0
        %2088 = vmatpush1.msra.mxu0 0.0
        %2089 = vmatprep.subr.mxu0 0.0
        %2090 = vmatpush1.msra.mxu0 0.0
        %2091 = vmatprep.subr.mxu0 0.0
        %2092 = vmatpush1.msra.mxu0 0.0
        %2093 = vmatprep.subr.mxu0 0.0
        %2094 = vmatpush1.msra.mxu0 0.0
        %2095 = vmatprep.subr.mxu0 0.0
        %2096 = vmatpush1.msra.mxu0 0.0
        %2097 = vmatprep.subr.mxu0 0.0
        %2098 = vmatpush1.msra.mxu0 0.0
        %2099 = vmatprep.subr.mxu0 0.0
        %2100 = vmatpush1.msra.mxu0 0.0
        %2101 = vmatprep.subr.mxu0 0.0
        %2102 = vmatpush1.msra.mxu0 0.0
        %2103 = vmatprep.subr.mxu0 0.0
        %2104 = vmatpush1.msra.mxu0 0.0
        %2105 = vmatprep.subr.mxu0 0.0
        %2106 = vmatpush1.msra.mxu0 0.0
        %2107 = vmatprep.subr.mxu0 0.0
        %2108 = vmatpush1.msra.mxu0 0.0
        %2109 = vmatprep.subr.mxu0 0.0
        %2110 = vmatpush1.msra.mxu0 0.0
        %2111 = vmatprep.subr.mxu0 0.0
        %2112 = vmatpush1.msra.mxu0 0.0
        %2113 = vmatprep.subr.mxu0 0.0
        %2114 = vmatpush1.msra.mxu0 0.0
        %2115 = vmatprep.subr.mxu0 0.0
        %2116 = vmatpush1.msra.mxu0 0.0
        %2117 = vmatprep.subr.mxu0 0.0
        %2118 = vmatpush1.msra.mxu0 0.0
        %2119 = vmatprep.subr.mxu0 0.0
        %2120 = vmatpush1.msra.mxu0 0.0
        %2121 = vmatprep.subr.mxu0 0.0
        %2122 = vmatpush1.msra.mxu0 0.0
        %2123 = vmatprep.subr.mxu0 0.0
        %2124 = vmatpush1.msra.mxu0 0.0
        %2125 = vmatprep.subr.mxu0 0.0
        %2126 = vmatpush1.msra.mxu0 0.0
        %2127 = vmatprep.subr.mxu0 0.0
        %2128 = vmatpush1.msra.mxu0 0.0
        %2129 = vmatprep.subr.mxu0 0.0
        %2130 = vmatpush1.msra.mxu0 0.0
        %2131 = vmatprep.subr.mxu0 0.0
        %2132 = vmatpush1.msra.mxu0 0.0
        %2133 = vmatprep.subr.mxu0 0.0
        %2134 = vmatpush1.msra.mxu0 0.0
        %2135 = vmatprep.subr.mxu0 0.0
        %2136 = vmatpush1.msra.mxu0 0.0
        %2137 = vmatprep.subr.mxu0 0.0
        %2138 = vmatpush1.msra.mxu0 0.0
        %2139 = vmatprep.subr.mxu0 0.0
        %2140 = vmatpush1.msra.mxu0 0.0
        %2141 = vmatprep.subr.mxu0 0.0
        %2142 = vmatpush1.msra.mxu0 0.0
        %2143 = vmatprep.subr.mxu0 0.0
        %2144 = vmatpush1.msra.mxu0 0.0
        %2145 = vmatprep.subr.mxu0 0.0
        %2146 = vmatpush1.msra.mxu0 0.0
        %2147 = vmatprep.subr.mxu0 0.0
        %2148 = vmatpush1.msra.mxu0 0.0
        %2149 = vmatprep.mubr.f32.mxu0 0.0
        %2150 = vmatmul.mubr.f32.gmra.mrb[0].mxu0 %v2083
        %v2151 = vpop.f32.mrb[0].mxu0
        %v2152 = vadd.f32 0.0, %v2151
        %v2153 = vpop.f32.mrb[0].mxu0
        %2154 = vdwg.mxu0
        %2155 = vrot.lane.b32.xlu0 %v1031, 48
        %v2156 = vpop.permute.xlu0 %2155
        %v2159 = vsel %vm1370, %v2076, 0
        %2161 = vmatprep.subr.mxu0 0.0
        %2162 = vmatpush1.msra.mxu0 %v2156
        %2163 = vmatprep.subr.mxu0 0.0
        %2164 = vmatpush1.msra.mxu0 0.0
        %2165 = vmatprep.subr.mxu0 0.0
        %2166 = vmatpush1.msra.mxu0 0.0
        %2167 = vmatprep.subr.mxu0 0.0
        %2168 = vmatpush1.msra.mxu0 0.0
        %2169 = vmatprep.subr.mxu0 0.0
        %2170 = vmatpush1.msra.mxu0 0.0
        %2171 = vmatprep.subr.mxu0 0.0
        %2172 = vmatpush1.msra.mxu0 0.0
        %2173 = vmatprep.subr.mxu0 0.0
        %2174 = vmatpush1.msra.mxu0 0.0
        %2175 = vmatprep.subr.mxu0 0.0
        %2176 = vmatpush1.msra.mxu0 0.0
        %2177 = vmatprep.subr.mxu0 0.0
        %2178 = vmatpush1.msra.mxu0 0.0
        %2179 = vmatprep.subr.mxu0 0.0
        %2180 = vmatpush1.msra.mxu0 0.0
        %2181 = vmatprep.subr.mxu0 0.0
        %2182 = vmatpush1.msra.mxu0 0.0
        %2183 = vmatprep.subr.mxu0 0.0
        %2184 = vmatpush1.msra.mxu0 0.0
        %2185 = vmatprep.subr.mxu0 0.0
        %2186 = vmatpush1.msra.mxu0 0.0
        %2187 = vmatprep.subr.mxu0 0.0
        %2188 = vmatpush1.msra.mxu0 0.0
        %2189 = vmatprep.subr.mxu0 0.0
        %2190 = vmatpush1.msra.mxu0 0.0
        %2191 = vmatprep.subr.mxu0 0.0
        %2192 = vmatpush1.msra.mxu0 0.0
        %2193 = vmatprep.subr.mxu0 0.0
        %2194 = vmatpush1.msra.mxu0 0.0
        %2195 = vmatprep.subr.mxu0 0.0
        %2196 = vmatpush1.msra.mxu0 0.0
        %2197 = vmatprep.subr.mxu0 0.0
        %2198 = vmatpush1.msra.mxu0 0.0
        %2199 = vmatprep.subr.mxu0 0.0
        %2200 = vmatpush1.msra.mxu0 0.0
        %2201 = vmatprep.subr.mxu0 0.0
        %2202 = vmatpush1.msra.mxu0 0.0
        %2203 = vmatprep.subr.mxu0 0.0
        %2204 = vmatpush1.msra.mxu0 0.0
        %2205 = vmatprep.subr.mxu0 0.0
        %2206 = vmatpush1.msra.mxu0 0.0
        %2207 = vmatprep.subr.mxu0 0.0
        %2208 = vmatpush1.msra.mxu0 0.0
        %2209 = vmatprep.subr.mxu0 0.0
        %2210 = vmatpush1.msra.mxu0 0.0
        %2211 = vmatprep.subr.mxu0 0.0
        %2212 = vmatpush1.msra.mxu0 0.0
        %2213 = vmatprep.subr.mxu0 0.0
        %2214 = vmatpush1.msra.mxu0 0.0
        %2215 = vmatprep.subr.mxu0 0.0
        %2216 = vmatpush1.msra.mxu0 0.0
        %2217 = vmatprep.subr.mxu0 0.0
        %2218 = vmatpush1.msra.mxu0 0.0
        %2219 = vmatprep.subr.mxu0 0.0
        %2220 = vmatpush1.msra.mxu0 0.0
        %2221 = vmatprep.subr.mxu0 0.0
        %2222 = vmatpush1.msra.mxu0 0.0
        %2223 = vmatprep.subr.mxu0 0.0
        %2224 = vmatpush1.msra.mxu0 0.0
        %2225 = vmatprep.mubr.f32.mxu0 0.0
        %2226 = vmatmul.mubr.f32.gmra.mrb[0].mxu0 %v2159
        %v2227 = vpop.f32.mrb[0].mxu0
        %v2228 = vadd.f32 0.0, %v2227
        %v2229 = vpop.f32.mrb[0].mxu0
        %2230 = vdwg.mxu0
        %2231 = vrot.lane.b32.xlu0 %v1036, 48
        %v2232 = vpop.permute.xlu0 %2231
        %v2235 = vsel %vm1370, %v2077, 0
        %2237 = vmatprep.subr.mxu0 0.0
        %2238 = vmatpush1.msra.mxu0 %v2232
        %2239 = vmatprep.subr.mxu0 0.0
        %2240 = vmatpush1.msra.mxu0 0.0
        %2241 = vmatprep.subr.mxu0 0.0
        %2242 = vmatpush1.msra.mxu0 0.0
        %2243 = vmatprep.subr.mxu0 0.0
        %2244 = vmatpush1.msra.mxu0 0.0
        %2245 = vmatprep.subr.mxu0 0.0
        %2246 = vmatpush1.msra.mxu0 0.0
        %2247 = vmatprep.subr.mxu0 0.0
        %2248 = vmatpush1.msra.mxu0 0.0
        %2249 = vmatprep.subr.mxu0 0.0
        %2250 = vmatpush1.msra.mxu0 0.0
        %2251 = vmatprep.subr.mxu0 0.0
        %2252 = vmatpush1.msra.mxu0 0.0
        %2253 = vmatprep.subr.mxu0 0.0
        %2254 = vmatpush1.msra.mxu0 0.0
        %2255 = vmatprep.subr.mxu0 0.0
        %2256 = vmatpush1.msra.mxu0 0.0
        %2257 = vmatprep.subr.mxu0 0.0
        %2258 = vmatpush1.msra.mxu0 0.0
        %2259 = vmatprep.subr.mxu0 0.0
        %2260 = vmatpush1.msra.mxu0 0.0
        %2261 = vmatprep.subr.mxu0 0.0
        %2262 = vmatpush1.msra.mxu0 0.0
        %2263 = vmatprep.subr.mxu0 0.0
        %2264 = vmatpush1.msra.mxu0 0.0
        %2265 = vmatprep.subr.mxu0 0.0
        %2266 = vmatpush1.msra.mxu0 0.0
        %2267 = vmatprep.subr.mxu0 0.0
        %2268 = vmatpush1.msra.mxu0 0.0
        %2269 = vmatprep.subr.mxu0 0.0
        %2270 = vmatpush1.msra.mxu0 0.0
        %2271 = vmatprep.subr.mxu0 0.0
        %2272 = vmatpush1.msra.mxu0 0.0
        %2273 = vmatprep.subr.mxu0 0.0
        %2274 = vmatpush1.msra.mxu0 0.0
        %2275 = vmatprep.subr.mxu0 0.0
        %2276 = vmatpush1.msra.mxu0 0.0
        %2277 = vmatprep.subr.mxu0 0.0
        %2278 = vmatpush1.msra.mxu0 0.0
        %2279 = vmatprep.subr.mxu0 0.0
        %2280 = vmatpush1.msra.mxu0 0.0
        %2281 = vmatprep.subr.mxu0 0.0
        %2282 = vmatpush1.msra.mxu0 0.0
        %2283 = vmatprep.subr.mxu0 0.0
        %2284 = vmatpush1.msra.mxu0 0.0
        %2285 = vmatprep.subr.mxu0 0.0
        %2286 = vmatpush1.msra.mxu0 0.0
        %2287 = vmatprep.subr.mxu0 0.0
        %2288 = vmatpush1.msra.mxu0 0.0
        %2289 = vmatprep.subr.mxu0 0.0
        %2290 = vmatpush1.msra.mxu0 0.0
        %2291 = vmatprep.subr.mxu0 0.0
        %2292 = vmatpush1.msra.mxu0 0.0
        %2293 = vmatprep.subr.mxu0 0.0
        %2294 = vmatpush1.msra.mxu0 0.0
        %2295 = vmatprep.subr.mxu0 0.0
        %2296 = vmatpush1.msra.mxu0 0.0
        %2297 = vmatprep.subr.mxu0 0.0
        %2298 = vmatpush1.msra.mxu0 0.0
        %2299 = vmatprep.subr.mxu0 0.0
        %2300 = vmatpush1.msra.mxu0 0.0
        %2301 = vmatprep.mubr.f32.mxu0 0.0
        %2302 = vmatmul.mubr.f32.gmra.mrb[0].mxu0 %v2235
        %v2303 = vpop.f32.mrb[0].mxu0
        %v2304 = vadd.f32 0.0, %v2303
        %v2305 = vpop.f32.mrb[0].mxu0
        %2306 = vdwg.mxu0
        %2307 = vrot.lane.b32.xlu0 %v1041, 48
        %v2308 = vpop.permute.xlu0 %2307
        %v2311 = vsel %vm1370, %v2078, 0
        %2313 = vmatprep.subr.mxu0 0.0
        %2314 = vmatpush1.msra.mxu0 %v2308
        %2315 = vmatprep.subr.mxu0 0.0
        %2316 = vmatpush1.msra.mxu0 0.0
        %2317 = vmatprep.subr.mxu0 0.0
        %2318 = vmatpush1.msra.mxu0 0.0
        %2319 = vmatprep.subr.mxu0 0.0
        %2320 = vmatpush1.msra.mxu0 0.0
        %2321 = vmatprep.subr.mxu0 0.0
        %2322 = vmatpush1.msra.mxu0 0.0
        %2323 = vmatprep.subr.mxu0 0.0
        %2324 = vmatpush1.msra.mxu0 0.0
        %2325 = vmatprep.subr.mxu0 0.0
        %2326 = vmatpush1.msra.mxu0 0.0
        %2327 = vmatprep.subr.mxu0 0.0
        %2328 = vmatpush1.msra.mxu0 0.0
        %2329 = vmatprep.subr.mxu0 0.0
        %2330 = vmatpush1.msra.mxu0 0.0
        %2331 = vmatprep.subr.mxu0 0.0
        %2332 = vmatpush1.msra.mxu0 0.0
        %2333 = vmatprep.subr.mxu0 0.0
        %2334 = vmatpush1.msra.mxu0 0.0
        %2335 = vmatprep.subr.mxu0 0.0
        %2336 = vmatpush1.msra.mxu0 0.0
        %2337 = vmatprep.subr.mxu0 0.0
        %2338 = vmatpush1.msra.mxu0 0.0
        %2339 = vmatprep.subr.mxu0 0.0
        %2340 = vmatpush1.msra.mxu0 0.0
        %2341 = vmatprep.subr.mxu0 0.0
        %2342 = vmatpush1.msra.mxu0 0.0
        %2343 = vmatprep.subr.mxu0 0.0
        %2344 = vmatpush1.msra.mxu0 0.0
        %2345 = vmatprep.subr.mxu0 0.0
        %2346 = vmatpush1.msra.mxu0 0.0
        %2347 = vmatprep.subr.mxu0 0.0
        %2348 = vmatpush1.msra.mxu0 0.0
        %2349 = vmatprep.subr.mxu0 0.0
        %2350 = vmatpush1.msra.mxu0 0.0
        %2351 = vmatprep.subr.mxu0 0.0
        %2352 = vmatpush1.msra.mxu0 0.0
        %2353 = vmatprep.subr.mxu0 0.0
        %2354 = vmatpush1.msra.mxu0 0.0
        %2355 = vmatprep.subr.mxu0 0.0
        %2356 = vmatpush1.msra.mxu0 0.0
        %2357 = vmatprep.subr.mxu0 0.0
        %2358 = vmatpush1.msra.mxu0 0.0
        %2359 = vmatprep.subr.mxu0 0.0
        %2360 = vmatpush1.msra.mxu0 0.0
        %2361 = vmatprep.subr.mxu0 0.0
        %2362 = vmatpush1.msra.mxu0 0.0
        %2363 = vmatprep.subr.mxu0 0.0
        %2364 = vmatpush1.msra.mxu0 0.0
        %2365 = vmatprep.subr.mxu0 0.0
        %2366 = vmatpush1.msra.mxu0 0.0
        %2367 = vmatprep.subr.mxu0 0.0
        %2368 = vmatpush1.msra.mxu0 0.0
        %2369 = vmatprep.subr.mxu0 0.0
        %2370 = vmatpush1.msra.mxu0 0.0
        %2371 = vmatprep.subr.mxu0 0.0
        %2372 = vmatpush1.msra.mxu0 0.0
        %2373 = vmatprep.subr.mxu0 0.0
        %2374 = vmatpush1.msra.mxu0 0.0
        %2375 = vmatprep.subr.mxu0 0.0
        %2376 = vmatpush1.msra.mxu0 0.0
        %2377 = vmatprep.mubr.f32.mxu0 0.0
        %2378 = vmatmul.mubr.f32.gmra.mrb[0].mxu0 %v2311
        %v2379 = vpop.f32.mrb[0].mxu0
        %v2380 = vadd.f32 0.0, %v2379
        %v2381 = vpop.f32.mrb[0].mxu0
        %2382 = vdwg.mxu0
        %2387 = vrot.lane.b32.xlu0 %v2152, 16
        %v2388 = vpop.permute.xlu0 %2387
        %2389 = vrot.lane.b32.xlu0 %v2228, 16
        %v2390 = vpop.permute.xlu0 %2389
        %2391 = vrot.lane.b32.xlu0 %v2304, 16
        %v2392 = vpop.permute.xlu0 %2391
        %2393 = vrot.lane.b32.xlu0 %v2380, 16
        %v2394 = vpop.permute.xlu0 %2393
        %v2399 = vsel %vm1056, %v1488, %v2388
        %v2400 = vsel %vm1056, %v1564, %v2390
        %v2401 = vsel %vm1056, %v1640, %v2392
        %v2402 = vsel %vm1056, %v1716, %v2394
        %v2403 = vld [vmem:[%s817] sm:$0xff]
        %v2404 = vld [vmem:[%s817 + $0x8] sm:$0xff]
        %v2405 = vld [vmem:[%s817 + $0x10] sm:$0xff]
        %v2406 = vld [vmem:[%s817 + $0x18] sm:$0xff]
        %v2407 = vld [vmem:[%s820] sm:$0x1]
        %v2409 = vlaneseq
        %v2410 = vshrl.u32 %v2409, 7
        %v2411 = vsub.s32 0, %v2410
        %v2412 = vrot.slane %v2407, %v2411
        %v2415 = vsel %vm862, %v2399, 0
        %v2418 = vsel %vm862, %v2400, 0
        %v2421 = vsel %vm862, %v2401, 0
        %v2424 = vsel %vm862, %v2402, 0
        %2426 = vmatprep.subr.mxu0 0.0
        %2427 = vmatpush1.msra.mxu0 %v2403
        %2428 = vmatprep.subr.mxu0 0.0
        %2429 = vmatpush1.msra.mxu0 %v2404
        %2430 = vmatprep.subr.mxu0 0.0
        %2431 = vmatpush1.msra.mxu0 %v2405
        %2432 = vmatprep.subr.mxu0 0.0
        %2433 = vmatpush1.msra.mxu0 %v2406
        %2434 = vmatprep.subr.mxu0 0.0
        %2435 = vmatpush1.msra.mxu0 0.0
        %2436 = vmatprep.subr.mxu0 0.0
        %2437 = vmatpush1.msra.mxu0 0.0
        %2438 = vmatprep.subr.mxu0 0.0
        %2439 = vmatpush1.msra.mxu0 0.0
        %2440 = vmatprep.subr.mxu0 0.0
        %2441 = vmatpush1.msra.mxu0 0.0
        %2442 = vmatprep.subr.mxu0 0.0
        %2443 = vmatpush1.msra.mxu0 0.0
        %2444 = vmatprep.subr.mxu0 0.0
        %2445 = vmatpush1.msra.mxu0 0.0
        %2446 = vmatprep.subr.mxu0 0.0
        %2447 = vmatpush1.msra.mxu0 0.0
        %2448 = vmatprep.subr.mxu0 0.0
        %2449 = vmatpush1.msra.mxu0 0.0
        %2450 = vmatprep.subr.mxu0 0.0
        %2451 = vmatpush1.msra.mxu0 0.0
        %2452 = vmatprep.subr.mxu0 0.0
        %2453 = vmatpush1.msra.mxu0 0.0
        %2454 = vmatprep.subr.mxu0 0.0
        %2455 = vmatpush1.msra.mxu0 0.0
        %2456 = vmatprep.subr.mxu0 0.0
        %2457 = vmatpush1.msra.mxu0 0.0
        %2458 = vmatprep.subr.mxu0 0.0
        %2459 = vmatpush1.msra.mxu0 0.0
        %2460 = vmatprep.subr.mxu0 0.0
        %2461 = vmatpush1.msra.mxu0 0.0
        %2462 = vmatprep.subr.mxu0 0.0
        %2463 = vmatpush1.msra.mxu0 0.0
        %2464 = vmatprep.subr.mxu0 0.0
        %2465 = vmatpush1.msra.mxu0 0.0
        %2466 = vmatprep.subr.mxu0 0.0
        %2467 = vmatpush1.msra.mxu0 0.0
        %2468 = vmatprep.subr.mxu0 0.0
        %2469 = vmatpush1.msra.mxu0 0.0
        %2470 = vmatprep.subr.mxu0 0.0
        %2471 = vmatpush1.msra.mxu0 0.0
        %2472 = vmatprep.subr.mxu0 0.0
        %2473 = vmatpush1.msra.mxu0 0.0
        %2474 = vmatprep.subr.mxu0 0.0
        %2475 = vmatpush1.msra.mxu0 0.0
        %2476 = vmatprep.subr.mxu0 0.0
        %2477 = vmatpush1.msra.mxu0 0.0
        %2478 = vmatprep.subr.mxu0 0.0
        %2479 = vmatpush1.msra.mxu0 0.0
        %2480 = vmatprep.subr.mxu0 0.0
        %2481 = vmatpush1.msra.mxu0 0.0
        %2482 = vmatprep.subr.mxu0 0.0
        %2483 = vmatpush1.msra.mxu0 0.0
        %2484 = vmatprep.subr.mxu0 0.0
        %2485 = vmatpush1.msra.mxu0 0.0
        %2486 = vmatprep.subr.mxu0 0.0
        %2487 = vmatpush1.msra.mxu0 0.0
        %2488 = vmatprep.subr.mxu0 0.0
        %2489 = vmatpush1.msra.mxu0 0.0
        %2490 = vmatprep.mubr.f32.mxu0 0.0
        %2491 = vmatmul.mubr.f32.gmra.mrb[0].mxu0 %v2415
        %v2492 = vpop.f32.mrb[0].mxu0
        %v2493 = vadd.f32 %v2412, %v2492
        %v2494 = vpop.f32.mrb[0].mxu0
        %2495 = vmatprep.mubr.f32.mxu0 0.0
        %2496 = vmatmul.mubr.f32.gmra.mrb[0].mxu0 %v2418
        %v2497 = vpop.f32.mrb[0].mxu0
        %v2498 = vadd.f32 %v2412, %v2497
        %v2499 = vpop.f32.mrb[0].mxu0
        %2500 = vmatprep.mubr.f32.mxu0 0.0
        %2501 = vmatmul.mubr.f32.gmra.mrb[0].mxu0 %v2421
        %v2502 = vpop.f32.mrb[0].mxu0
        %v2503 = vadd.f32 %v2412, %v2502
        %v2504 = vpop.f32.mrb[0].mxu0
        %2505 = vmatprep.mubr.f32.mxu0 0.0
        %2506 = vmatmul.mubr.f32.gmra.mrb[0].mxu0 %v2424
        %v2507 = vpop.f32.mrb[0].mxu0
        %v2508 = vadd.f32 %v2412, %v2507
        %v2509 = vpop.f32.mrb[0].mxu0
        %2510 = vdwg.mxu0
        %v2511 = vadd.f32 %v856, %v2493
        %v2512 = vadd.f32 %v857, %v2498
        %v2513 = vadd.f32 %v858, %v2503
        %v2514 = vadd.f32 %v859, %v2508
        %v2515 = vld [vmem:[%s823] sm:$0x1]
        %v2516 = vld [vmem:[%s826] sm:$0x1]
        %v2517 = vsel %vm862, %v2511, 0.0
        %2518 = vadd.xlane.f32.xlu0 %v2517
        %v2519 = vpop.xlane.xlu0 %2518
        %v2520 = vsel %vm862, %v2512, 0.0
        %2521 = vadd.xlane.f32.xlu0 %v2520
        %v2522 = vpop.xlane.xlu0 %2521
        %v2523 = vsel %vm862, %v2513, 0.0
        %2524 = vadd.xlane.f32.xlu0 %v2523
        %v2525 = vpop.xlane.xlu0 %2524
        %v2526 = vsel %vm862, %v2514, 0.0
        %2527 = vadd.xlane.f32.xlu0 %v2526
        %v2528 = vpop.xlane.xlu0 %2527
        %v2529 = vmul.f32 %v2519, %v875
        %v2530 = vmul.f32 %v2522, %v875
        %v2531 = vmul.f32 %v2525, %v875
        %v2532 = vmul.f32 %v2528, %v875
        %v2533 = vsub.f32 %v2511, %v2529
        %v2534 = vsub.f32 %v2512, %v2530
        %v2535 = vsub.f32 %v2513, %v2531
        %v2536 = vsub.f32 %v2514, %v2532
        %v2537 = vmul.f32 %v2533, %v2533
        %v2538 = vmul.f32 %v2534, %v2534
        %v2539 = vmul.f32 %v2535, %v2535
        %v2540 = vmul.f32 %v2536, %v2536
        %v2541 = vsel %vm862, %v2537, 0.0
        %2542 = vadd.xlane.f32.xlu0 %v2541
        %v2543 = vpop.xlane.xlu0 %2542
        %v2544 = vsel %vm862, %v2538, 0.0
        %2545 = vadd.xlane.f32.xlu0 %v2544
        %v2546 = vpop.xlane.xlu0 %2545
        %v2547 = vsel %vm862, %v2539, 0.0
        %2548 = vadd.xlane.f32.xlu0 %v2547
        %v2549 = vpop.xlane.xlu0 %2548
        %v2550 = vsel %vm862, %v2540, 0.0
        %2551 = vadd.xlane.f32.xlu0 %v2550
        %v2552 = vpop.xlane.xlu0 %2551
        %v2553 = vmul.f32 %v2543, %v875
        %v2554 = vmul.f32 %v2546, %v875
        %v2555 = vmul.f32 %v2549, %v875
        %v2556 = vmul.f32 %v2552, %v875
        %v2557 = vadd.f32 %v2553, 1e-05
        %v2558 = vadd.f32 %v2554, 1e-05
        %v2559 = vadd.f32 %v2555, 1e-05
        %v2560 = vadd.f32 %v2556, 1e-05
        %v2561 = vrsqrt.pop %v2557
        %v2562 = vrsqrt.pop %v2558
        %v2563 = vrsqrt.pop %v2559
        %v2564 = vrsqrt.pop %v2560
        %v2565 = vmul.f32 %v2533, %v2561
        %v2566 = vmul.f32 %v2534, %v2562
        %v2567 = vmul.f32 %v2535, %v2563
        %v2568 = vmul.f32 %v2536, %v2564
        %v2570 = vlaneseq
        %v2571 = vshrl.u32 %v2570, 7
        %v2572 = vsub.s32 0, %v2571
        %v2573 = vrot.slane %v2515, %v2572
        %v2575 = vmul.f32 %v2565, %v2573
        %v2576 = vmul.f32 %v2566, %v2573
        %v2577 = vmul.f32 %v2567, %v2573
        %v2578 = vmul.f32 %v2568, %v2573
        %v2580 = vlaneseq
        %v2581 = vshrl.u32 %v2580, 7
        %v2582 = vsub.s32 0, %v2581
        %v2583 = vrot.slane %v2516, %v2582
        %v2585 = vadd.f32 %v2575, %v2583
        %v2586 = vadd.f32 %v2576, %v2583
        %v2587 = vadd.f32 %v2577, %v2583
        %v2588 = vadd.f32 %v2578, %v2583
        %v2589 = vld [vmem:[%s831] sm:$0xff]
        %v2590 = vld [vmem:[%s831 + $0x8] sm:$0xff]
        %v2591 = vld [vmem:[%s831 + $0x10] sm:$0xff]
        %v2592 = vld [vmem:[%s831 + $0x18] sm:$0xff]
        %v2593 = vld [vmem:[%s834] sm:$0x1]
        %v2595 = vlaneseq
        %v2596 = vshrl.u32 %v2595, 7
        %v2597 = vsub.s32 0, %v2596
        %v2598 = vrot.slane %v2593, %v2597
        %v2601 = vsel %vm862, %v2585, 0
        %v2604 = vsel %vm862, %v2586, 0
        %v2607 = vsel %vm862, %v2587, 0
        %v2610 = vsel %vm862, %v2588, 0
        %2612 = vmatprep.subr.mxu0 0.0
        %2613 = vmatpush1.msra.mxu0 %v2589
        %2614 = vmatprep.subr.mxu0 0.0
        %2615 = vmatpush1.msra.mxu0 %v2590
        %2616 = vmatprep.subr.mxu0 0.0
        %2617 = vmatpush1.msra.mxu0 %v2591
        %2618 = vmatprep.subr.mxu0 0.0
        %2619 = vmatpush1.msra.mxu0 %v2592
        %2620 = vmatprep.subr.mxu0 0.0
        %2621 = vmatpush1.msra.mxu0 0.0
        %2622 = vmatprep.subr.mxu0 0.0
        %2623 = vmatpush1.msra.mxu0 0.0
        %2624 = vmatprep.subr.mxu0 0.0
        %2625 = vmatpush1.msra.mxu0 0.0
        %2626 = vmatprep.subr.mxu0 0.0
        %2627 = vmatpush1.msra.mxu0 0.0
        %2628 = vmatprep.subr.mxu0 0.0
        %2629 = vmatpush1.msra.mxu0 0.0
        %2630 = vmatprep.subr.mxu0 0.0
        %2631 = vmatpush1.msra.mxu0 0.0
        %2632 = vmatprep.subr.mxu0 0.0
        %2633 = vmatpush1.msra.mxu0 0.0
        %2634 = vmatprep.subr.mxu0 0.0
        %2635 = vmatpush1.msra.mxu0 0.0
        %2636 = vmatprep.subr.mxu0 0.0
        %2637 = vmatpush1.msra.mxu0 0.0
        %2638 = vmatprep.subr.mxu0 0.0
        %2639 = vmatpush1.msra.mxu0 0.0
        %2640 = vmatprep.subr.mxu0 0.0
        %2641 = vmatpush1.msra.mxu0 0.0
        %2642 = vmatprep.subr.mxu0 0.0
        %2643 = vmatpush1.msra.mxu0 0.0
        %2644 = vmatprep.subr.mxu0 0.0
        %2645 = vmatpush1.msra.mxu0 0.0
        %2646 = vmatprep.subr.mxu0 0.0
        %2647 = vmatpush1.msra.mxu0 0.0
        %2648 = vmatprep.subr.mxu0 0.0
        %2649 = vmatpush1.msra.mxu0 0.0
        %2650 = vmatprep.subr.mxu0 0.0
        %2651 = vmatpush1.msra.mxu0 0.0
        %2652 = vmatprep.subr.mxu0 0.0
        %2653 = vmatpush1.msra.mxu0 0.0
        %2654 = vmatprep.subr.mxu0 0.0
        %2655 = vmatpush1.msra.mxu0 0.0
        %2656 = vmatprep.subr.mxu0 0.0
        %2657 = vmatpush1.msra.mxu0 0.0
        %2658 = vmatprep.subr.mxu0 0.0
        %2659 = vmatpush1.msra.mxu0 0.0
        %2660 = vmatprep.subr.mxu0 0.0
        %2661 = vmatpush1.msra.mxu0 0.0
        %2662 = vmatprep.subr.mxu0 0.0
        %2663 = vmatpush1.msra.mxu0 0.0
        %2664 = vmatprep.subr.mxu0 0.0
        %2665 = vmatpush1.msra.mxu0 0.0
        %2666 = vmatprep.subr.mxu0 0.0
        %2667 = vmatpush1.msra.mxu0 0.0
        %2668 = vmatprep.subr.mxu0 0.0
        %2669 = vmatpush1.msra.mxu0 0.0
        %2670 = vmatprep.subr.mxu0 0.0
        %2671 = vmatpush1.msra.mxu0 0.0
        %2672 = vmatprep.subr.mxu0 0.0
        %2673 = vmatpush1.msra.mxu0 0.0
        %2674 = vmatprep.subr.mxu0 0.0
        %2675 = vmatpush1.msra.mxu0 0.0
        %2676 = vmatprep.mubr.f32.mxu0 0.0
        %2677 = vmatmul.mubr.f32.gmra.mrb[0].mxu0 %v2601
        %v2678 = vpop.f32.mrb[0].mxu0
        %v2679 = vadd.f32 %v2598, %v2678
        %v2680 = vpop.f32.mrb[0].mxu0
        %2681 = vmatprep.mubr.f32.mxu0 0.0
        %2682 = vmatmul.mubr.f32.gmra.mrb[0].mxu0 %v2604
        %v2683 = vpop.f32.mrb[0].mxu0
        %v2684 = vadd.f32 %v2598, %v2683
        %v2685 = vpop.f32.mrb[0].mxu0
        %2686 = vmatprep.mubr.f32.mxu0 0.0
        %2687 = vmatmul.mubr.f32.gmra.mrb[0].mxu0 %v2607
        %v2688 = vpop.f32.mrb[0].mxu0
        %v2689 = vadd.f32 %v2598, %v2688
        %v2690 = vpop.f32.mrb[0].mxu0
        %2691 = vmatprep.mubr.f32.mxu0 0.0
        %2692 = vmatmul.mubr.f32.gmra.mrb[0].mxu0 %v2610
        %v2693 = vpop.f32.mrb[0].mxu0
        %v2694 = vadd.f32 %v2598, %v2693
        %v2695 = vpop.f32.mrb[0].mxu0
        %2696 = vdwg.mxu0
        %v2697 = vmul.f32 %v2679, 1.702
        %v2698 = vmul.f32 %v2684, 1.702
        %v2699 = vmul.f32 %v2689, 1.702
        %v2700 = vmul.f32 %v2694, 1.702
        %v2701 = vxor.u32 %v2697, 2147483648
        %v2702 = vxor.u32 %v2698, 2147483648
        %v2703 = vxor.u32 %v2699, 2147483648
        %v2704 = vxor.u32 %v2700, 2147483648
        %v2705 = vmul.f32 %v2701, 1.442695
        %v2706 = vpow.pop %v2705
        %v2707 = vmul.f32 %v2702, 1.442695
        %v2708 = vpow.pop %v2707
        %v2709 = vmul.f32 %v2703, 1.442695
        %v2710 = vpow.pop %v2709
        %v2711 = vmul.f32 %v2704, 1.442695
        %v2712 = vpow.pop %v2711
        %v2713 = vadd.f32 %v2706, 1.0
        %v2714 = vadd.f32 %v2708, 1.0
        %v2715 = vadd.f32 %v2710, 1.0
        %v2716 = vadd.f32 %v2712, 1.0
        %v2717 = vrcp.pop %v2713
        %v2718 = vmul.f32 1.0, %v2717
        %v2719 = vrcp.pop %v2714
        %v2720 = vmul.f32 1.0, %v2719
        %v2721 = vrcp.pop %v2715
        %v2722 = vmul.f32 1.0, %v2721
        %v2723 = vrcp.pop %v2716
        %v2724 = vmul.f32 1.0, %v2723
        %v2725 = vmul.f32 %v2679, %v2718
        %v2726 = vmul.f32 %v2684, %v2720
        %v2727 = vmul.f32 %v2689, %v2722
        %v2728 = vmul.f32 %v2694, %v2724
        %v2729 = vld [vmem:[%s839] sm:$0xff]
        %v2730 = vld [vmem:[%s839 + $0x8] sm:$0xff]
        %v2731 = vld [vmem:[%s839 + $0x10] sm:$0xff]
        %v2732 = vld [vmem:[%s839 + $0x18] sm:$0xff]
        %v2733 = vld [vmem:[%s839 + $0x20] sm:$0xff]
        %v2734 = vld [vmem:[%s839 + $0x28] sm:$0xff]
        %v2735 = vld [vmem:[%s839 + $0x30] sm:$0xff]
        %v2736 = vld [vmem:[%s839 + $0x38] sm:$0xff]
        %v2737 = vld [vmem:[%s842] sm:$0x1]
        %v2739 = vlaneseq
        %v2740 = vshrl.u32 %v2739, 7
        %v2741 = vsub.s32 0, %v2740
        %v2742 = vrot.slane %v2737, %v2741
        %vm2744 = vcmask 523264
        %v2746 = vsel %vm2744, %v2725, 0
        %v2749 = vsel %vm2744, %v2726, 0
        %v2752 = vsel %vm2744, %v2727, 0
        %v2755 = vsel %vm2744, %v2728, 0
        %2757 = vmatprep.subr.mxu0 0.0
        %2758 = vmatpush1.msra.mxu0 %v2729
        %2759 = vmatprep.subr.mxu0 0.0
        %2760 = vmatpush1.msra.mxu0 %v2730
        %2761 = vmatprep.subr.mxu0 0.0
        %2762 = vmatpush1.msra.mxu0 %v2731
        %2763 = vmatprep.subr.mxu0 0.0
        %2764 = vmatpush1.msra.mxu0 %v2732
        %2765 = vmatprep.subr.mxu0 0.0
        %2766 = vmatpush1.msra.mxu0 %v2733
        %2767 = vmatprep.subr.mxu0 0.0
        %2768 = vmatpush1.msra.mxu0 %v2734
        %2769 = vmatprep.subr.mxu0 0.0
        %2770 = vmatpush1.msra.mxu0 %v2735
        %2771 = vmatprep.subr.mxu0 0.0
        %2772 = vmatpush1.msra.mxu0 %v2736
        %2773 = vmatprep.subr.mxu0 0.0
        %2774 = vmatpush1.msra.mxu0 0.0
        %2775 = vmatprep.subr.mxu0 0.0
        %2776 = vmatpush1.msra.mxu0 0.0
        %2777 = vmatprep.subr.mxu0 0.0
        %2778 = vmatpush1.msra.mxu0 0.0
        %2779 = vmatprep.subr.mxu0 0.0
        %2780 = vmatpush1.msra.mxu0 0.0
        %2781 = vmatprep.subr.mxu0 0.0
        %2782 = vmatpush1.msra.mxu0 0.0
        %2783 = vmatprep.subr.mxu0 0.0
        %2784 = vmatpush1.msra.mxu0 0.0
        %2785 = vmatprep.subr.mxu0 0.0
        %2786 = vmatpush1.msra.mxu0 0.0
        %2787 = vmatprep.subr.mxu0 0.0
        %2788 = vmatpush1.msra.mxu0 0.0
        %2789 = vmatprep.subr.mxu0 0.0
        %2790 = vmatpush1.msra.mxu0 0.0
        %2791 = vmatprep.subr.mxu0 0.0
        %2792 = vmatpush1.msra.mxu0 0.0
        %2793 = vmatprep.subr.mxu0 0.0
        %2794 = vmatpush1.msra.mxu0 0.0
        %2795 = vmatprep.subr.mxu0 0.0
        %2796 = vmatpush1.msra.mxu0 0.0
        %2797 = vmatprep.subr.mxu0 0.0
        %2798 = vmatpush1.msra.mxu0 0.0
        %2799 = vmatprep.subr.mxu0 0.0
        %2800 = vmatpush1.msra.mxu0 0.0
        %2801 = vmatprep.subr.mxu0 0.0
        %2802 = vmatpush1.msra.mxu0 0.0
        %2803 = vmatprep.subr.mxu0 0.0
        %2804 = vmatpush1.msra.mxu0 0.0
        %2805 = vmatprep.subr.mxu0 0.0
        %2806 = vmatpush1.msra.mxu0 0.0
        %2807 = vmatprep.subr.mxu0 0.0
        %2808 = vmatpush1.msra.mxu0 0.0
        %2809 = vmatprep.subr.mxu0 0.0
        %2810 = vmatpush1.msra.mxu0 0.0
        %2811 = vmatprep.subr.mxu0 0.0
        %2812 = vmatpush1.msra.mxu0 0.0
        %2813 = vmatprep.subr.mxu0 0.0
        %2814 = vmatpush1.msra.mxu0 0.0
        %2815 = vmatprep.subr.mxu0 0.0
        %2816 = vmatpush1.msra.mxu0 0.0
        %2817 = vmatprep.subr.mxu0 0.0
        %2818 = vmatpush1.msra.mxu0 0.0
        %2819 = vmatprep.subr.mxu0 0.0
        %2820 = vmatpush1.msra.mxu0 0.0
        %2821 = vmatprep.mubr.f32.mxu0 0.0
        %2822 = vmatmul.mubr.f32.gmra.mrb[0].mxu0 %v2746
        %v2823 = vpop.f32.mrb[0].mxu0
        %v2824 = vadd.f32 %v2742, %v2823
        %v2825 = vpop.f32.mrb[0].mxu0
        %2826 = vmatprep.mubr.f32.mxu0 0.0
        %2827 = vmatmul.mubr.f32.gmra.mrb[0].mxu0 %v2749
        %v2828 = vpop.f32.mrb[0].mxu0
        %v2829 = vadd.f32 %v2742, %v2828
        %v2830 = vpop.f32.mrb[0].mxu0
        %2831 = vmatprep.mubr.f32.mxu0 0.0
        %2832 = vmatmul.mubr.f32.gmra.mrb[0].mxu0 %v2752
        %v2833 = vpop.f32.mrb[0].mxu0
        %v2834 = vadd.f32 %v2742, %v2833
        %v2835 = vpop.f32.mrb[0].mxu0
        %2836 = vmatprep.mubr.f32.mxu0 0.0
        %2837 = vmatmul.mubr.f32.gmra.mrb[0].mxu0 %v2755
        %v2838 = vpop.f32.mrb[0].mxu0
        %v2839 = vadd.f32 %v2742, %v2838
        %v2840 = vpop.f32.mrb[0].mxu0
        %2841 = vdwg.mxu0
        %v2842 = vadd.f32 %v2511, %v2824
        %v2843 = vadd.f32 %v2512, %v2829
        %v2844 = vadd.f32 %v2513, %v2834
        %v2845 = vadd.f32 %v2514, %v2839
        %2846 = vst.msk [vmem:[#allocation2] sm:$0xff] %vm862, %v2842
        %2847 = vst.msk [vmem:[#allocation2 + $0x8] sm:$0xff] %vm862, %v2843
        %2848 = vst.msk [vmem:[#allocation2 + $0x10] sm:$0xff] %vm862, %v2844
        %2849 = vst.msk [vmem:[#allocation2 + $0x18] sm:$0xff] %vm862, %v2845
        %p2850 = scmp.eq.s32.totalorder %s35, 1
        // Predicated region
        $region113: #{forward.1} parent=107 // pred_check
          %p2851 = pneg %p2850
        $region114: #{forward.1} parent=107 // pred_check_branch
          %2853 = sbr.rel (%p2851) target = $region116
        $region115: #{forward.1} parent=107 // pred_region
          %v2854 = vld [vmem:[%s13] sm:$0x1]
          %v2855 = vld [vmem:[%s14] sm:$0x1]
          %v2856 = vsel %vm862, %v2842, 0.0
          %2857 = vadd.xlane.f32.xlu0 %v2856
          %v2858 = vpop.xlane.xlu0 %2857
          %v2859 = vsel %vm862, %v2843, 0.0
          %2860 = vadd.xlane.f32.xlu0 %v2859
          %v2861 = vpop.xlane.xlu0 %2860
          %v2862 = vsel %vm862, %v2844, 0.0
          %2863 = vadd.xlane.f32.xlu0 %v2862
          %v2864 = vpop.xlane.xlu0 %2863
          %v2865 = vsel %vm862, %v2845, 0.0
          %2866 = vadd.xlane.f32.xlu0 %v2865
          %v2867 = vpop.xlane.xlu0 %2866
          %v2868 = vmul.f32 %v2858, %v875
          %v2869 = vmul.f32 %v2861, %v875
          %v2870 = vmul.f32 %v2864, %v875
          %v2871 = vmul.f32 %v2867, %v875
          %v2872 = vsub.f32 %v2842, %v2868
          %v2873 = vsub.f32 %v2843, %v2869
          %v2874 = vsub.f32 %v2844, %v2870
          %v2875 = vsub.f32 %v2845, %v2871
          %v2876 = vmul.f32 %v2872, %v2872
          %v2877 = vmul.f32 %v2873, %v2873
          %v2878 = vmul.f32 %v2874, %v2874
          %v2879 = vmul.f32 %v2875, %v2875
          %v2880 = vsel %vm862, %v2876, 0.0
          %2881 = vadd.xlane.f32.xlu0 %v2880
          %v2882 = vpop.xlane.xlu0 %2881
          %v2883 = vsel %vm862, %v2877, 0.0
          %2884 = vadd.xlane.f32.xlu0 %v2883
          %v2885 = vpop.xlane.xlu0 %2884
          %v2886 = vsel %vm862, %v2878, 0.0
          %2887 = vadd.xlane.f32.xlu0 %v2886
          %v2888 = vpop.xlane.xlu0 %2887
          %v2889 = vsel %vm862, %v2879, 0.0
          %2890 = vadd.xlane.f32.xlu0 %v2889
          %v2891 = vpop.xlane.xlu0 %2890
          %v2892 = vmul.f32 %v2882, %v875
          %v2893 = vmul.f32 %v2885, %v875
          %v2894 = vmul.f32 %v2888, %v875
          %v2895 = vmul.f32 %v2891, %v875
          %v2896 = vadd.f32 %v2892, 1e-05
          %v2897 = vadd.f32 %v2893, 1e-05
          %v2898 = vadd.f32 %v2894, 1e-05
          %v2899 = vadd.f32 %v2895, 1e-05
          %v2900 = vrsqrt.pop %v2896
          %v2901 = vrsqrt.pop %v2897
          %v2902 = vrsqrt.pop %v2898
          %v2903 = vrsqrt.pop %v2899
          %v2904 = vmul.f32 %v2872, %v2900
          %v2905 = vmul.f32 %v2873, %v2901
          %v2906 = vmul.f32 %v2874, %v2902
          %v2907 = vmul.f32 %v2875, %v2903
          %v2909 = vlaneseq
          %v2910 = vshrl.u32 %v2909, 7
          %v2911 = vsub.s32 0, %v2910
          %v2912 = vrot.slane %v2854, %v2911
          %v2914 = vmul.f32 %v2904, %v2912
          %v2915 = vmul.f32 %v2905, %v2912
          %v2916 = vmul.f32 %v2906, %v2912
          %v2917 = vmul.f32 %v2907, %v2912
          %v2919 = vlaneseq
          %v2920 = vshrl.u32 %v2919, 7
          %v2921 = vsub.s32 0, %v2920
          %v2922 = vrot.slane %v2855, %v2921
          %v2924 = vadd.f32 %v2914, %v2922
          %v2925 = vadd.f32 %v2915, %v2922
          %v2926 = vadd.f32 %v2916, %v2922
          %v2927 = vadd.f32 %v2917, %v2922
          %v2928 = vld [vmem:[%s16] sm:$0xf]
          %v2930 = vsel %vm862, %v2928, 0
          %2932 = vmatprep.subr.mxu0 0.0
          %2933 = vmatpush1.msra.mxu0 %v2924
          %2934 = vmatprep.subr.mxu0 0.0
          %2935 = vmatpush1.msra.mxu0 %v2925
          %2936 = vmatprep.subr.mxu0 0.0
          %2937 = vmatpush1.msra.mxu0 %v2926
          %2938 = vmatprep.subr.mxu0 0.0
          %2939 = vmatpush1.msra.mxu0 %v2927
          %2940 = vmatprep.subr.mxu0 0.0
          %2941 = vmatpush1.msra.mxu0 0.0
          %2942 = vmatprep.subr.mxu0 0.0
          %2943 = vmatpush1.msra.mxu0 0.0
          %2944 = vmatprep.subr.mxu0 0.0
          %2945 = vmatpush1.msra.mxu0 0.0
          %2946 = vmatprep.subr.mxu0 0.0
          %2947 = vmatpush1.msra.mxu0 0.0
          %2948 = vmatprep.subr.mxu0 0.0
          %2949 = vmatpush1.msra.mxu0 0.0
          %2950 = vmatprep.subr.mxu0 0.0
          %2951 = vmatpush1.msra.mxu0 0.0
          %2952 = vmatprep.subr.mxu0 0.0
          %2953 = vmatpush1.msra.mxu0 0.0
          %2954 = vmatprep.subr.mxu0 0.0
          %2955 = vmatpush1.msra.mxu0 0.0
          %2956 = vmatprep.subr.mxu0 0.0
          %2957 = vmatpush1.msra.mxu0 0.0
          %2958 = vmatprep.subr.mxu0 0.0
          %2959 = vmatpush1.msra.mxu0 0.0
          %2960 = vmatprep.subr.mxu0 0.0
          %2961 = vmatpush1.msra.mxu0 0.0
          %2962 = vmatprep.subr.mxu0 0.0
          %2963 = vmatpush1.msra.mxu0 0.0
          %2964 = vmatprep.subr.mxu0 0.0
          %2965 = vmatpush1.msra.mxu0 0.0
          %2966 = vmatprep.subr.mxu0 0.0
          %2967 = vmatpush1.msra.mxu0 0.0
          %2968 = vmatprep.subr.mxu0 0.0
          %2969 = vmatpush1.msra.mxu0 0.0
          %2970 = vmatprep.subr.mxu0 0.0
          %2971 = vmatpush1.msra.mxu0 0.0
          %2972 = vmatprep.subr.mxu0 0.0
          %2973 = vmatpush1.msra.mxu0 0.0
          %2974 = vmatprep.subr.mxu0 0.0
          %2975 = vmatpush1.msra.mxu0 0.0
          %2976 = vmatprep.subr.mxu0 0.0
          %2977 = vmatpush1.msra.mxu0 0.0
          %2978 = vmatprep.subr.mxu0 0.0
          %2979 = vmatpush1.msra.mxu0 0.0
          %2980 = vmatprep.subr.mxu0 0.0
          %2981 = vmatpush1.msra.mxu0 0.0
          %2982 = vmatprep.subr.mxu0 0.0
          %2983 = vmatpush1.msra.mxu0 0.0
          %2984 = vmatprep.subr.mxu0 0.0
          %2985 = vmatpush1.msra.mxu0 0.0
          %2986 = vmatprep.subr.mxu0 0.0
          %2987 = vmatpush1.msra.mxu0 0.0
          %2988 = vmatprep.subr.mxu0 0.0
          %2989 = vmatpush1.msra.mxu0 0.0
          %2990 = vmatprep.subr.mxu0 0.0
          %2991 = vmatpush1.msra.mxu0 0.0
          %2992 = vmatprep.subr.mxu0 0.0
          %2993 = vmatpush1.msra.mxu0 0.0
          %2994 = vmatprep.subr.mxu0 0.0
          %2995 = vmatpush1.msra.mxu0 0.0
          %2996 = vmatprep.mubr.f32.mxu0 0.0
          %2997 = vmatmul.mubr.f32.gmra.mrb[0].mxu0 %v2930
          %v2998 = vpop.f32.mrb[0].mxu0
          %v2999 = vadd.f32 0.0, %v2998
          %v3000 = vpop.f32.mrb[0].mxu0
          %3001 = vdwg.mxu0
          %v3002 = vld [vmem:[%s15] sm:$0xff]
          %v3003 = vld [vmem:[%s15 + $0x8] sm:$0xff]
          %v3004 = vld [vmem:[%s15 + $0x10] sm:$0xff]
          %v3005 = vld [vmem:[%s15 + $0x18] sm:$0xff]
          %v3007 = vsel %vm862, %v2999, 0
          %3009 = vmatprep.subr.mxu0 0.0
          %3010 = vmatpush1.msra.mxu0 %v3002
          %3011 = vmatprep.subr.mxu0 0.0
          %3012 = vmatpush1.msra.mxu0 %v3003
          %3013 = vmatprep.subr.mxu0 0.0
          %3014 = vmatpush1.msra.mxu0 %v3004
          %3015 = vmatprep.subr.mxu0 0.0
          %3016 = vmatpush1.msra.mxu0 %v3005
          %3017 = vmatprep.subr.mxu0 0.0
          %3018 = vmatpush1.msra.mxu0 0.0
          %3019 = vmatprep.subr.mxu0 0.0
          %3020 = vmatpush1.msra.mxu0 0.0
          %3021 = vmatprep.subr.mxu0 0.0
          %3022 = vmatpush1.msra.mxu0 0.0
          %3023 = vmatprep.subr.mxu0 0.0
          %3024 = vmatpush1.msra.mxu0 0.0
          %3025 = vmatprep.subr.mxu0 0.0
          %3026 = vmatpush1.msra.mxu0 0.0
          %3027 = vmatprep.subr.mxu0 0.0
          %3028 = vmatpush1.msra.mxu0 0.0
          %3029 = vmatprep.subr.mxu0 0.0
          %3030 = vmatpush1.msra.mxu0 0.0
          %3031 = vmatprep.subr.mxu0 0.0
          %3032 = vmatpush1.msra.mxu0 0.0
          %3033 = vmatprep.subr.mxu0 0.0
          %3034 = vmatpush1.msra.mxu0 0.0
          %3035 = vmatprep.subr.mxu0 0.0
          %3036 = vmatpush1.msra.mxu0 0.0
          %3037 = vmatprep.subr.mxu0 0.0
          %3038 = vmatpush1.msra.mxu0 0.0
          %3039 = vmatprep.subr.mxu0 0.0
          %3040 = vmatpush1.msra.mxu0 0.0
          %3041 = vmatprep.subr.mxu0 0.0
          %3042 = vmatpush1.msra.mxu0 0.0
          %3043 = vmatprep.subr.mxu0 0.0
          %3044 = vmatpush1.msra.mxu0 0.0
          %3045 = vmatprep.subr.mxu0 0.0
          %3046 = vmatpush1.msra.mxu0 0.0
          %3047 = vmatprep.subr.mxu0 0.0
          %3048 = vmatpush1.msra.mxu0 0.0
          %3049 = vmatprep.subr.mxu0 0.0
          %3050 = vmatpush1.msra.mxu0 0.0
          %3051 = vmatprep.subr.mxu0 0.0
          %3052 = vmatpush1.msra.mxu0 0.0
          %3053 = vmatprep.subr.mxu0 0.0
          %3054 = vmatpush1.msra.mxu0 0.0
          %3055 = vmatprep.subr.mxu0 0.0
          %3056 = vmatpush1.msra.mxu0 0.0
          %3057 = vmatprep.subr.mxu0 0.0
          %3058 = vmatpush1.msra.mxu0 0.0
          %3059 = vmatprep.subr.mxu0 0.0
          %3060 = vmatpush1.msra.mxu0 0.0
          %3061 = vmatprep.subr.mxu0 0.0
          %3062 = vmatpush1.msra.mxu0 0.0
          %3063 = vmatprep.subr.mxu0 0.0
          %3064 = vmatpush1.msra.mxu0 0.0
          %3065 = vmatprep.subr.mxu0 0.0
          %3066 = vmatpush1.msra.mxu0 0.0
          %3067 = vmatprep.subr.mxu0 0.0
          %3068 = vmatpush1.msra.mxu0 0.0
          %3069 = vmatprep.subr.mxu0 0.0
          %3070 = vmatpush1.msra.mxu0 0.0
          %3071 = vmatprep.subr.mxu0 0.0
          %3072 = vmatpush1.msra.mxu0 0.0
          %3073 = vmatprep.mubr.f32.mxu0 0.0
          %3074 = vmatmul.mubr.f32.gmra.mrb[0].mxu0 %v3007
          %v3075 = vpop.f32.mrb[0].mxu0
          %v3076 = vadd.f32 0.0, %v3075
          %v3077 = vpop.f32.mrb[0].mxu0
          %3078 = vdwg.mxu0
          %v3079 = vld [vmem:[%s17] sm:$0xff]
          %v3080 = vld [vmem:[%s17 + $0x8] sm:$0xff]
          %v3081 = vld [vmem:[%s18] sm:$0xff]
          %v3082 = vld [vmem:[%s18 + $0x8] sm:$0xff]
          %v3083 = vld [vmem:[%s18 + $0x10] sm:$0xff]
          %v3084 = vld [vmem:[%s18 + $0x18] sm:$0xff]
          %v3085 = vld [vmem:[%s18 + $0x20] sm:$0xff]
          %v3086 = vld [vmem:[%s18 + $0x28] sm:$0xff]
          %v3087 = vld [vmem:[%s18 + $0x30] sm:$0xff]
          %v3088 = vld [vmem:[%s18 + $0x38] sm:$0xff]
          %v3089 = vld [vmem:[%s18 + $0x40] sm:$0xff]
          %v3090 = vld [vmem:[%s18 + $0x48] sm:$0xff]
          %v3091 = vld [vmem:[%s18 + $0x50] sm:$0xff]
          %v3092 = vld [vmem:[%s18 + $0x58] sm:$0xff]
          %v3093 = vld [vmem:[%s18 + $0x60] sm:$0xff]
          %v3094 = vld [vmem:[%s18 + $0x68] sm:$0xff]
          %v3095 = vld [vmem:[%s18 + $0x70] sm:$0xff]
          %v3096 = vld [vmem:[%s18 + $0x78] sm:$0xff]
          %v3097 = vld [vmem:[%s18 + $0x80] sm:$0xff]
          %v3098 = vld [vmem:[%s18 + $0x88] sm:$0xff]
          %v3099 = vld [vmem:[%s18 + $0x90] sm:$0xff]
          %v3100 = vld [vmem:[%s18 + $0x98] sm:$0xff]
          %v3101 = vld [vmem:[%s18 + $0xa0] sm:$0xff]
          %v3102 = vld [vmem:[%s18 + $0xa8] sm:$0xff]
          %v3103 = vld [vmem:[%s18 + $0xb0] sm:$0xff]
          %v3104 = vld [vmem:[%s18 + $0xb8] sm:$0xff]
          %v3106 = vsel %vm2744, %v3080, 0
          %3108 = vmatprep.subr.mxu0 0.0
          %3109 = vmatpush1.msra.mxu0 %v3081
          %3110 = vmatprep.subr.mxu0 0.0
          %3111 = vmatpush1.msra.mxu0 %v3082
          %3112 = vmatprep.subr.mxu0 0.0
          %3113 = vmatpush1.msra.mxu0 %v3083
          %3114 = vmatprep.subr.mxu0 0.0
          %3115 = vmatpush1.msra.mxu0 %v3084
          %3116 = vmatprep.subr.mxu0 0.0
          %3117 = vmatpush1.msra.mxu0 %v3085
          %3118 = vmatprep.subr.mxu0 0.0
          %3119 = vmatpush1.msra.mxu0 %v3086
          %3120 = vmatprep.subr.mxu0 0.0
          %3121 = vmatpush1.msra.mxu0 %v3087
          %3122 = vmatprep.subr.mxu0 0.0
          %3123 = vmatpush1.msra.mxu0 %v3088
          %3124 = vmatprep.subr.mxu0 0.0
          %3125 = vmatpush1.msra.mxu0 %v3089
          %3126 = vmatprep.subr.mxu0 0.0
          %3127 = vmatpush1.msra.mxu0 %v3090
          %3128 = vmatprep.subr.mxu0 0.0
          %3129 = vmatpush1.msra.mxu0 %v3091
          %3130 = vmatprep.subr.mxu0 0.0
          %3131 = vmatpush1.msra.mxu0 %v3092
          %3132 = vmatprep.subr.mxu0 0.0
          %3133 = vmatpush1.msra.mxu0 %v3093
          %3134 = vmatprep.subr.mxu0 0.0
          %3135 = vmatpush1.msra.mxu0 %v3094
          %3136 = vmatprep.subr.mxu0 0.0
          %3137 = vmatpush1.msra.mxu0 %v3095
          %3138 = vmatprep.subr.mxu0 0.0
          %3139 = vmatpush1.msra.mxu0 %v3096
          %3140 = vmatprep.subr.mxu0 0.0
          %3141 = vmatpush1.msra.mxu0 %v3097
          %3142 = vmatprep.subr.mxu0 0.0
          %3143 = vmatpush1.msra.mxu0 %v3098
          %3144 = vmatprep.subr.mxu0 0.0
          %3145 = vmatpush1.msra.mxu0 %v3099
          %3146 = vmatprep.subr.mxu0 0.0
          %3147 = vmatpush1.msra.mxu0 %v3100
          %3148 = vmatprep.subr.mxu0 0.0
          %3149 = vmatpush1.msra.mxu0 %v3101
          %3150 = vmatprep.subr.mxu0 0.0
          %3151 = vmatpush1.msra.mxu0 %v3102
          %3152 = vmatprep.subr.mxu0 0.0
          %3153 = vmatpush1.msra.mxu0 %v3103
          %3154 = vmatprep.subr.mxu0 0.0
          %3155 = vmatpush1.msra.mxu0 %v3104
          %3156 = vmatprep.subr.mxu0 0.0
          %3157 = vmatpush1.msra.mxu0 0.0
          %3158 = vmatprep.subr.mxu0 0.0
          %3159 = vmatpush1.msra.mxu0 0.0
          %3160 = vmatprep.subr.mxu0 0.0
          %3161 = vmatpush1.msra.mxu0 0.0
          %3162 = vmatprep.subr.mxu0 0.0
          %3163 = vmatpush1.msra.mxu0 0.0
          %3164 = vmatprep.subr.mxu0 0.0
          %3165 = vmatpush1.msra.mxu0 0.0
          %3166 = vmatprep.subr.mxu0 0.0
          %3167 = vmatpush1.msra.mxu0 0.0
          %3168 = vmatprep.subr.mxu0 0.0
          %3169 = vmatpush1.msra.mxu0 0.0
          %3170 = vmatprep.subr.mxu0 0.0
          %3171 = vmatpush1.msra.mxu0 0.0
          %3172 = vmatprep.mubr.f32.mxu0 %v3106
          %3173 = vmatmul.mubr.f32.gmra.mrb[0].mxu0 %v3079
          %v3174 = vpop.f32.mrb[0].mxu0
          %v3175 = vadd.f32 0.0, %v3174
          %v3176 = vpop.f32.mrb[0].mxu0
          %3177 = vdwg.mxu0
          %v3178 = vld [vmem:[%s19] sm:$0x3]
          %v3180 = vsel %vm1370, %v3178, 0
          %3182 = vmatprep.subr.mxu0 0.0
          %3183 = vmatpush1.msra.mxu0 %v3175
          %3184 = vmatprep.subr.mxu0 0.0
          %3185 = vmatpush1.msra.mxu0 0.0
          %3186 = vmatprep.subr.mxu0 0.0
          %3187 = vmatpush1.msra.mxu0 0.0
          %3188 = vmatprep.subr.mxu0 0.0
          %3189 = vmatpush1.msra.mxu0 0.0
          %3190 = vmatprep.subr.mxu0 0.0
          %3191 = vmatpush1.msra.mxu0 0.0
          %3192 = vmatprep.subr.mxu0 0.0
          %3193 = vmatpush1.msra.mxu0 0.0
          %3194 = vmatprep.subr.mxu0 0.0
          %3195 = vmatpush1.msra.mxu0 0.0
          %3196 = vmatprep.subr.mxu0 0.0
          %3197 = vmatpush1.msra.mxu0 0.0
          %3198 = vmatprep.subr.mxu0 0.0
          %3199 = vmatpush1.msra.mxu0 0.0
          %3200 = vmatprep.subr.mxu0 0.0
          %3201 = vmatpush1.msra.mxu0 0.0
          %3202 = vmatprep.subr.mxu0 0.0
          %3203 = vmatpush1.msra.mxu0 0.0
          %3204 = vmatprep.subr.mxu0 0.0
          %3205 = vmatpush1.msra.mxu0 0.0
          %3206 = vmatprep.subr.mxu0 0.0
          %3207 = vmatpush1.msra.mxu0 0.0
          %3208 = vmatprep.subr.mxu0 0.0
          %3209 = vmatpush1.msra.mxu0 0.0
          %3210 = vmatprep.subr.mxu0 0.0
          %3211 = vmatpush1.msra.mxu0 0.0
          %3212 = vmatprep.subr.mxu0 0.0
          %3213 = vmatpush1.msra.mxu0 0.0
          %3214 = vmatprep.subr.mxu0 0.0
          %3215 = vmatpush1.msra.mxu0 0.0
          %3216 = vmatprep.subr.mxu0 0.0
          %3217 = vmatpush1.msra.mxu0 0.0
          %3218 = vmatprep.subr.mxu0 0.0
          %3219 = vmatpush1.msra.mxu0 0.0
          %3220 = vmatprep.subr.mxu0 0.0
          %3221 = vmatpush1.msra.mxu0 0.0
          %3222 = vmatprep.subr.mxu0 0.0
          %3223 = vmatpush1.msra.mxu0 0.0
          %3224 = vmatprep.subr.mxu0 0.0
          %3225 = vmatpush1.msra.mxu0 0.0
          %3226 = vmatprep.subr.mxu0 0.0
          %3227 = vmatpush1.msra.mxu0 0.0
          %3228 = vmatprep.subr.mxu0 0.0
          %3229 = vmatpush1.msra.mxu0 0.0
          %3230 = vmatprep.subr.mxu0 0.0
          %3231 = vmatpush1.msra.mxu0 0.0
          %3232 = vmatprep.subr.mxu0 0.0
          %3233 = vmatpush1.msra.mxu0 0.0
          %3234 = vmatprep.subr.mxu0 0.0
          %3235 = vmatpush1.msra.mxu0 0.0
          %3236 = vmatprep.subr.mxu0 0.0
          %3237 = vmatpush1.msra.mxu0 0.0
          %3238 = vmatprep.subr.mxu0 0.0
          %3239 = vmatpush1.msra.mxu0 0.0
          %3240 = vmatprep.subr.mxu0 0.0
          %3241 = vmatpush1.msra.mxu0 0.0
          %3242 = vmatprep.subr.mxu0 0.0
          %3243 = vmatpush1.msra.mxu0 0.0
          %3244 = vmatprep.subr.mxu0 0.0
          %3245 = vmatpush1.msra.mxu0 0.0
          %3246 = vmatprep.mubr.f32.mxu0 0.0
          %3247 = vmatmul.mubr.f32.gmra.mrb[0].mxu0 %v3180
          %v3248 = vpop.f32.mrb[0].mxu0
          %v3249 = vadd.f32 0.0, %v3248
          %v3250 = vpop.f32.mrb[0].mxu0
          %3251 = vdwg.mxu0
          %v3252 = vld [vmem:[%s20] sm:$0xff]
          %v3253 = vld [vmem:[%s20 + $0x8] sm:$0xff]
          %v3254 = vld [vmem:[%s20 + $0x10] sm:$0xff]
          %v3255 = vld [vmem:[%s20 + $0x18] sm:$0xff]
          %v3257 = vsel %vm862, %v3249, 0
          %3259 = vmatprep.subr.mxu0 0.0
          %3260 = vmatpush1.msra.mxu0 %v3252
          %3261 = vmatprep.subr.mxu0 0.0
          %3262 = vmatpush1.msra.mxu0 %v3253
          %3263 = vmatprep.subr.mxu0 0.0
          %3264 = vmatpush1.msra.mxu0 %v3254
          %3265 = vmatprep.subr.mxu0 0.0
          %3266 = vmatpush1.msra.mxu0 %v3255
          %3267 = vmatprep.subr.mxu0 0.0
          %3268 = vmatpush1.msra.mxu0 0.0
          %3269 = vmatprep.subr.mxu0 0.0
          %3270 = vmatpush1.msra.mxu0 0.0
          %3271 = vmatprep.subr.mxu0 0.0
          %3272 = vmatpush1.msra.mxu0 0.0
          %3273 = vmatprep.subr.mxu0 0.0
          %3274 = vmatpush1.msra.mxu0 0.0
          %3275 = vmatprep.subr.mxu0 0.0
          %3276 = vmatpush1.msra.mxu0 0.0
          %3277 = vmatprep.subr.mxu0 0.0
          %3278 = vmatpush1.msra.mxu0 0.0
          %3279 = vmatprep.subr.mxu0 0.0
          %3280 = vmatpush1.msra.mxu0 0.0
          %3281 = vmatprep.subr.mxu0 0.0
          %3282 = vmatpush1.msra.mxu0 0.0
          %3283 = vmatprep.subr.mxu0 0.0
          %3284 = vmatpush1.msra.mxu0 0.0
          %3285 = vmatprep.subr.mxu0 0.0
          %3286 = vmatpush1.msra.mxu0 0.0
          %3287 = vmatprep.subr.mxu0 0.0
          %3288 = vmatpush1.msra.mxu0 0.0
          %3289 = vmatprep.subr.mxu0 0.0
          %3290 = vmatpush1.msra.mxu0 0.0
          %3291 = vmatprep.subr.mxu0 0.0
          %3292 = vmatpush1.msra.mxu0 0.0
          %3293 = vmatprep.subr.mxu0 0.0
          %3294 = vmatpush1.msra.mxu0 0.0
          %3295 = vmatprep.subr.mxu0 0.0
          %3296 = vmatpush1.msra.mxu0 0.0
          %3297 = vmatprep.subr.mxu0 0.0
          %3298 = vmatpush1.msra.mxu0 0.0
          %3299 = vmatprep.subr.mxu0 0.0
          %3300 = vmatpush1.msra.mxu0 0.0
          %3301 = vmatprep.subr.mxu0 0.0
          %3302 = vmatpush1.msra.mxu0 0.0
          %3303 = vmatprep.subr.mxu0 0.0
          %3304 = vmatpush1.msra.mxu0 0.0
          %3305 = vmatprep.subr.mxu0 0.0
          %3306 = vmatpush1.msra.mxu0 0.0
          %3307 = vmatprep.subr.mxu0 0.0
          %3308 = vmatpush1.msra.mxu0 0.0
          %3309 = vmatprep.subr.mxu0 0.0
          %3310 = vmatpush1.msra.mxu0 0.0
          %3311 = vmatprep.subr.mxu0 0.0
          %3312 = vmatpush1.msra.mxu0 0.0
          %3313 = vmatprep.subr.mxu0 0.0
          %3314 = vmatpush1.msra.mxu0 0.0
          %3315 = vmatprep.subr.mxu0 0.0
          %3316 = vmatpush1.msra.mxu0 0.0
          %3317 = vmatprep.subr.mxu0 0.0
          %3318 = vmatpush1.msra.mxu0 0.0
          %3319 = vmatprep.subr.mxu0 0.0
          %3320 = vmatpush1.msra.mxu0 0.0
          %3321 = vmatprep.subr.mxu0 0.0
          %3322 = vmatpush1.msra.mxu0 0.0
          %3323 = vmatprep.mubr.f32.mxu0 0.0
          %3324 = vmatmul.mubr.f32.gmra.mrb[0].mxu0 %v3257
          %v3325 = vpop.f32.mrb[0].mxu0
          %v3326 = vadd.f32 0.0, %v3325
          %v3327 = vpop.f32.mrb[0].mxu0
          %3328 = vdwg.mxu0
          %v3329 = vmul.f32 %v3326, %v3326
          %vm3330 = vcmask 254976
          %v3331 = vsel %vm3330, %v3329, 0.0
          %3332 = vadd.xlane.f32.xlu0 %v3331
          %v3333 = vpop.xlane.xlu0 %3332
          %v3334 = vrsqrt.pop %v3333
          %v3335 = vmul.f32 %v3326, %v3334
          %v3336 = vmul.f32 %v3076, %v3076
          %vm3337 = vcmask 257024
          %v3338 = vsel %vm3337, %v3336, 0.0
          %3339 = vadd.xlane.f32.xlu0 %v3338
          %v3340 = vpop.xlane.xlu0 %3339
          %v3341 = vrsqrt.pop %v3340
          %v3342 = vmul.f32 %v3076, %v3341
          %s3343 = sld [smem:[#allocation3]]
          %v3344 = vstv %s3343
          %v3345 = vmul.f32 %v3344, 1.442695
          %v3346 = vpow.pop %v3345
          %s3347 = vtos %v3346
          %v3349 = vsel %vm862, %v3335, 0
          %v3352 = vsel %vm862, %v3342, 0
          %3354 = vmatprep.subr.mxu0 0.0
          %3355 = vmatpush1.xpose.msra.mxu0 %v3352
          %3356 = vmatprep.subr.mxu0 0.0
          %3357 = vmatpush1.xpose.msra.mxu0 0.0
          %3358 = vmatprep.subr.mxu0 0.0
          %3359 = vmatpush1.xpose.msra.mxu0 0.0
          %3360 = vmatprep.subr.mxu0 0.0
          %3361 = vmatpush1.xpose.msra.mxu0 0.0
          %3362 = vmatprep.subr.mxu0 0.0
          %3363 = vmatpush1.xpose.msra.mxu0 0.0
          %3364 = vmatprep.subr.mxu0 0.0
          %3365 = vmatpush1.xpose.msra.mxu0 0.0
          %3366 = vmatprep.subr.mxu0 0.0
          %3367 = vmatpush1.xpose.msra.mxu0 0.0
          %3368 = vmatprep.subr.mxu0 0.0
          %3369 = vmatpush1.xpose.msra.mxu0 0.0
          %3370 = vmatprep.subr.mxu0 0.0
          %3371 = vmatpush1.xpose.msra.mxu0 0.0
          %3372 = vmatprep.subr.mxu0 0.0
          %3373 = vmatpush1.xpose.msra.mxu0 0.0
          %3374 = vmatprep.subr.mxu0 0.0
          %3375 = vmatpush1.xpose.msra.mxu0 0.0
          %3376 = vmatprep.subr.mxu0 0.0
          %3377 = vmatpush1.xpose.msra.mxu0 0.0
          %3378 = vmatprep.subr.mxu0 0.0
          %3379 = vmatpush1.xpose.msra.mxu0 0.0
          %3380 = vmatprep.subr.mxu0 0.0
          %3381 = vmatpush1.xpose.msra.mxu0 0.0
          %3382 = vmatprep.subr.mxu0 0.0
          %3383 = vmatpush1.xpose.msra.mxu0 0.0
          %3384 = vmatprep.subr.mxu0 0.0
          %3385 = vmatpush1.xpose.msra.mxu0 0.0
          %3386 = vmatprep.subr.mxu0 0.0
          %3387 = vmatpush1.xpose.msra.mxu0 0.0
          %3388 = vmatprep.subr.mxu0 0.0
          %3389 = vmatpush1.xpose.msra.mxu0 0.0
          %3390 = vmatprep.subr.mxu0 0.0
          %3391 = vmatpush1.xpose.msra.mxu0 0.0
          %3392 = vmatprep.subr.mxu0 0.0
          %3393 = vmatpush1.xpose.msra.mxu0 0.0
          %3394 = vmatprep.subr.mxu0 0.0
          %3395 = vmatpush1.xpose.msra.mxu0 0.0
          %3396 = vmatprep.subr.mxu0 0.0
          %3397 = vmatpush1.xpose.msra.mxu0 0.0
          %3398 = vmatprep.subr.mxu0 0.0
          %3399 = vmatpush1.xpose.msra.mxu0 0.0
          %3400 = vmatprep.subr.mxu0 0.0
          %3401 = vmatpush1.xpose.msra.mxu0 0.0
          %3402 = vmatprep.subr.mxu0 0.0
          %3403 = vmatpush1.xpose.msra.mxu0 0.0
          %3404 = vmatprep.subr.mxu0 0.0
          %3405 = vmatpush1.xpose.msra.mxu0 0.0
          %3406 = vmatprep.subr.mxu0 0.0
          %3407 = vmatpush1.xpose.msra.mxu0 0.0
          %3408 = vmatprep.subr.mxu0 0.0
          %3409 = vmatpush1.xpose.msra.mxu0 0.0
          %3410 = vmatprep.subr.mxu0 0.0
          %3411 = vmatpush1.xpose.msra.mxu0 0.0
          %3412 = vmatprep.subr.mxu0 0.0
          %3413 = vmatpush1.xpose.msra.mxu0 0.0
          %3414 = vmatprep.subr.mxu0 0.0
          %3415 = vmatpush1.xpose.msra.mxu0 0.0
          %3416 = vmatprep.subr.mxu0 0.0
          %3417 = vmatpush1.xpose.msra.mxu0 0.0
          %3418 = vmatprep.mubr.f32.mxu0 0.0
          %3419 = vmatmul.mubr.f32.gmra.mrb[0].mxu0 %v3349
          %v3420 = vpop.f32.mrb[0].mxu0
          %v3421 = vadd.f32 0.0, %v3420
          %v3422 = vpop.f32.mrb[0].mxu0
          %3423 = vdwg.mxu0
          %v3424 = vstv %s3347
          %v3425 = vmul.f32 %v3424, %v3421
          %vm3426 = vcmask 25600
          %3427 = vst.msk [vmem:[#allocation4] sm:$0x3] %vm3426, %v3425
        $region116: #{forward.1} parent=107 // pred_fallthru
          _
        // Predicated region
        $region117: #{forward.1} parent=107 // pred_check
          %p3428 = pneg %p570
        $region118: #{forward.1} parent=107 // pred_check_branch
          %3430 = sbr.rel (%p3428) target = $region120
        $region119: #{forward.1} parent=107 // pred_region
          %s3432 = ssub.s32 32, 32
          %3433 = vsyncadd [#allocation5], %s3432
          %s3435 = sshll.u32 [#allocation4], 4
          %s3436 = int_to_ptr.vmem [resolvable:$true] %s3435
          %3438 = dma.vmem_to_hbm [thread:$0]  %s3436, 32, %s22, [#allocation5]
        $region120: #{forward.1} parent=107 // pred_fallthru
          _
        // Predicated region
        $region121: #{forward.1} parent=107 // pred_check
          %p3439 = pneg %p570
        $region122: #{forward.1} parent=107 // pred_check_branch
          %3441 = sbr.rel (%p3439) target = $region124
        $region123: #{forward.1} parent=107 // pred_region
          %3442 = dma.done [#allocation5], 32
        $region124: #{forward.1} parent=107 // pred_fallthru
          _
      $region108: #{forward.1} parent=5 // pred_fallthru
        _
      %p3443 = scmp.le.s32.totalorder 2, %s30
      // Predicated region
      $region125: #{forward.1} parent=5 // pred_check
        %p3444 = pneg %p3443
      $region126: #{forward.1} parent=5 // pred_check_branch
        %3446 = sbr.rel (%p3444) target = $region128
      $region127: #{forward.1} parent=5 // pred_region
        %s3447 = ssub.s32 %s30, 2
      $region128: #{forward.1} parent=5 // pred_fallthru
        _
    $region6: #{forward.1} parent=1 // loop_footer
      %s34 = sadd.s32 1, %s30
    $region7: #{forward.1} parent=1 // loop_footer_branch
      %29 = sbr.rel target = $region3
    $region8: #{forward.1} parent=1 // loop_exit
      _
    %3448 = vsyncpa [#allocation5], 1
    %s3449 = scalar_lea.sflag [#allocation5], 1
    %3450 = vsyncpa %s3449, 1

</llo_original>
